<compile_context>
chip_gen: v5e
topology: v5e:2x2
jax: 0.10.0
libtpu: 0.0.40
codegen_flags: <defaults>
</compile_context>

<pallas_src>
import jax
import jax.numpy as jnp
import numpy as np
from jax import lax
from jax.experimental import pallas as pl
from jax.experimental.pallas import tpu as pltpu

# ---------------- small synthetic configuration ----------------
T = 8                                  # sequence length
N = 4                                  # batch (logical)
NP = 8                                 # batch padded to f32 sublane tile
D_L, D_A, D_V = 8, 12, 16              # per-modality input dims
D_ALL = D_L + D_A + D_V                # 36
DH_L, DH_A, DH_V = 16, 16, 16          # per-modality LSTM hidden dims
DH_TOT = DH_L + DH_A + DH_V            # 48
G_DIM = 4 * DH_TOT                     # 192 fused gate width
MEM_DIM = 32                           # memsize
WINDOW = 2                             # windowsize (prev_cs + new_cs)
ATT_IN = DH_TOT * WINDOW               # 96
GAMMA_IN = ATT_IN + MEM_DIM            # 128
FINAL_OUT = DH_TOT + MEM_DIM           # 80
H_ATT1 = H_ATT2 = H_G1 = H_G2 = H_OUT = 32
OUT_DIM = 2
OUT_PAD = 128                          # lane-padded output width


# ---------------- parameter construction (deterministic) ----------------
def _uniform(key, shape, fan_in):
    k = 1.0 / np.sqrt(fan_in)
    return jax.random.uniform(key, shape, jnp.float32, -k, k)


def make_params(key):
    keys = iter(jax.random.split(key, 64))
    p = []

    def lstm(d, dh):
        # weight_ih^T, weight_hh^T, combined bias (b_ih + b_hh); gate order i,f,g,o
        p.append(_uniform(next(keys), (d, 4 * dh), dh))
        p.append(_uniform(next(keys), (dh, 4 * dh), dh))
        p.append(_uniform(next(keys), (1, 4 * dh), dh))

    def linear(din, dout):
        p.append(_uniform(next(keys), (din, dout), din))   # W^T
        p.append(_uniform(next(keys), (1, dout), din))     # b

    lstm(D_L, DH_L)
    lstm(D_A, DH_A)
    lstm(D_V, DH_V)
    linear(ATT_IN, H_ATT1);  linear(H_ATT1, ATT_IN)        # att1_fc1 / att1_fc2
    linear(ATT_IN, H_ATT2);  linear(H_ATT2, MEM_DIM)       # att2_fc1 / att2_fc2
    linear(GAMMA_IN, H_G1);  linear(H_G1, MEM_DIM)         # gamma1_fc1 / gamma1_fc2
    linear(GAMMA_IN, H_G2);  linear(H_G2, MEM_DIM)         # gamma2_fc1 / gamma2_fc2
    linear(FINAL_OUT, H_OUT); linear(H_OUT, OUT_DIM)       # out_fc1 / out_fc2
    return tuple(p)                                        # 29 arrays


# ---------------- parameter fusion (host side, runs once) ----------------
def _block_diag(*mats):
    rows = sum(m.shape[0] for m in mats)
    cols = sum(m.shape[1] for m in mats)
    out = jnp.zeros((rows, cols), mats[0].dtype)
    r = c = 0
    for m in mats:
        out = out.at[r:r + m.shape[0], c:c + m.shape[1]].set(m)
        r += m.shape[0]
        c += m.shape[1]
    return out


def fuse_params(params, compute_dtype):
    (wih_l, whh_l, b_l,
     wih_a, whh_a, b_a,
     wih_v, whh_v, b_v,
     a1w1, a1b1, a1w2, a1b2,
     a2w1, a2b1, a2w2, a2b2,
     g1w1, g1b1, g1w2, g1b2,
     g2w1, g2b1, g2w2, g2b2,
     ow1, ob1, ow2, ob2) = params

    # Fused LSTM weights: block-diag over modalities, columns permuted to
    # [i_l i_a i_v | f_l f_a f_v | g_l g_a g_v | o_l o_a o_v] so gate blocks
    # line up with the contiguous state layout [l | a | v].
    def gate_blockdiag(wl, wa, wv):
        blocks = []
        for k in range(4):                       # gate order i, f, g, o
            blocks.append(_block_diag(wl[:, k * DH_L:(k + 1) * DH_L],
                                      wa[:, k * DH_A:(k + 1) * DH_A],
                                      wv[:, k * DH_V:(k + 1) * DH_V]))
        return jnp.concatenate(blocks, axis=1)   # (in_tot, G_DIM)

    wx = gate_blockdiag(wih_l, wih_a, wih_v)     # (36, 192)
    wh = gate_blockdiag(whh_l, whh_a, whh_v)     # (48, 192)
    b_comb = jnp.concatenate(
        [jnp.concatenate([b_l[:, k * DH_L:(k + 1) * DH_L],
                          b_a[:, k * DH_A:(k + 1) * DH_A],
                          b_v[:, k * DH_V:(k + 1) * DH_V]], axis=1)
         for k in range(4)], axis=1)             # (1, 192)

    # Fused gamma1/gamma2 branches.
    gw1 = jnp.concatenate([g1w1, g2w1], axis=1)  # (128, 64)
    gb1 = jnp.concatenate([g1b1, g2b1], axis=1)  # (1, 64)
    gw2 = _block_diag(g1w2, g2w2)                # (64, 64)
    gb2 = jnp.concatenate([g1b2, g2b2], axis=1)  # (1, 64)

    # Lane-padded final projection (real output lives in the first OUT_DIM cols).
    ow2p = jnp.pad(ow2, ((0, 0), (0, OUT_PAD - OUT_DIM)))
    ob2p = jnp.pad(ob2, ((0, 0), (0, OUT_PAD - OUT_DIM)))

    cd = compute_dtype
    return (wx.astype(cd), wh.astype(cd), b_comb,
            a1w1.astype(cd), a1b1, a1w2.astype(cd), a1b2,
            a2w1.astype(cd), a2b1, a2w2.astype(cd), a2b2,
            gw1.astype(cd), gb1, gw2.astype(cd), gb2,
            ow1.astype(cd), ob1, ow2p.astype(cd), ob2p)


# ---------------- Pallas kernel ----------------
def _mfn_kernel(x_ref,
                wx_ref, wh_ref, bxh_ref,
                a1w1_ref, a1b1_ref, a1w2_ref, a1b2_ref,
                a2w1_ref, a2b1_ref, a2w2_ref, a2b2_ref,
                gw1_ref, gb1_ref, gw2_ref, gb2_ref,
                ow1_ref, ob1_ref, ow2_ref, ob2_ref,
                out_ref, xproj_ref):
    cdt = wx_ref.dtype   # MXU operand dtype (bf16 on v6e/v7x, f32 on v5e)

    def linear(x, w_ref, b_ref):
        return (jnp.dot(x.astype(cdt), w_ref[...],
                        preferred_element_type=jnp.float32) + b_ref[...])

    # Input->gate projection for ALL time steps in one MXU call (off the serial
    # critical path), staged in VMEM scratch: (T*NP, G_DIM).
    xproj_ref[...] = linear(x_ref[...], wx_ref, bxh_ref)

    def step(t, carry):
        h, c, mem = carry                                    # (NP,48),(NP,48),(NP,32)

        row0 = pl.multiple_of(t * NP, NP)
        gates = (xproj_ref[pl.ds(row0, NP), :]
                 + jnp.dot(h.astype(cdt), wh_ref[...],
                           preferred_element_type=jnp.float32))   # (NP, 192)

        i_g = jax.nn.sigmoid(gates[:, 0:DH_TOT])
        f_g = jax.nn.sigmoid(gates[:, DH_TOT:2 * DH_TOT])
        g_g = jnp.tanh(gates[:, 2 * DH_TOT:3 * DH_TOT])
        o_g = jax.nn.sigmoid(gates[:, 3 * DH_TOT:4 * DH_TOT])
        c_new = f_g * c + i_g * g_g
        h_new = o_g * jnp.tanh(c_new)

        c_star = jnp.concatenate([c, c_new], axis=1)          # (NP, 96)

        # attention = softmax(att1_fc2(relu(att1_fc1(cStar))))  (dropout = identity)
        att_logits = linear(jax.nn.relu(linear(c_star, a1w1_ref, a1b1_ref)),
                            a1w2_ref, a1b2_ref)
        m = jnp.max(att_logits, axis=1, keepdims=True)
        e = jnp.exp(att_logits - m)
        attention = e * pl.reciprocal(jnp.sum(e, axis=1, keepdims=True), approx=True)
        attended = attention * c_star

        c_hat = jnp.tanh(linear(jax.nn.relu(linear(attended, a2w1_ref, a2b1_ref)),
                                a2w2_ref, a2b2_ref))          # (NP, 32)

        both = jnp.concatenate([attended, mem], axis=1)       # (NP, 128)
        g_out = jax.nn.sigmoid(linear(jax.nn.relu(linear(both, gw1_ref, gb1_ref)),
                                      gw2_ref, gb2_ref))      # (NP, 64) fused γ1|γ2
        gamma1 = g_out[:, :MEM_DIM]
        gamma2 = g_out[:, MEM_DIM:]
        mem_new = gamma1 * mem + gamma2 * c_hat
        return h_new, c_new, mem_new

    h0 = jnp.zeros((NP, DH_TOT), jnp.float32)
    c0 = jnp.zeros((NP, DH_TOT), jnp.float32)
    m0 = jnp.zeros((NP, MEM_DIM), jnp.float32)
    h, c, mem = lax.fori_loop(0, T, step, (h0, c0, m0), unroll=True)

    last_hs = jnp.concatenate([h, mem], axis=1)               # (NP, 80)
    out = linear(jax.nn.relu(linear(last_hs, ow1_ref, ob1_ref)), ow2_ref, ob2_ref)
    out_ref[...] = out.astype(out_ref.dtype)                  # (NP, 128) unmasked vst


# ---------------- wrapper ----------------
def mfn_forward(x_l, x_a, x_v, params):
    kind = jax.devices()[0].device_kind.lower()
    use_bf16 = any(tag in kind for tag in ("v6", "v7", "7x"))
    compute_dtype = jnp.bfloat16 if use_bf16 else jnp.float32

    fused = fuse_params(params, compute_dtype)

    # Pack modalities along lanes, pad batch 4 -> 8, flatten time into sublanes.
    x_all = jnp.concatenate([x_l, x_a, x_v], axis=-1)          # (T, N, 36)
    x_all = jnp.pad(x_all, ((0, 0), (0, NP - N), (0, 0)))      # (T, NP, 36)
    x_all = x_all.reshape(T * NP, D_ALL)                       # (64, 36)

    def full_spec(arr):
        nd = arr.ndim
        return pl.BlockSpec(arr.shape, lambda i, _nd=nd: (0,) * _nd)

    in_specs = [full_spec(x_all)] + [full_spec(p) for p in fused]

    out = pl.pallas_call(
        _mfn_kernel,
        out_shape=jax.ShapeDtypeStruct((NP, OUT_PAD), jnp.float32),
        grid_spec=pltpu.PrefetchScalarGridSpec(
            num_scalar_prefetch=0,
            grid=(1,),
            in_specs=in_specs,
            out_specs=pl.BlockSpec((NP, OUT_PAD), lambda i: (0, 0)),
            scratch_shapes=[pltpu.VMEM((T * NP, G_DIM), jnp.float32)]),
        compiler_params=pltpu.CompilerParams(
            dimension_semantics=("arbitrary",)),
    )(x_all, *fused)

    return out[:N, :OUT_DIM]


# ---------------- pure-JAX reference (mirrors the PyTorch forward) ----------------
def mfn_reference(x_l, x_a, x_v, params):
    (wih_l, whh_l, b_l,
     wih_a, whh_a, b_a,
     wih_v, whh_v, b_v,
     a1w1, a1b1, a1w2, a1b2,
     a2w1, a2b1, a2w2, a2b2,
     g1w1, g1b1, g1w2, g1b2,
     g2w1, g2b1, g2w2, g2b2,
     ow1, ob1, ow2, ob2) = params

    def linear(x, w, b):
        return x @ w + b

    def lstm(x, h, c, wih, whh, b, dh):
        gates = x @ wih + h @ whh + b
        i_g = jax.nn.sigmoid(gates[:, 0:dh])
        f_g = jax.nn.sigmoid(gates[:, dh:2 * dh])
        g_g = jnp.tanh(gates[:, 2 * dh:3 * dh])
        o_g = jax.nn.sigmoid(gates[:, 3 * dh:4 * dh])
        c_new = f_g * c + i_g * g_g
        return o_g * jnp.tanh(c_new), c_new

    h_l = jnp.zeros((N, DH_L)); c_l = jnp.zeros((N, DH_L))
    h_a = jnp.zeros((N, DH_A)); c_a = jnp.zeros((N, DH_A))
    h_v = jnp.zeros((N, DH_V)); c_v = jnp.zeros((N, DH_V))
    mem = jnp.zeros((N, MEM_DIM))

    for i in range(T):
        nh_l, nc_l = lstm(x_l[i], h_l, c_l, wih_l, whh_l, b_l, DH_L)
        nh_a, nc_a = lstm(x_a[i], h_a, c_a, wih_a, whh_a, b_a, DH_A)
        nh_v, nc_v = lstm(x_v[i], h_v, c_v, wih_v, whh_v, b_v, DH_V)
        prev_cs = jnp.concatenate([c_l, c_a, c_v], axis=1)
        new_cs = jnp.concatenate([nc_l, nc_a, nc_v], axis=1)
        c_star = jnp.concatenate([prev_cs, new_cs], axis=1)
        attention = jax.nn.softmax(
            linear(jax.nn.relu(linear(c_star, a1w1, a1b1)), a1w2, a1b2), axis=1)
        attended = attention * c_star
        c_hat = jnp.tanh(linear(jax.nn.relu(linear(attended, a2w1, a2b1)), a2w2, a2b2))
        both = jnp.concatenate([attended, mem], axis=1)
        gamma1 = jax.nn.sigmoid(linear(jax.nn.relu(linear(both, g1w1, g1b1)), g1w2, g1b2))
        gamma2 = jax.nn.sigmoid(linear(jax.nn.relu(linear(both, g2w1, g2b1)), g2w2, g2b2))
        mem = gamma1 * mem + gamma2 * c_hat
        h_l, c_l = nh_l, nc_l
        h_a, c_a = nh_a, nc_a
        h_v, c_v = nh_v, nc_v

    last_hs = jnp.concatenate([h_l, h_a, h_v, mem], axis=1)
    return linear(jax.nn.relu(linear(last_hs, ow1, ob1)), ow2, ob2)


if __name__ == "__main__":
    root = jax.random.PRNGKey(0)
    k_params, k_l, k_a, k_v = jax.random.split(root, 4)

    params = make_params(k_params)
    x_l = jax.random.normal(k_l, (T, N, D_L), jnp.float32)
    x_a = jax.random.normal(k_a, (T, N, D_A), jnp.float32)
    x_v = jax.random.normal(k_v, (T, N, D_V), jnp.float32)

    out = jax.block_until_ready(mfn_forward(x_l, x_a, x_v, params))
    ref = jax.block_until_ready(mfn_reference(x_l, x_a, x_v, params))

    np.testing.assert_allclose(np.asarray(out), np.asarray(ref), rtol=5e-2, atol=5e-2)
    assert out.shape == (N, OUT_DIM)
    print("KERNEL_OK")
</pallas_src>

<mosaic_0001>
module attributes {stable_mosaic.version = 11 : i64} {
  func.func @_mfn_kernel(%arg0: i32, %arg1: memref<64x36xf32, #tpu.memory_space<vmem>>, %arg2: memref<36x192xf32, #tpu.memory_space<vmem>>, %arg3: memref<48x192xf32, #tpu.memory_space<vmem>>, %arg4: memref<1x192xf32, #tpu.memory_space<vmem>>, %arg5: memref<96x32xf32, #tpu.memory_space<vmem>>, %arg6: memref<1x32xf32, #tpu.memory_space<vmem>>, %arg7: memref<32x96xf32, #tpu.memory_space<vmem>>, %arg8: memref<1x96xf32, #tpu.memory_space<vmem>>, %arg9: memref<96x32xf32, #tpu.memory_space<vmem>>, %arg10: memref<1x32xf32, #tpu.memory_space<vmem>>, %arg11: memref<32x32xf32, #tpu.memory_space<vmem>>, %arg12: memref<1x32xf32, #tpu.memory_space<vmem>>, %arg13: memref<128x64xf32, #tpu.memory_space<vmem>>, %arg14: memref<1x64xf32, #tpu.memory_space<vmem>>, %arg15: memref<64x64xf32, #tpu.memory_space<vmem>>, %arg16: memref<1x64xf32, #tpu.memory_space<vmem>>, %arg17: memref<80x32xf32, #tpu.memory_space<vmem>>, %arg18: memref<1x32xf32, #tpu.memory_space<vmem>>, %arg19: memref<32x128xf32, #tpu.memory_space<vmem>>, %arg20: memref<1x128xf32, #tpu.memory_space<vmem>>, %arg21: memref<8x128xf32, #tpu.memory_space<vmem>>, %arg22: memref<64x192xf32, #tpu.memory_space<vmem>>) attributes {dimension_semantics = [#tpu.dimension_semantics<arbitrary>], iteration_bounds = array<i64: 1>, scalar_prefetch = 0 : i64, scratch_operands = 1 : i64, tpu.core_type = #tpu.core_type<tc>, window_params = [{pipeline_mode = #tpu.pipeline_mode<synchronous>, transform_indices = @transform_0, window_bounds = array<i64: 64, 36>}, {pipeline_mode = #tpu.pipeline_mode<synchronous>, transform_indices = @transform_1, window_bounds = array<i64: 36, 192>}, {pipeline_mode = #tpu.pipeline_mode<synchronous>, transform_indices = @transform_2, window_bounds = array<i64: 48, 192>}, {pipeline_mode = #tpu.pipeline_mode<synchronous>, transform_indices = @transform_3, window_bounds = array<i64: 1, 192>}, {pipeline_mode = #tpu.pipeline_mode<synchronous>, transform_indices = @transform_4, window_bounds = array<i64: 96, 32>}, {pipeline_mode = #tpu.pipeline_mode<synchronous>, transform_indices = @transform_5, window_bounds = array<i64: 1, 32>}, {pipeline_mode = #tpu.pipeline_mode<synchronous>, transform_indices = @transform_6, window_bounds = array<i64: 32, 96>}, {pipeline_mode = #tpu.pipeline_mode<synchronous>, transform_indices = @transform_7, window_bounds = array<i64: 1, 96>}, {pipeline_mode = #tpu.pipeline_mode<synchronous>, transform_indices = @transform_8, window_bounds = array<i64: 96, 32>}, {pipeline_mode = #tpu.pipeline_mode<synchronous>, transform_indices = @transform_9, window_bounds = array<i64: 1, 32>}, {pipeline_mode = #tpu.pipeline_mode<synchronous>, transform_indices = @transform_10, window_bounds = array<i64: 32, 32>}, {pipeline_mode = #tpu.pipeline_mode<synchronous>, transform_indices = @transform_11, window_bounds = array<i64: 1, 32>}, {pipeline_mode = #tpu.pipeline_mode<synchronous>, transform_indices = @transform_12, window_bounds = array<i64: 128, 64>}, {pipeline_mode = #tpu.pipeline_mode<synchronous>, transform_indices = @transform_13, window_bounds = array<i64: 1, 64>}, {pipeline_mode = #tpu.pipeline_mode<synchronous>, transform_indices = @transform_14, window_bounds = array<i64: 64, 64>}, {pipeline_mode = #tpu.pipeline_mode<synchronous>, transform_indices = @transform_15, window_bounds = array<i64: 1, 64>}, {pipeline_mode = #tpu.pipeline_mode<synchronous>, transform_indices = @transform_16, window_bounds = array<i64: 80, 32>}, {pipeline_mode = #tpu.pipeline_mode<synchronous>, transform_indices = @transform_17, window_bounds = array<i64: 1, 32>}, {pipeline_mode = #tpu.pipeline_mode<synchronous>, transform_indices = @transform_18, window_bounds = array<i64: 32, 128>}, {pipeline_mode = #tpu.pipeline_mode<synchronous>, transform_indices = @transform_19, window_bounds = array<i64: 1, 128>}, {pipeline_mode = #tpu.pipeline_mode<synchronous>, transform_indices = @transform_20, window_bounds = array<i64: 8, 128>}]} {
    %c0 = arith.constant 0 : index
    %c0_0 = arith.constant 0 : index
    %0 = vector.load %arg1[%c0, %c0_0] : memref<64x36xf32, #tpu.memory_space<vmem>>, vector<64x36xf32>
    %c0_1 = arith.constant 0 : index
    %c0_2 = arith.constant 0 : index
    %1 = vector.load %arg2[%c0_1, %c0_2] : memref<36x192xf32, #tpu.memory_space<vmem>>, vector<36x192xf32>
    %cst = arith.constant dense<0.000000e+00> : vector<64x192xf32>
    %2 = tpu.matmul %0, %1, %cst {dimension_numbers = #tpu.dot_dimension_numbers<[1], [0], [0], [1], [0, 0, 1, 1], [], []>} : vector<64x36xf32>, vector<36x192xf32>, vector<64x192xf32> -> vector<64x192xf32>
    %c0_3 = arith.constant 0 : index
    %c0_4 = arith.constant 0 : index
    %3 = vector.load %arg4[%c0_3, %c0_4] : memref<1x192xf32, #tpu.memory_space<vmem>>, vector<1x192xf32>
    %4 = vector.broadcast %3 : vector<1x192xf32> to vector<64x192xf32>
    %5 = arith.addf %2, %4 : vector<64x192xf32>
    %c0_5 = arith.constant 0 : index
    %c0_6 = arith.constant 0 : index
    %6 = vector.load %arg22[%c0_5, %c0_6] : memref<64x192xf32, #tpu.memory_space<vmem>>, vector<64x192xf32>
    tpu.vector_store %arg22[%c0_5, %c0_6], %5 {strides = array<i32>} : memref<64x192xf32, #tpu.memory_space<vmem>>, vector<64x192xf32>,
    %cst_7 = arith.constant 0.000000e+00 : f32
    %7 = vector.broadcast %cst_7 : f32 to vector<8x48xf32>
    %cst_8 = arith.constant 0.000000e+00 : f32
    %8 = vector.broadcast %cst_8 : f32 to vector<8x48xf32>
    %cst_9 = arith.constant 0.000000e+00 : f32
    %9 = vector.broadcast %cst_9 : f32 to vector<8x32xf32>
    %c0_i32 = arith.constant 0 : i32
    %c8_i32 = arith.constant 8 : i32
    %10 = arith.muli %c0_i32, %c8_i32 : i32
    %11 = tpu.assume_multiple %10, 8 : i32
    %12 = arith.index_cast %11 : i32 to index
    %c0_10 = arith.constant 0 : index
    %13 = vector.load %arg22[%12, %c0_10] : memref<64x192xf32, #tpu.memory_space<vmem>>, vector<8x192xf32>
    %c0_11 = arith.constant 0 : index
    %c0_12 = arith.constant 0 : index
    %14 = vector.load %arg3[%c0_11, %c0_12] : memref<48x192xf32, #tpu.memory_space<vmem>>, vector<48x192xf32>
    %cst_13 = arith.constant dense<0.000000e+00> : vector<8x192xf32>
    %15 = tpu.matmul %7, %14, %cst_13 {dimension_numbers = #tpu.dot_dimension_numbers<[1], [0], [0], [1], [0, 0, 1, 1], [], []>} : vector<8x48xf32>, vector<48x192xf32>, vector<8x192xf32> -> vector<8x192xf32>
    %16 = arith.addf %13, %15 : vector<8x192xf32>
    %17 = vector.extract_strided_slice %16 {offsets = [0, 0], sizes = [8, 48], strides = [1, 1]} : vector<8x192xf32> to vector<8x48xf32>
    %18 = arith.negf %17 : vector<8x48xf32>
    %19 = math.exp %18 : vector<8x48xf32>
    %cst_14 = arith.constant 1.000000e+00 : f32
    %20 = vector.broadcast %cst_14 : f32 to vector<8x48xf32>
    %21 = arith.addf %20, %19 : vector<8x48xf32>
    %22 = arith.divf %20, %21 : vector<8x48xf32>
    %23 = vector.extract_strided_slice %16 {offsets = [0, 48], sizes = [8, 48], strides = [1, 1]} : vector<8x192xf32> to vector<8x48xf32>
    %24 = arith.negf %23 : vector<8x48xf32>
    %25 = math.exp %24 : vector<8x48xf32>
    %cst_15 = arith.constant 1.000000e+00 : f32
    %26 = vector.broadcast %cst_15 : f32 to vector<8x48xf32>
    %27 = arith.addf %26, %25 : vector<8x48xf32>
    %28 = arith.divf %26, %27 : vector<8x48xf32>
    %29 = vector.extract_strided_slice %16 {offsets = [0, 96], sizes = [8, 48], strides = [1, 1]} : vector<8x192xf32> to vector<8x48xf32>
    %30 = math.tanh %29 : vector<8x48xf32>
    %31 = vector.extract_strided_slice %16 {offsets = [0, 144], sizes = [8, 48], strides = [1, 1]} : vector<8x192xf32> to vector<8x48xf32>
    %32 = arith.negf %31 : vector<8x48xf32>
    %33 = math.exp %32 : vector<8x48xf32>
    %cst_16 = arith.constant 1.000000e+00 : f32
    %34 = vector.broadcast %cst_16 : f32 to vector<8x48xf32>
    %35 = arith.addf %34, %33 : vector<8x48xf32>
    %36 = arith.divf %34, %35 : vector<8x48xf32>
    %37 = arith.mulf %28, %8 : vector<8x48xf32>
    %38 = arith.mulf %22, %30 : vector<8x48xf32>
    %39 = arith.addf %37, %38 : vector<8x48xf32>
    %40 = math.tanh %39 : vector<8x48xf32>
    %41 = arith.mulf %36, %40 : vector<8x48xf32>
    %42 = tpu.concatenate %8, %39 in 1 : vector<8x48xf32>, vector<8x48xf32> -> vector<8x96xf32>
    %c0_17 = arith.constant 0 : index
    %c0_18 = arith.constant 0 : index
    %43 = vector.load %arg5[%c0_17, %c0_18] : memref<96x32xf32, #tpu.memory_space<vmem>>, vector<96x32xf32>
    %cst_19 = arith.constant dense<0.000000e+00> : vector<8x32xf32>
    %44 = tpu.matmul %42, %43, %cst_19 {dimension_numbers = #tpu.dot_dimension_numbers<[1], [0], [0], [1], [0, 0, 1, 1], [], []>} : vector<8x96xf32>, vector<96x32xf32>, vector<8x32xf32> -> vector<8x32xf32>
    %c0_20 = arith.constant 0 : index
    %c0_21 = arith.constant 0 : index
    %45 = vector.load %arg6[%c0_20, %c0_21] : memref<1x32xf32, #tpu.memory_space<vmem>>, vector<1x32xf32>
    %46 = vector.broadcast %45 : vector<1x32xf32> to vector<8x32xf32>
    %47 = arith.addf %44, %46 : vector<8x32xf32>
    %cst_22 = arith.constant 0.000000e+00 : f32
    %48 = vector.broadcast %cst_22 : f32 to vector<8x32xf32>
    %49 = arith.maximumf %47, %48 : vector<8x32xf32>
    %c0_23 = arith.constant 0 : index
    %c0_24 = arith.constant 0 : index
    %50 = vector.load %arg7[%c0_23, %c0_24] : memref<32x96xf32, #tpu.memory_space<vmem>>, vector<32x96xf32>
    %cst_25 = arith.constant dense<0.000000e+00> : vector<8x96xf32>
    %51 = tpu.matmul %49, %50, %cst_25 {dimension_numbers = #tpu.dot_dimension_numbers<[1], [0], [0], [1], [0, 0, 1, 1], [], []>} : vector<8x32xf32>, vector<32x96xf32>, vector<8x96xf32> -> vector<8x96xf32>
    %c0_26 = arith.constant 0 : index
    %c0_27 = arith.constant 0 : index
    %52 = vector.load %arg8[%c0_26, %c0_27] : memref<1x96xf32, #tpu.memory_space<vmem>>, vector<1x96xf32>
    %53 = vector.broadcast %52 : vector<1x96xf32> to vector<8x96xf32>
    %54 = arith.addf %51, %53 : vector<8x96xf32>
    %cst_28 = arith.constant dense<0xFF800000> : vector<8xf32>
    %55 = vector.multi_reduction <maximumf>, %54, %cst_28 [1] : vector<8x96xf32> to vector<8xf32>
    %56 = vector.shape_cast %55 : vector<8xf32> to vector<8x1xf32>
    %57 = vector.broadcast %56 : vector<8x1xf32> to vector<8x96xf32>
    %58 = arith.subf %54, %57 : vector<8x96xf32>
    %59 = math.exp %58 : vector<8x96xf32>
    %cst_29 = arith.constant dense<0.000000e+00> : vector<8xf32>
    %60 = vector.multi_reduction <add>, %59, %cst_29 [1] : vector<8x96xf32> to vector<8xf32>
    %61 = vector.shape_cast %60 : vector<8xf32> to vector<8x1xf32>
    %62 = tpu.reciprocal %61 {approx = true} : vector<8x1xf32> -> vector<8x1xf32>
    %63 = vector.broadcast %62 : vector<8x1xf32> to vector<8x96xf32>
    %64 = arith.mulf %59, %63 : vector<8x96xf32>
    %65 = arith.mulf %64, %42 : vector<8x96xf32>
    %c0_30 = arith.constant 0 : index
    %c0_31 = arith.constant 0 : index
    %66 = vector.load %arg9[%c0_30, %c0_31] : memref<96x32xf32, #tpu.memory_space<vmem>>, vector<96x32xf32>
    %cst_32 = arith.constant dense<0.000000e+00> : vector<8x32xf32>
    %67 = tpu.matmul %65, %66, %cst_32 {dimension_numbers = #tpu.dot_dimension_numbers<[1], [0], [0], [1], [0, 0, 1, 1], [], []>} : vector<8x96xf32>, vector<96x32xf32>, vector<8x32xf32> -> vector<8x32xf32>
    %c0_33 = arith.constant 0 : index
    %c0_34 = arith.constant 0 : index
    %68 = vector.load %arg10[%c0_33, %c0_34] : memref<1x32xf32, #tpu.memory_space<vmem>>, vector<1x32xf32>
    %69 = vector.broadcast %68 : vector<1x32xf32> to vector<8x32xf32>
    %70 = arith.addf %67, %69 : vector<8x32xf32>
    %cst_35 = arith.constant 0.000000e+00 : f32
    %71 = vector.broadcast %cst_35 : f32 to vector<8x32xf32>
    %72 = arith.maximumf %70, %71 : vector<8x32xf32>
    %c0_36 = arith.constant 0 : index
    %c0_37 = arith.constant 0 : index
    %73 = vector.load %arg11[%c0_36, %c0_37] : memref<32x32xf32, #tpu.memory_space<vmem>>, vector<32x32xf32>
    %cst_38 = arith.constant dense<0.000000e+00> : vector<8x32xf32>
    %74 = tpu.matmul %72, %73, %cst_38 {dimension_numbers = #tpu.dot_dimension_numbers<[1], [0], [0], [1], [0, 0, 1, 1], [], []>} : vector<8x32xf32>, vector<32x32xf32>, vector<8x32xf32> -> vector<8x32xf32>
    %c0_39 = arith.constant 0 : index
    %c0_40 = arith.constant 0 : index
    %75 = vector.load %arg12[%c0_39, %c0_40] : memref<1x32xf32, #tpu.memory_space<vmem>>, vector<1x32xf32>
    %76 = vector.broadcast %75 : vector<1x32xf32> to vector<8x32xf32>
    %77 = arith.addf %74, %76 : vector<8x32xf32>
    %78 = math.tanh %77 : vector<8x32xf32>
    %79 = tpu.concatenate %65, %9 in 1 : vector<8x96xf32>, vector<8x32xf32> -> vector<8x128xf32>
    %c0_41 = arith.constant 0 : index
    %c0_42 = arith.constant 0 : index
    %80 = vector.load %arg13[%c0_41, %c0_42] : memref<128x64xf32, #tpu.memory_space<vmem>>, vector<128x64xf32>
    %cst_43 = arith.constant dense<0.000000e+00> : vector<8x64xf32>
    %81 = tpu.matmul %79, %80, %cst_43 {dimension_numbers = #tpu.dot_dimension_numbers<[1], [0], [0], [1], [0, 0, 1, 1], [], []>} : vector<8x128xf32>, vector<128x64xf32>, vector<8x64xf32> -> vector<8x64xf32>
    %c0_44 = arith.constant 0 : index
    %c0_45 = arith.constant 0 : index
    %82 = vector.load %arg14[%c0_44, %c0_45] : memref<1x64xf32, #tpu.memory_space<vmem>>, vector<1x64xf32>
    %83 = vector.broadcast %82 : vector<1x64xf32> to vector<8x64xf32>
    %84 = arith.addf %81, %83 : vector<8x64xf32>
    %cst_46 = arith.constant 0.000000e+00 : f32
    %85 = vector.broadcast %cst_46 : f32 to vector<8x64xf32>
    %86 = arith.maximumf %84, %85 : vector<8x64xf32>
    %c0_47 = arith.constant 0 : index
    %c0_48 = arith.constant 0 : index
    %87 = vector.load %arg15[%c0_47, %c0_48] : memref<64x64xf32, #tpu.memory_space<vmem>>, vector<64x64xf32>
    %cst_49 = arith.constant dense<0.000000e+00> : vector<8x64xf32>
    %88 = tpu.matmul %86, %87, %cst_49 {dimension_numbers = #tpu.dot_dimension_numbers<[1], [0], [0], [1], [0, 0, 1, 1], [], []>} : vector<8x64xf32>, vector<64x64xf32>, vector<8x64xf32> -> vector<8x64xf32>
    %c0_50 = arith.constant 0 : index
    %c0_51 = arith.constant 0 : index
    %89 = vector.load %arg16[%c0_50, %c0_51] : memref<1x64xf32, #tpu.memory_space<vmem>>, vector<1x64xf32>
    %90 = vector.broadcast %89 : vector<1x64xf32> to vector<8x64xf32>
    %91 = arith.addf %88, %90 : vector<8x64xf32>
    %92 = arith.negf %91 : vector<8x64xf32>
    %93 = math.exp %92 : vector<8x64xf32>
    %cst_52 = arith.constant 1.000000e+00 : f32
    %94 = vector.broadcast %cst_52 : f32 to vector<8x64xf32>
    %95 = arith.addf %94, %93 : vector<8x64xf32>
    %96 = arith.divf %94, %95 : vector<8x64xf32>
    %97 = vector.extract_strided_slice %96 {offsets = [0, 0], sizes = [8, 32], strides = [1, 1]} : vector<8x64xf32> to vector<8x32xf32>
    %98 = vector.extract_strided_slice %96 {offsets = [0, 32], sizes = [8, 32], strides = [1, 1]} : vector<8x64xf32> to vector<8x32xf32>
    %99 = arith.mulf %97, %9 : vector<8x32xf32>
    %100 = arith.mulf %98, %78 : vector<8x32xf32>
    %101 = arith.addf %99, %100 : vector<8x32xf32>
    %c1_i32 = arith.constant 1 : i32
    %c8_i32_53 = arith.constant 8 : i32
    %102 = arith.muli %c1_i32, %c8_i32_53 : i32
    %103 = tpu.assume_multiple %102, 8 : i32
    %104 = arith.index_cast %103 : i32 to index
    %c0_54 = arith.constant 0 : index
    %105 = vector.load %arg22[%104, %c0_54] : memref<64x192xf32, #tpu.memory_space<vmem>>, vector<8x192xf32>
    %c0_55 = arith.constant 0 : index
    %c0_56 = arith.constant 0 : index
    %106 = vector.load %arg3[%c0_55, %c0_56] : memref<48x192xf32, #tpu.memory_space<vmem>>, vector<48x192xf32>
    %cst_57 = arith.constant dense<0.000000e+00> : vector<8x192xf32>
    %107 = tpu.matmul %41, %106, %cst_57 {dimension_numbers = #tpu.dot_dimension_numbers<[1], [0], [0], [1], [0, 0, 1, 1], [], []>} : vector<8x48xf32>, vector<48x192xf32>, vector<8x192xf32> -> vector<8x192xf32>
    %108 = arith.addf %105, %107 : vector<8x192xf32>
    %109 = vector.extract_strided_slice %108 {offsets = [0, 0], sizes = [8, 48], strides = [1, 1]} : vector<8x192xf32> to vector<8x48xf32>
    %110 = arith.negf %109 : vector<8x48xf32>
    %111 = math.exp %110 : vector<8x48xf32>
    %cst_58 = arith.constant 1.000000e+00 : f32
    %112 = vector.broadcast %cst_58 : f32 to vector<8x48xf32>
    %113 = arith.addf %112, %111 : vector<8x48xf32>
    %114 = arith.divf %112, %113 : vector<8x48xf32>
    %115 = vector.extract_strided_slice %108 {offsets = [0, 48], sizes = [8, 48], strides = [1, 1]} : vector<8x192xf32> to vector<8x48xf32>
    %116 = arith.negf %115 : vector<8x48xf32>
    %117 = math.exp %116 : vector<8x48xf32>
    %cst_59 = arith.constant 1.000000e+00 : f32
    %118 = vector.broadcast %cst_59 : f32 to vector<8x48xf32>
    %119 = arith.addf %118, %117 : vector<8x48xf32>
    %120 = arith.divf %118, %119 : vector<8x48xf32>
    %121 = vector.extract_strided_slice %108 {offsets = [0, 96], sizes = [8, 48], strides = [1, 1]} : vector<8x192xf32> to vector<8x48xf32>
    %122 = math.tanh %121 : vector<8x48xf32>
    %123 = vector.extract_strided_slice %108 {offsets = [0, 144], sizes = [8, 48], strides = [1, 1]} : vector<8x192xf32> to vector<8x48xf32>
    %124 = arith.negf %123 : vector<8x48xf32>
    %125 = math.exp %124 : vector<8x48xf32>
    %cst_60 = arith.constant 1.000000e+00 : f32
    %126 = vector.broadcast %cst_60 : f32 to vector<8x48xf32>
    %127 = arith.addf %126, %125 : vector<8x48xf32>
    %128 = arith.divf %126, %127 : vector<8x48xf32>
    %129 = arith.mulf %120, %39 : vector<8x48xf32>
    %130 = arith.mulf %114, %122 : vector<8x48xf32>
    %131 = arith.addf %129, %130 : vector<8x48xf32>
    %132 = math.tanh %131 : vector<8x48xf32>
    %133 = arith.mulf %128, %132 : vector<8x48xf32>
    %134 = tpu.concatenate %39, %131 in 1 : vector<8x48xf32>, vector<8x48xf32> -> vector<8x96xf32>
    %c0_61 = arith.constant 0 : index
    %c0_62 = arith.constant 0 : index
    %135 = vector.load %arg5[%c0_61, %c0_62] : memref<96x32xf32, #tpu.memory_space<vmem>>, vector<96x32xf32>
    %cst_63 = arith.constant dense<0.000000e+00> : vector<8x32xf32>
    %136 = tpu.matmul %134, %135, %cst_63 {dimension_numbers = #tpu.dot_dimension_numbers<[1], [0], [0], [1], [0, 0, 1, 1], [], []>} : vector<8x96xf32>, vector<96x32xf32>, vector<8x32xf32> -> vector<8x32xf32>
    %c0_64 = arith.constant 0 : index
    %c0_65 = arith.constant 0 : index
    %137 = vector.load %arg6[%c0_64, %c0_65] : memref<1x32xf32, #tpu.memory_space<vmem>>, vector<1x32xf32>
    %138 = vector.broadcast %137 : vector<1x32xf32> to vector<8x32xf32>
    %139 = arith.addf %136, %138 : vector<8x32xf32>
    %cst_66 = arith.constant 0.000000e+00 : f32
    %140 = vector.broadcast %cst_66 : f32 to vector<8x32xf32>
    %141 = arith.maximumf %139, %140 : vector<8x32xf32>
    %c0_67 = arith.constant 0 : index
    %c0_68 = arith.constant 0 : index
    %142 = vector.load %arg7[%c0_67, %c0_68] : memref<32x96xf32, #tpu.memory_space<vmem>>, vector<32x96xf32>
    %cst_69 = arith.constant dense<0.000000e+00> : vector<8x96xf32>
    %143 = tpu.matmul %141, %142, %cst_69 {dimension_numbers = #tpu.dot_dimension_numbers<[1], [0], [0], [1], [0, 0, 1, 1], [], []>} : vector<8x32xf32>, vector<32x96xf32>, vector<8x96xf32> -> vector<8x96xf32>
    %c0_70 = arith.constant 0 : index
    %c0_71 = arith.constant 0 : index
    %144 = vector.load %arg8[%c0_70, %c0_71] : memref<1x96xf32, #tpu.memory_space<vmem>>, vector<1x96xf32>
    %145 = vector.broadcast %144 : vector<1x96xf32> to vector<8x96xf32>
    %146 = arith.addf %143, %145 : vector<8x96xf32>
    %cst_72 = arith.constant dense<0xFF800000> : vector<8xf32>
    %147 = vector.multi_reduction <maximumf>, %146, %cst_72 [1] : vector<8x96xf32> to vector<8xf32>
    %148 = vector.shape_cast %147 : vector<8xf32> to vector<8x1xf32>
    %149 = vector.broadcast %148 : vector<8x1xf32> to vector<8x96xf32>
    %150 = arith.subf %146, %149 : vector<8x96xf32>
    %151 = math.exp %150 : vector<8x96xf32>
    %cst_73 = arith.constant dense<0.000000e+00> : vector<8xf32>
    %152 = vector.multi_reduction <add>, %151, %cst_73 [1] : vector<8x96xf32> to vector<8xf32>
    %153 = vector.shape_cast %152 : vector<8xf32> to vector<8x1xf32>
    %154 = tpu.reciprocal %153 {approx = true} : vector<8x1xf32> -> vector<8x1xf32>
    %155 = vector.broadcast %154 : vector<8x1xf32> to vector<8x96xf32>
    %156 = arith.mulf %151, %155 : vector<8x96xf32>
    %157 = arith.mulf %156, %134 : vector<8x96xf32>
    %c0_74 = arith.constant 0 : index
    %c0_75 = arith.constant 0 : index
    %158 = vector.load %arg9[%c0_74, %c0_75] : memref<96x32xf32, #tpu.memory_space<vmem>>, vector<96x32xf32>
    %cst_76 = arith.constant dense<0.000000e+00> : vector<8x32xf32>
    %159 = tpu.matmul %157, %158, %cst_76 {dimension_numbers = #tpu.dot_dimension_numbers<[1], [0], [0], [1], [0, 0, 1, 1], [], []>} : vector<8x96xf32>, vector<96x32xf32>, vector<8x32xf32> -> vector<8x32xf32>
    %c0_77 = arith.constant 0 : index
    %c0_78 = arith.constant 0 : index
    %160 = vector.load %arg10[%c0_77, %c0_78] : memref<1x32xf32, #tpu.memory_space<vmem>>, vector<1x32xf32>
    %161 = vector.broadcast %160 : vector<1x32xf32> to vector<8x32xf32>
    %162 = arith.addf %159, %161 : vector<8x32xf32>
    %cst_79 = arith.constant 0.000000e+00 : f32
    %163 = vector.broadcast %cst_79 : f32 to vector<8x32xf32>
    %164 = arith.maximumf %162, %163 : vector<8x32xf32>
    %c0_80 = arith.constant 0 : index
    %c0_81 = arith.constant 0 : index
    %165 = vector.load %arg11[%c0_80, %c0_81] : memref<32x32xf32, #tpu.memory_space<vmem>>, vector<32x32xf32>
    %cst_82 = arith.constant dense<0.000000e+00> : vector<8x32xf32>
    %166 = tpu.matmul %164, %165, %cst_82 {dimension_numbers = #tpu.dot_dimension_numbers<[1], [0], [0], [1], [0, 0, 1, 1], [], []>} : vector<8x32xf32>, vector<32x32xf32>, vector<8x32xf32> -> vector<8x32xf32>
    %c0_83 = arith.constant 0 : index
    %c0_84 = arith.constant 0 : index
    %167 = vector.load %arg12[%c0_83, %c0_84] : memref<1x32xf32, #tpu.memory_space<vmem>>, vector<1x32xf32>
    %168 = vector.broadcast %167 : vector<1x32xf32> to vector<8x32xf32>
    %169 = arith.addf %166, %168 : vector<8x32xf32>
    %170 = math.tanh %169 : vector<8x32xf32>
    %171 = tpu.concatenate %157, %101 in 1 : vector<8x96xf32>, vector<8x32xf32> -> vector<8x128xf32>
    %c0_85 = arith.constant 0 : index
    %c0_86 = arith.constant 0 : index
    %172 = vector.load %arg13[%c0_85, %c0_86] : memref<128x64xf32, #tpu.memory_space<vmem>>, vector<128x64xf32>
    %cst_87 = arith.constant dense<0.000000e+00> : vector<8x64xf32>
    %173 = tpu.matmul %171, %172, %cst_87 {dimension_numbers = #tpu.dot_dimension_numbers<[1], [0], [0], [1], [0, 0, 1, 1], [], []>} : vector<8x128xf32>, vector<128x64xf32>, vector<8x64xf32> -> vector<8x64xf32>
    %c0_88 = arith.constant 0 : index
    %c0_89 = arith.constant 0 : index
    %174 = vector.load %arg14[%c0_88, %c0_89] : memref<1x64xf32, #tpu.memory_space<vmem>>, vector<1x64xf32>
    %175 = vector.broadcast %174 : vector<1x64xf32> to vector<8x64xf32>
    %176 = arith.addf %173, %175 : vector<8x64xf32>
    %cst_90 = arith.constant 0.000000e+00 : f32
    %177 = vector.broadcast %cst_90 : f32 to vector<8x64xf32>
    %178 = arith.maximumf %176, %177 : vector<8x64xf32>
    %c0_91 = arith.constant 0 : index
    %c0_92 = arith.constant 0 : index
    %179 = vector.load %arg15[%c0_91, %c0_92] : memref<64x64xf32, #tpu.memory_space<vmem>>, vector<64x64xf32>
    %cst_93 = arith.constant dense<0.000000e+00> : vector<8x64xf32>
    %180 = tpu.matmul %178, %179, %cst_93 {dimension_numbers = #tpu.dot_dimension_numbers<[1], [0], [0], [1], [0, 0, 1, 1], [], []>} : vector<8x64xf32>, vector<64x64xf32>, vector<8x64xf32> -> vector<8x64xf32>
    %c0_94 = arith.constant 0 : index
    %c0_95 = arith.constant 0 : index
    %181 = vector.load %arg16[%c0_94, %c0_95] : memref<1x64xf32, #tpu.memory_space<vmem>>, vector<1x64xf32>
    %182 = vector.broadcast %181 : vector<1x64xf32> to vector<8x64xf32>
    %183 = arith.addf %180, %182 : vector<8x64xf32>
    %184 = arith.negf %183 : vector<8x64xf32>
    %185 = math.exp %184 : vector<8x64xf32>
    %cst_96 = arith.constant 1.000000e+00 : f32
    %186 = vector.broadcast %cst_96 : f32 to vector<8x64xf32>
    %187 = arith.addf %186, %185 : vector<8x64xf32>
    %188 = arith.divf %186, %187 : vector<8x64xf32>
    %189 = vector.extract_strided_slice %188 {offsets = [0, 0], sizes = [8, 32], strides = [1, 1]} : vector<8x64xf32> to vector<8x32xf32>
    %190 = vector.extract_strided_slice %188 {offsets = [0, 32], sizes = [8, 32], strides = [1, 1]} : vector<8x64xf32> to vector<8x32xf32>
    %191 = arith.mulf %189, %101 : vector<8x32xf32>
    %192 = arith.mulf %190, %170 : vector<8x32xf32>
    %193 = arith.addf %191, %192 : vector<8x32xf32>
    %c2_i32 = arith.constant 2 : i32
    %c8_i32_97 = arith.constant 8 : i32
    %194 = arith.muli %c2_i32, %c8_i32_97 : i32
    %195 = tpu.assume_multiple %194, 8 : i32
    %196 = arith.index_cast %195 : i32 to index
    %c0_98 = arith.constant 0 : index
    %197 = vector.load %arg22[%196, %c0_98] : memref<64x192xf32, #tpu.memory_space<vmem>>, vector<8x192xf32>
    %c0_99 = arith.constant 0 : index
    %c0_100 = arith.constant 0 : index
    %198 = vector.load %arg3[%c0_99, %c0_100] : memref<48x192xf32, #tpu.memory_space<vmem>>, vector<48x192xf32>
    %cst_101 = arith.constant dense<0.000000e+00> : vector<8x192xf32>
    %199 = tpu.matmul %133, %198, %cst_101 {dimension_numbers = #tpu.dot_dimension_numbers<[1], [0], [0], [1], [0, 0, 1, 1], [], []>} : vector<8x48xf32>, vector<48x192xf32>, vector<8x192xf32> -> vector<8x192xf32>
    %200 = arith.addf %197, %199 : vector<8x192xf32>
    %201 = vector.extract_strided_slice %200 {offsets = [0, 0], sizes = [8, 48], strides = [1, 1]} : vector<8x192xf32> to vector<8x48xf32>
    %202 = arith.negf %201 : vector<8x48xf32>
    %203 = math.exp %202 : vector<8x48xf32>
    %cst_102 = arith.constant 1.000000e+00 : f32
    %204 = vector.broadcast %cst_102 : f32 to vector<8x48xf32>
    %205 = arith.addf %204, %203 : vector<8x48xf32>
    %206 = arith.divf %204, %205 : vector<8x48xf32>
    %207 = vector.extract_strided_slice %200 {offsets = [0, 48], sizes = [8, 48], strides = [1, 1]} : vector<8x192xf32> to vector<8x48xf32>
    %208 = arith.negf %207 : vector<8x48xf32>
    %209 = math.exp %208 : vector<8x48xf32>
    %cst_103 = arith.constant 1.000000e+00 : f32
    %210 = vector.broadcast %cst_103 : f32 to vector<8x48xf32>
    %211 = arith.addf %210, %209 : vector<8x48xf32>
    %212 = arith.divf %210, %211 : vector<8x48xf32>
    %213 = vector.extract_strided_slice %200 {offsets = [0, 96], sizes = [8, 48], strides = [1, 1]} : vector<8x192xf32> to vector<8x48xf32>
    %214 = math.tanh %213 : vector<8x48xf32>
    %215 = vector.extract_strided_slice %200 {offsets = [0, 144], sizes = [8, 48], strides = [1, 1]} : vector<8x192xf32> to vector<8x48xf32>
    %216 = arith.negf %215 : vector<8x48xf32>
    %217 = math.exp %216 : vector<8x48xf32>
    %cst_104 = arith.constant 1.000000e+00 : f32
    %218 = vector.broadcast %cst_104 : f32 to vector<8x48xf32>
    %219 = arith.addf %218, %217 : vector<8x48xf32>
    %220 = arith.divf %218, %219 : vector<8x48xf32>
    %221 = arith.mulf %212, %131 : vector<8x48xf32>
    %222 = arith.mulf %206, %214 : vector<8x48xf32>
    %223 = arith.addf %221, %222 : vector<8x48xf32>
    %224 = math.tanh %223 : vector<8x48xf32>
    %225 = arith.mulf %220, %224 : vector<8x48xf32>
    %226 = tpu.concatenate %131, %223 in 1 : vector<8x48xf32>, vector<8x48xf32> -> vector<8x96xf32>
    %c0_105 = arith.constant 0 : index
    %c0_106 = arith.constant 0 : index
    %227 = vector.load %arg5[%c0_105, %c0_106] : memref<96x32xf32, #tpu.memory_space<vmem>>, vector<96x32xf32>
    %cst_107 = arith.constant dense<0.000000e+00> : vector<8x32xf32>
    %228 = tpu.matmul %226, %227, %cst_107 {dimension_numbers = #tpu.dot_dimension_numbers<[1], [0], [0], [1], [0, 0, 1, 1], [], []>} : vector<8x96xf32>, vector<96x32xf32>, vector<8x32xf32> -> vector<8x32xf32>
    %c0_108 = arith.constant 0 : index
    %c0_109 = arith.constant 0 : index
    %229 = vector.load %arg6[%c0_108, %c0_109] : memref<1x32xf32, #tpu.memory_space<vmem>>, vector<1x32xf32>
    %230 = vector.broadcast %229 : vector<1x32xf32> to vector<8x32xf32>
    %231 = arith.addf %228, %230 : vector<8x32xf32>
    %cst_110 = arith.constant 0.000000e+00 : f32
    %232 = vector.broadcast %cst_110 : f32 to vector<8x32xf32>
    %233 = arith.maximumf %231, %232 : vector<8x32xf32>
    %c0_111 = arith.constant 0 : index
    %c0_112 = arith.constant 0 : index
    %234 = vector.load %arg7[%c0_111, %c0_112] : memref<32x96xf32, #tpu.memory_space<vmem>>, vector<32x96xf32>
    %cst_113 = arith.constant dense<0.000000e+00> : vector<8x96xf32>
    %235 = tpu.matmul %233, %234, %cst_113 {dimension_numbers = #tpu.dot_dimension_numbers<[1], [0], [0], [1], [0, 0, 1, 1], [], []>} : vector<8x32xf32>, vector<32x96xf32>, vector<8x96xf32> -> vector<8x96xf32>
    %c0_114 = arith.constant 0 : index
    %c0_115 = arith.constant 0 : index
    %236 = vector.load %arg8[%c0_114, %c0_115] : memref<1x96xf32, #tpu.memory_space<vmem>>, vector<1x96xf32>
    %237 = vector.broadcast %236 : vector<1x96xf32> to vector<8x96xf32>
    %238 = arith.addf %235, %237 : vector<8x96xf32>
    %cst_116 = arith.constant dense<0xFF800000> : vector<8xf32>
    %239 = vector.multi_reduction <maximumf>, %238, %cst_116 [1] : vector<8x96xf32> to vector<8xf32>
    %240 = vector.shape_cast %239 : vector<8xf32> to vector<8x1xf32>
    %241 = vector.broadcast %240 : vector<8x1xf32> to vector<8x96xf32>
    %242 = arith.subf %238, %241 : vector<8x96xf32>
    %243 = math.exp %242 : vector<8x96xf32>
    %cst_117 = arith.constant dense<0.000000e+00> : vector<8xf32>
    %244 = vector.multi_reduction <add>, %243, %cst_117 [1] : vector<8x96xf32> to vector<8xf32>
    %245 = vector.shape_cast %244 : vector<8xf32> to vector<8x1xf32>
    %246 = tpu.reciprocal %245 {approx = true} : vector<8x1xf32> -> vector<8x1xf32>
    %247 = vector.broadcast %246 : vector<8x1xf32> to vector<8x96xf32>
    %248 = arith.mulf %243, %247 : vector<8x96xf32>
    %249 = arith.mulf %248, %226 : vector<8x96xf32>
    %c0_118 = arith.constant 0 : index
    %c0_119 = arith.constant 0 : index
    %250 = vector.load %arg9[%c0_118, %c0_119] : memref<96x32xf32, #tpu.memory_space<vmem>>, vector<96x32xf32>
    %cst_120 = arith.constant dense<0.000000e+00> : vector<8x32xf32>
    %251 = tpu.matmul %249, %250, %cst_120 {dimension_numbers = #tpu.dot_dimension_numbers<[1], [0], [0], [1], [0, 0, 1, 1], [], []>} : vector<8x96xf32>, vector<96x32xf32>, vector<8x32xf32> -> vector<8x32xf32>
    %c0_121 = arith.constant 0 : index
    %c0_122 = arith.constant 0 : index
    %252 = vector.load %arg10[%c0_121, %c0_122] : memref<1x32xf32, #tpu.memory_space<vmem>>, vector<1x32xf32>
    %253 = vector.broadcast %252 : vector<1x32xf32> to vector<8x32xf32>
    %254 = arith.addf %251, %253 : vector<8x32xf32>
    %cst_123 = arith.constant 0.000000e+00 : f32
    %255 = vector.broadcast %cst_123 : f32 to vector<8x32xf32>
    %256 = arith.maximumf %254, %255 : vector<8x32xf32>
    %c0_124 = arith.constant 0 : index
    %c0_125 = arith.constant 0 : index
    %257 = vector.load %arg11[%c0_124, %c0_125] : memref<32x32xf32, #tpu.memory_space<vmem>>, vector<32x32xf32>
    %cst_126 = arith.constant dense<0.000000e+00> : vector<8x32xf32>
    %258 = tpu.matmul %256, %257, %cst_126 {dimension_numbers = #tpu.dot_dimension_numbers<[1], [0], [0], [1], [0, 0, 1, 1], [], []>} : vector<8x32xf32>, vector<32x32xf32>, vector<8x32xf32> -> vector<8x32xf32>
    %c0_127 = arith.constant 0 : index
    %c0_128 = arith.constant 0 : index
    %259 = vector.load %arg12[%c0_127, %c0_128] : memref<1x32xf32, #tpu.memory_space<vmem>>, vector<1x32xf32>
    %260 = vector.broadcast %259 : vector<1x32xf32> to vector<8x32xf32>
    %261 = arith.addf %258, %260 : vector<8x32xf32>
    %262 = math.tanh %261 : vector<8x32xf32>
    %263 = tpu.concatenate %249, %193 in 1 : vector<8x96xf32>, vector<8x32xf32> -> vector<8x128xf32>
    %c0_129 = arith.constant 0 : index
    %c0_130 = arith.constant 0 : index
    %264 = vector.load %arg13[%c0_129, %c0_130] : memref<128x64xf32, #tpu.memory_space<vmem>>, vector<128x64xf32>
    %cst_131 = arith.constant dense<0.000000e+00> : vector<8x64xf32>
    %265 = tpu.matmul %263, %264, %cst_131 {dimension_numbers = #tpu.dot_dimension_numbers<[1], [0], [0], [1], [0, 0, 1, 1], [], []>} : vector<8x128xf32>, vector<128x64xf32>, vector<8x64xf32> -> vector<8x64xf32>
    %c0_132 = arith.constant 0 : index
    %c0_133 = arith.constant 0 : index
    %266 = vector.load %arg14[%c0_132, %c0_133] : memref<1x64xf32, #tpu.memory_space<vmem>>, vector<1x64xf32>
    %267 = vector.broadcast %266 : vector<1x64xf32> to vector<8x64xf32>
    %268 = arith.addf %265, %267 : vector<8x64xf32>
    %cst_134 = arith.constant 0.000000e+00 : f32
    %269 = vector.broadcast %cst_134 : f32 to vector<8x64xf32>
    %270 = arith.maximumf %268, %269 : vector<8x64xf32>
    %c0_135 = arith.constant 0 : index
    %c0_136 = arith.constant 0 : index
    %271 = vector.load %arg15[%c0_135, %c0_136] : memref<64x64xf32, #tpu.memory_space<vmem>>, vector<64x64xf32>
    %cst_137 = arith.constant dense<0.000000e+00> : vector<8x64xf32>
    %272 = tpu.matmul %270, %271, %cst_137 {dimension_numbers = #tpu.dot_dimension_numbers<[1], [0], [0], [1], [0, 0, 1, 1], [], []>} : vector<8x64xf32>, vector<64x64xf32>, vector<8x64xf32> -> vector<8x64xf32>
    %c0_138 = arith.constant 0 : index
    %c0_139 = arith.constant 0 : index
    %273 = vector.load %arg16[%c0_138, %c0_139] : memref<1x64xf32, #tpu.memory_space<vmem>>, vector<1x64xf32>
    %274 = vector.broadcast %273 : vector<1x64xf32> to vector<8x64xf32>
    %275 = arith.addf %272, %274 : vector<8x64xf32>
    %276 = arith.negf %275 : vector<8x64xf32>
    %277 = math.exp %276 : vector<8x64xf32>
    %cst_140 = arith.constant 1.000000e+00 : f32
    %278 = vector.broadcast %cst_140 : f32 to vector<8x64xf32>
    %279 = arith.addf %278, %277 : vector<8x64xf32>
    %280 = arith.divf %278, %279 : vector<8x64xf32>
    %281 = vector.extract_strided_slice %280 {offsets = [0, 0], sizes = [8, 32], strides = [1, 1]} : vector<8x64xf32> to vector<8x32xf32>
    %282 = vector.extract_strided_slice %280 {offsets = [0, 32], sizes = [8, 32], strides = [1, 1]} : vector<8x64xf32> to vector<8x32xf32>
    %283 = arith.mulf %281, %193 : vector<8x32xf32>
    %284 = arith.mulf %282, %262 : vector<8x32xf32>
    %285 = arith.addf %283, %284 : vector<8x32xf32>
    %c3_i32 = arith.constant 3 : i32
    %c8_i32_141 = arith.constant 8 : i32
    %286 = arith.muli %c3_i32, %c8_i32_141 : i32
    %287 = tpu.assume_multiple %286, 8 : i32
    %288 = arith.index_cast %287 : i32 to index
    %c0_142 = arith.constant 0 : index
    %289 = vector.load %arg22[%288, %c0_142] : memref<64x192xf32, #tpu.memory_space<vmem>>, vector<8x192xf32>
    %c0_143 = arith.constant 0 : index
    %c0_144 = arith.constant 0 : index
    %290 = vector.load %arg3[%c0_143, %c0_144] : memref<48x192xf32, #tpu.memory_space<vmem>>, vector<48x192xf32>
    %cst_145 = arith.constant dense<0.000000e+00> : vector<8x192xf32>
    %291 = tpu.matmul %225, %290, %cst_145 {dimension_numbers = #tpu.dot_dimension_numbers<[1], [0], [0], [1], [0, 0, 1, 1], [], []>} : vector<8x48xf32>, vector<48x192xf32>, vector<8x192xf32> -> vector<8x192xf32>
    %292 = arith.addf %289, %291 : vector<8x192xf32>
    %293 = vector.extract_strided_slice %292 {offsets = [0, 0], sizes = [8, 48], strides = [1, 1]} : vector<8x192xf32> to vector<8x48xf32>
    %294 = arith.negf %293 : vector<8x48xf32>
    %295 = math.exp %294 : vector<8x48xf32>
    %cst_146 = arith.constant 1.000000e+00 : f32
    %296 = vector.broadcast %cst_146 : f32 to vector<8x48xf32>
    %297 = arith.addf %296, %295 : vector<8x48xf32>
    %298 = arith.divf %296, %297 : vector<8x48xf32>
    %299 = vector.extract_strided_slice %292 {offsets = [0, 48], sizes = [8, 48], strides = [1, 1]} : vector<8x192xf32> to vector<8x48xf32>
    %300 = arith.negf %299 : vector<8x48xf32>
    %301 = math.exp %300 : vector<8x48xf32>
    %cst_147 = arith.constant 1.000000e+00 : f32
    %302 = vector.broadcast %cst_147 : f32 to vector<8x48xf32>
    %303 = arith.addf %302, %301 : vector<8x48xf32>
    %304 = arith.divf %302, %303 : vector<8x48xf32>
    %305 = vector.extract_strided_slice %292 {offsets = [0, 96], sizes = [8, 48], strides = [1, 1]} : vector<8x192xf32> to vector<8x48xf32>
    %306 = math.tanh %305 : vector<8x48xf32>
    %307 = vector.extract_strided_slice %292 {offsets = [0, 144], sizes = [8, 48], strides = [1, 1]} : vector<8x192xf32> to vector<8x48xf32>
    %308 = arith.negf %307 : vector<8x48xf32>
    %309 = math.exp %308 : vector<8x48xf32>
    %cst_148 = arith.constant 1.000000e+00 : f32
    %310 = vector.broadcast %cst_148 : f32 to vector<8x48xf32>
    %311 = arith.addf %310, %309 : vector<8x48xf32>
    %312 = arith.divf %310, %311 : vector<8x48xf32>
    %313 = arith.mulf %304, %223 : vector<8x48xf32>
    %314 = arith.mulf %298, %306 : vector<8x48xf32>
    %315 = arith.addf %313, %314 : vector<8x48xf32>
    %316 = math.tanh %315 : vector<8x48xf32>
    %317 = arith.mulf %312, %316 : vector<8x48xf32>
    %318 = tpu.concatenate %223, %315 in 1 : vector<8x48xf32>, vector<8x48xf32> -> vector<8x96xf32>
    %c0_149 = arith.constant 0 : index
    %c0_150 = arith.constant 0 : index
    %319 = vector.load %arg5[%c0_149, %c0_150] : memref<96x32xf32, #tpu.memory_space<vmem>>, vector<96x32xf32>
    %cst_151 = arith.constant dense<0.000000e+00> : vector<8x32xf32>
    %320 = tpu.matmul %318, %319, %cst_151 {dimension_numbers = #tpu.dot_dimension_numbers<[1], [0], [0], [1], [0, 0, 1, 1], [], []>} : vector<8x96xf32>, vector<96x32xf32>, vector<8x32xf32> -> vector<8x32xf32>
    %c0_152 = arith.constant 0 : index
    %c0_153 = arith.constant 0 : index
    %321 = vector.load %arg6[%c0_152, %c0_153] : memref<1x32xf32, #tpu.memory_space<vmem>>, vector<1x32xf32>
    %322 = vector.broadcast %321 : vector<1x32xf32> to vector<8x32xf32>
    %323 = arith.addf %320, %322 : vector<8x32xf32>
    %cst_154 = arith.constant 0.000000e+00 : f32
    %324 = vector.broadcast %cst_154 : f32 to vector<8x32xf32>
    %325 = arith.maximumf %323, %324 : vector<8x32xf32>
    %c0_155 = arith.constant 0 : index
    %c0_156 = arith.constant 0 : index
    %326 = vector.load %arg7[%c0_155, %c0_156] : memref<32x96xf32, #tpu.memory_space<vmem>>, vector<32x96xf32>
    %cst_157 = arith.constant dense<0.000000e+00> : vector<8x96xf32>
    %327 = tpu.matmul %325, %326, %cst_157 {dimension_numbers = #tpu.dot_dimension_numbers<[1], [0], [0], [1], [0, 0, 1, 1], [], []>} : vector<8x32xf32>, vector<32x96xf32>, vector<8x96xf32> -> vector<8x96xf32>
    %c0_158 = arith.constant 0 : index
    %c0_159 = arith.constant 0 : index
    %328 = vector.load %arg8[%c0_158, %c0_159] : memref<1x96xf32, #tpu.memory_space<vmem>>, vector<1x96xf32>
    %329 = vector.broadcast %328 : vector<1x96xf32> to vector<8x96xf32>
    %330 = arith.addf %327, %329 : vector<8x96xf32>
    %cst_160 = arith.constant dense<0xFF800000> : vector<8xf32>
    %331 = vector.multi_reduction <maximumf>, %330, %cst_160 [1] : vector<8x96xf32> to vector<8xf32>
    %332 = vector.shape_cast %331 : vector<8xf32> to vector<8x1xf32>
    %333 = vector.broadcast %332 : vector<8x1xf32> to vector<8x96xf32>
    %334 = arith.subf %330, %333 : vector<8x96xf32>
    %335 = math.exp %334 : vector<8x96xf32>
    %cst_161 = arith.constant dense<0.000000e+00> : vector<8xf32>
    %336 = vector.multi_reduction <add>, %335, %cst_161 [1] : vector<8x96xf32> to vector<8xf32>
    %337 = vector.shape_cast %336 : vector<8xf32> to vector<8x1xf32>
    %338 = tpu.reciprocal %337 {approx = true} : vector<8x1xf32> -> vector<8x1xf32>
    %339 = vector.broadcast %338 : vector<8x1xf32> to vector<8x96xf32>
    %340 = arith.mulf %335, %339 : vector<8x96xf32>
    %341 = arith.mulf %340, %318 : vector<8x96xf32>
    %c0_162 = arith.constant 0 : index
    %c0_163 = arith.constant 0 : index
    %342 = vector.load %arg9[%c0_162, %c0_163] : memref<96x32xf32, #tpu.memory_space<vmem>>, vector<96x32xf32>
    %cst_164 = arith.constant dense<0.000000e+00> : vector<8x32xf32>
    %343 = tpu.matmul %341, %342, %cst_164 {dimension_numbers = #tpu.dot_dimension_numbers<[1], [0], [0], [1], [0, 0, 1, 1], [], []>} : vector<8x96xf32>, vector<96x32xf32>, vector<8x32xf32> -> vector<8x32xf32>
    %c0_165 = arith.constant 0 : index
    %c0_166 = arith.constant 0 : index
    %344 = vector.load %arg10[%c0_165, %c0_166] : memref<1x32xf32, #tpu.memory_space<vmem>>, vector<1x32xf32>
    %345 = vector.broadcast %344 : vector<1x32xf32> to vector<8x32xf32>
    %346 = arith.addf %343, %345 : vector<8x32xf32>
    %cst_167 = arith.constant 0.000000e+00 : f32
    %347 = vector.broadcast %cst_167 : f32 to vector<8x32xf32>
    %348 = arith.maximumf %346, %347 : vector<8x32xf32>
    %c0_168 = arith.constant 0 : index
    %c0_169 = arith.constant 0 : index
    %349 = vector.load %arg11[%c0_168, %c0_169] : memref<32x32xf32, #tpu.memory_space<vmem>>, vector<32x32xf32>
    %cst_170 = arith.constant dense<0.000000e+00> : vector<8x32xf32>
    %350 = tpu.matmul %348, %349, %cst_170 {dimension_numbers = #tpu.dot_dimension_numbers<[1], [0], [0], [1], [0, 0, 1, 1], [], []>} : vector<8x32xf32>, vector<32x32xf32>, vector<8x32xf32> -> vector<8x32xf32>
    %c0_171 = arith.constant 0 : index
    %c0_172 = arith.constant 0 : index
    %351 = vector.load %arg12[%c0_171, %c0_172] : memref<1x32xf32, #tpu.memory_space<vmem>>, vector<1x32xf32>
    %352 = vector.broadcast %351 : vector<1x32xf32> to vector<8x32xf32>
    %353 = arith.addf %350, %352 : vector<8x32xf32>
    %354 = math.tanh %353 : vector<8x32xf32>
    %355 = tpu.concatenate %341, %285 in 1 : vector<8x96xf32>, vector<8x32xf32> -> vector<8x128xf32>
    %c0_173 = arith.constant 0 : index
    %c0_174 = arith.constant 0 : index
    %356 = vector.load %arg13[%c0_173, %c0_174] : memref<128x64xf32, #tpu.memory_space<vmem>>, vector<128x64xf32>
    %cst_175 = arith.constant dense<0.000000e+00> : vector<8x64xf32>
    %357 = tpu.matmul %355, %356, %cst_175 {dimension_numbers = #tpu.dot_dimension_numbers<[1], [0], [0], [1], [0, 0, 1, 1], [], []>} : vector<8x128xf32>, vector<128x64xf32>, vector<8x64xf32> -> vector<8x64xf32>
    %c0_176 = arith.constant 0 : index
    %c0_177 = arith.constant 0 : index
    %358 = vector.load %arg14[%c0_176, %c0_177] : memref<1x64xf32, #tpu.memory_space<vmem>>, vector<1x64xf32>
    %359 = vector.broadcast %358 : vector<1x64xf32> to vector<8x64xf32>
    %360 = arith.addf %357, %359 : vector<8x64xf32>
    %cst_178 = arith.constant 0.000000e+00 : f32
    %361 = vector.broadcast %cst_178 : f32 to vector<8x64xf32>
    %362 = arith.maximumf %360, %361 : vector<8x64xf32>
    %c0_179 = arith.constant 0 : index
    %c0_180 = arith.constant 0 : index
    %363 = vector.load %arg15[%c0_179, %c0_180] : memref<64x64xf32, #tpu.memory_space<vmem>>, vector<64x64xf32>
    %cst_181 = arith.constant dense<0.000000e+00> : vector<8x64xf32>
    %364 = tpu.matmul %362, %363, %cst_181 {dimension_numbers = #tpu.dot_dimension_numbers<[1], [0], [0], [1], [0, 0, 1, 1], [], []>} : vector<8x64xf32>, vector<64x64xf32>, vector<8x64xf32> -> vector<8x64xf32>
    %c0_182 = arith.constant 0 : index
    %c0_183 = arith.constant 0 : index
    %365 = vector.load %arg16[%c0_182, %c0_183] : memref<1x64xf32, #tpu.memory_space<vmem>>, vector<1x64xf32>
    %366 = vector.broadcast %365 : vector<1x64xf32> to vector<8x64xf32>
    %367 = arith.addf %364, %366 : vector<8x64xf32>
    %368 = arith.negf %367 : vector<8x64xf32>
    %369 = math.exp %368 : vector<8x64xf32>
    %cst_184 = arith.constant 1.000000e+00 : f32
    %370 = vector.broadcast %cst_184 : f32 to vector<8x64xf32>
    %371 = arith.addf %370, %369 : vector<8x64xf32>
    %372 = arith.divf %370, %371 : vector<8x64xf32>
    %373 = vector.extract_strided_slice %372 {offsets = [0, 0], sizes = [8, 32], strides = [1, 1]} : vector<8x64xf32> to vector<8x32xf32>
    %374 = vector.extract_strided_slice %372 {offsets = [0, 32], sizes = [8, 32], strides = [1, 1]} : vector<8x64xf32> to vector<8x32xf32>
    %375 = arith.mulf %373, %285 : vector<8x32xf32>
    %376 = arith.mulf %374, %354 : vector<8x32xf32>
    %377 = arith.addf %375, %376 : vector<8x32xf32>
    %c4_i32 = arith.constant 4 : i32
    %c8_i32_185 = arith.constant 8 : i32
    %378 = arith.muli %c4_i32, %c8_i32_185 : i32
    %379 = tpu.assume_multiple %378, 8 : i32
    %380 = arith.index_cast %379 : i32 to index
    %c0_186 = arith.constant 0 : index
    %381 = vector.load %arg22[%380, %c0_186] : memref<64x192xf32, #tpu.memory_space<vmem>>, vector<8x192xf32>
    %c0_187 = arith.constant 0 : index
    %c0_188 = arith.constant 0 : index
    %382 = vector.load %arg3[%c0_187, %c0_188] : memref<48x192xf32, #tpu.memory_space<vmem>>, vector<48x192xf32>
    %cst_189 = arith.constant dense<0.000000e+00> : vector<8x192xf32>
    %383 = tpu.matmul %317, %382, %cst_189 {dimension_numbers = #tpu.dot_dimension_numbers<[1], [0], [0], [1], [0, 0, 1, 1], [], []>} : vector<8x48xf32>, vector<48x192xf32>, vector<8x192xf32> -> vector<8x192xf32>
    %384 = arith.addf %381, %383 : vector<8x192xf32>
    %385 = vector.extract_strided_slice %384 {offsets = [0, 0], sizes = [8, 48], strides = [1, 1]} : vector<8x192xf32> to vector<8x48xf32>
    %386 = arith.negf %385 : vector<8x48xf32>
    %387 = math.exp %386 : vector<8x48xf32>
    %cst_190 = arith.constant 1.000000e+00 : f32
    %388 = vector.broadcast %cst_190 : f32 to vector<8x48xf32>
    %389 = arith.addf %388, %387 : vector<8x48xf32>
    %390 = arith.divf %388, %389 : vector<8x48xf32>
    %391 = vector.extract_strided_slice %384 {offsets = [0, 48], sizes = [8, 48], strides = [1, 1]} : vector<8x192xf32> to vector<8x48xf32>
    %392 = arith.negf %391 : vector<8x48xf32>
    %393 = math.exp %392 : vector<8x48xf32>
    %cst_191 = arith.constant 1.000000e+00 : f32
    %394 = vector.broadcast %cst_191 : f32 to vector<8x48xf32>
    %395 = arith.addf %394, %393 : vector<8x48xf32>
    %396 = arith.divf %394, %395 : vector<8x48xf32>
    %397 = vector.extract_strided_slice %384 {offsets = [0, 96], sizes = [8, 48], strides = [1, 1]} : vector<8x192xf32> to vector<8x48xf32>
    %398 = math.tanh %397 : vector<8x48xf32>
    %399 = vector.extract_strided_slice %384 {offsets = [0, 144], sizes = [8, 48], strides = [1, 1]} : vector<8x192xf32> to vector<8x48xf32>
    %400 = arith.negf %399 : vector<8x48xf32>
    %401 = math.exp %400 : vector<8x48xf32>
    %cst_192 = arith.constant 1.000000e+00 : f32
    %402 = vector.broadcast %cst_192 : f32 to vector<8x48xf32>
    %403 = arith.addf %402, %401 : vector<8x48xf32>
    %404 = arith.divf %402, %403 : vector<8x48xf32>
    %405 = arith.mulf %396, %315 : vector<8x48xf32>
    %406 = arith.mulf %390, %398 : vector<8x48xf32>
    %407 = arith.addf %405, %406 : vector<8x48xf32>
    %408 = math.tanh %407 : vector<8x48xf32>
    %409 = arith.mulf %404, %408 : vector<8x48xf32>
    %410 = tpu.concatenate %315, %407 in 1 : vector<8x48xf32>, vector<8x48xf32> -> vector<8x96xf32>
    %c0_193 = arith.constant 0 : index
    %c0_194 = arith.constant 0 : index
    %411 = vector.load %arg5[%c0_193, %c0_194] : memref<96x32xf32, #tpu.memory_space<vmem>>, vector<96x32xf32>
    %cst_195 = arith.constant dense<0.000000e+00> : vector<8x32xf32>
    %412 = tpu.matmul %410, %411, %cst_195 {dimension_numbers = #tpu.dot_dimension_numbers<[1], [0], [0], [1], [0, 0, 1, 1], [], []>} : vector<8x96xf32>, vector<96x32xf32>, vector<8x32xf32> -> vector<8x32xf32>
    %c0_196 = arith.constant 0 : index
    %c0_197 = arith.constant 0 : index
    %413 = vector.load %arg6[%c0_196, %c0_197] : memref<1x32xf32, #tpu.memory_space<vmem>>, vector<1x32xf32>
    %414 = vector.broadcast %413 : vector<1x32xf32> to vector<8x32xf32>
    %415 = arith.addf %412, %414 : vector<8x32xf32>
    %cst_198 = arith.constant 0.000000e+00 : f32
    %416 = vector.broadcast %cst_198 : f32 to vector<8x32xf32>
    %417 = arith.maximumf %415, %416 : vector<8x32xf32>
    %c0_199 = arith.constant 0 : index
    %c0_200 = arith.constant 0 : index
    %418 = vector.load %arg7[%c0_199, %c0_200] : memref<32x96xf32, #tpu.memory_space<vmem>>, vector<32x96xf32>
    %cst_201 = arith.constant dense<0.000000e+00> : vector<8x96xf32>
    %419 = tpu.matmul %417, %418, %cst_201 {dimension_numbers = #tpu.dot_dimension_numbers<[1], [0], [0], [1], [0, 0, 1, 1], [], []>} : vector<8x32xf32>, vector<32x96xf32>, vector<8x96xf32> -> vector<8x96xf32>
    %c0_202 = arith.constant 0 : index
    %c0_203 = arith.constant 0 : index
    %420 = vector.load %arg8[%c0_202, %c0_203] : memref<1x96xf32, #tpu.memory_space<vmem>>, vector<1x96xf32>
    %421 = vector.broadcast %420 : vector<1x96xf32> to vector<8x96xf32>
    %422 = arith.addf %419, %421 : vector<8x96xf32>
    %cst_204 = arith.constant dense<0xFF800000> : vector<8xf32>
    %423 = vector.multi_reduction <maximumf>, %422, %cst_204 [1] : vector<8x96xf32> to vector<8xf32>
    %424 = vector.shape_cast %423 : vector<8xf32> to vector<8x1xf32>
    %425 = vector.broadcast %424 : vector<8x1xf32> to vector<8x96xf32>
    %426 = arith.subf %422, %425 : vector<8x96xf32>
    %427 = math.exp %426 : vector<8x96xf32>
    %cst_205 = arith.constant dense<0.000000e+00> : vector<8xf32>
    %428 = vector.multi_reduction <add>, %427, %cst_205 [1] : vector<8x96xf32> to vector<8xf32>
    %429 = vector.shape_cast %428 : vector<8xf32> to vector<8x1xf32>
    %430 = tpu.reciprocal %429 {approx = true} : vector<8x1xf32> -> vector<8x1xf32>
    %431 = vector.broadcast %430 : vector<8x1xf32> to vector<8x96xf32>
    %432 = arith.mulf %427, %431 : vector<8x96xf32>
    %433 = arith.mulf %432, %410 : vector<8x96xf32>
    %c0_206 = arith.constant 0 : index
    %c0_207 = arith.constant 0 : index
    %434 = vector.load %arg9[%c0_206, %c0_207] : memref<96x32xf32, #tpu.memory_space<vmem>>, vector<96x32xf32>
    %cst_208 = arith.constant dense<0.000000e+00> : vector<8x32xf32>
    %435 = tpu.matmul %433, %434, %cst_208 {dimension_numbers = #tpu.dot_dimension_numbers<[1], [0], [0], [1], [0, 0, 1, 1], [], []>} : vector<8x96xf32>, vector<96x32xf32>, vector<8x32xf32> -> vector<8x32xf32>
    %c0_209 = arith.constant 0 : index
    %c0_210 = arith.constant 0 : index
    %436 = vector.load %arg10[%c0_209, %c0_210] : memref<1x32xf32, #tpu.memory_space<vmem>>, vector<1x32xf32>
    %437 = vector.broadcast %436 : vector<1x32xf32> to vector<8x32xf32>
    %438 = arith.addf %435, %437 : vector<8x32xf32>
    %cst_211 = arith.constant 0.000000e+00 : f32
    %439 = vector.broadcast %cst_211 : f32 to vector<8x32xf32>
    %440 = arith.maximumf %438, %439 : vector<8x32xf32>
    %c0_212 = arith.constant 0 : index
    %c0_213 = arith.constant 0 : index
    %441 = vector.load %arg11[%c0_212, %c0_213] : memref<32x32xf32, #tpu.memory_space<vmem>>, vector<32x32xf32>
    %cst_214 = arith.constant dense<0.000000e+00> : vector<8x32xf32>
    %442 = tpu.matmul %440, %441, %cst_214 {dimension_numbers = #tpu.dot_dimension_numbers<[1], [0], [0], [1], [0, 0, 1, 1], [], []>} : vector<8x32xf32>, vector<32x32xf32>, vector<8x32xf32> -> vector<8x32xf32>
    %c0_215 = arith.constant 0 : index
    %c0_216 = arith.constant 0 : index
    %443 = vector.load %arg12[%c0_215, %c0_216] : memref<1x32xf32, #tpu.memory_space<vmem>>, vector<1x32xf32>
    %444 = vector.broadcast %443 : vector<1x32xf32> to vector<8x32xf32>
    %445 = arith.addf %442, %444 : vector<8x32xf32>
    %446 = math.tanh %445 : vector<8x32xf32>
    %447 = tpu.concatenate %433, %377 in 1 : vector<8x96xf32>, vector<8x32xf32> -> vector<8x128xf32>
    %c0_217 = arith.constant 0 : index
    %c0_218 = arith.constant 0 : index
    %448 = vector.load %arg13[%c0_217, %c0_218] : memref<128x64xf32, #tpu.memory_space<vmem>>, vector<128x64xf32>
    %cst_219 = arith.constant dense<0.000000e+00> : vector<8x64xf32>
    %449 = tpu.matmul %447, %448, %cst_219 {dimension_numbers = #tpu.dot_dimension_numbers<[1], [0], [0], [1], [0, 0, 1, 1], [], []>} : vector<8x128xf32>, vector<128x64xf32>, vector<8x64xf32> -> vector<8x64xf32>
    %c0_220 = arith.constant 0 : index
    %c0_221 = arith.constant 0 : index
    %450 = vector.load %arg14[%c0_220, %c0_221] : memref<1x64xf32, #tpu.memory_space<vmem>>, vector<1x64xf32>
    %451 = vector.broadcast %450 : vector<1x64xf32> to vector<8x64xf32>
    %452 = arith.addf %449, %451 : vector<8x64xf32>
    %cst_222 = arith.constant 0.000000e+00 : f32
    %453 = vector.broadcast %cst_222 : f32 to vector<8x64xf32>
    %454 = arith.maximumf %452, %453 : vector<8x64xf32>
    %c0_223 = arith.constant 0 : index
    %c0_224 = arith.constant 0 : index
    %455 = vector.load %arg15[%c0_223, %c0_224] : memref<64x64xf32, #tpu.memory_space<vmem>>, vector<64x64xf32>
    %cst_225 = arith.constant dense<0.000000e+00> : vector<8x64xf32>
    %456 = tpu.matmul %454, %455, %cst_225 {dimension_numbers = #tpu.dot_dimension_numbers<[1], [0], [0], [1], [0, 0, 1, 1], [], []>} : vector<8x64xf32>, vector<64x64xf32>, vector<8x64xf32> -> vector<8x64xf32>
    %c0_226 = arith.constant 0 : index
    %c0_227 = arith.constant 0 : index
    %457 = vector.load %arg16[%c0_226, %c0_227] : memref<1x64xf32, #tpu.memory_space<vmem>>, vector<1x64xf32>
    %458 = vector.broadcast %457 : vector<1x64xf32> to vector<8x64xf32>
    %459 = arith.addf %456, %458 : vector<8x64xf32>
    %460 = arith.negf %459 : vector<8x64xf32>
    %461 = math.exp %460 : vector<8x64xf32>
    %cst_228 = arith.constant 1.000000e+00 : f32
    %462 = vector.broadcast %cst_228 : f32 to vector<8x64xf32>
    %463 = arith.addf %462, %461 : vector<8x64xf32>
    %464 = arith.divf %462, %463 : vector<8x64xf32>
    %465 = vector.extract_strided_slice %464 {offsets = [0, 0], sizes = [8, 32], strides = [1, 1]} : vector<8x64xf32> to vector<8x32xf32>
    %466 = vector.extract_strided_slice %464 {offsets = [0, 32], sizes = [8, 32], strides = [1, 1]} : vector<8x64xf32> to vector<8x32xf32>
    %467 = arith.mulf %465, %377 : vector<8x32xf32>
    %468 = arith.mulf %466, %446 : vector<8x32xf32>
    %469 = arith.addf %467, %468 : vector<8x32xf32>
    %c5_i32 = arith.constant 5 : i32
    %c8_i32_229 = arith.constant 8 : i32
    %470 = arith.muli %c5_i32, %c8_i32_229 : i32
    %471 = tpu.assume_multiple %470, 8 : i32
    %472 = arith.index_cast %471 : i32 to index
    %c0_230 = arith.constant 0 : index
    %473 = vector.load %arg22[%472, %c0_230] : memref<64x192xf32, #tpu.memory_space<vmem>>, vector<8x192xf32>
    %c0_231 = arith.constant 0 : index
    %c0_232 = arith.constant 0 : index
    %474 = vector.load %arg3[%c0_231, %c0_232] : memref<48x192xf32, #tpu.memory_space<vmem>>, vector<48x192xf32>
    %cst_233 = arith.constant dense<0.000000e+00> : vector<8x192xf32>
    %475 = tpu.matmul %409, %474, %cst_233 {dimension_numbers = #tpu.dot_dimension_numbers<[1], [0], [0], [1], [0, 0, 1, 1], [], []>} : vector<8x48xf32>, vector<48x192xf32>, vector<8x192xf32> -> vector<8x192xf32>
    %476 = arith.addf %473, %475 : vector<8x192xf32>
    %477 = vector.extract_strided_slice %476 {offsets = [0, 0], sizes = [8, 48], strides = [1, 1]} : vector<8x192xf32> to vector<8x48xf32>
    %478 = arith.negf %477 : vector<8x48xf32>
    %479 = math.exp %478 : vector<8x48xf32>
    %cst_234 = arith.constant 1.000000e+00 : f32
    %480 = vector.broadcast %cst_234 : f32 to vector<8x48xf32>
    %481 = arith.addf %480, %479 : vector<8x48xf32>
    %482 = arith.divf %480, %481 : vector<8x48xf32>
    %483 = vector.extract_strided_slice %476 {offsets = [0, 48], sizes = [8, 48], strides = [1, 1]} : vector<8x192xf32> to vector<8x48xf32>
    %484 = arith.negf %483 : vector<8x48xf32>
    %485 = math.exp %484 : vector<8x48xf32>
    %cst_235 = arith.constant 1.000000e+00 : f32
    %486 = vector.broadcast %cst_235 : f32 to vector<8x48xf32>
    %487 = arith.addf %486, %485 : vector<8x48xf32>
    %488 = arith.divf %486, %487 : vector<8x48xf32>
    %489 = vector.extract_strided_slice %476 {offsets = [0, 96], sizes = [8, 48], strides = [1, 1]} : vector<8x192xf32> to vector<8x48xf32>
    %490 = math.tanh %489 : vector<8x48xf32>
    %491 = vector.extract_strided_slice %476 {offsets = [0, 144], sizes = [8, 48], strides = [1, 1]} : vector<8x192xf32> to vector<8x48xf32>
    %492 = arith.negf %491 : vector<8x48xf32>
    %493 = math.exp %492 : vector<8x48xf32>
    %cst_236 = arith.constant 1.000000e+00 : f32
    %494 = vector.broadcast %cst_236 : f32 to vector<8x48xf32>
    %495 = arith.addf %494, %493 : vector<8x48xf32>
    %496 = arith.divf %494, %495 : vector<8x48xf32>
    %497 = arith.mulf %488, %407 : vector<8x48xf32>
    %498 = arith.mulf %482, %490 : vector<8x48xf32>
    %499 = arith.addf %497, %498 : vector<8x48xf32>
    %500 = math.tanh %499 : vector<8x48xf32>
    %501 = arith.mulf %496, %500 : vector<8x48xf32>
    %502 = tpu.concatenate %407, %499 in 1 : vector<8x48xf32>, vector<8x48xf32> -> vector<8x96xf32>
    %c0_237 = arith.constant 0 : index
    %c0_238 = arith.constant 0 : index
    %503 = vector.load %arg5[%c0_237, %c0_238] : memref<96x32xf32, #tpu.memory_space<vmem>>, vector<96x32xf32>
    %cst_239 = arith.constant dense<0.000000e+00> : vector<8x32xf32>
    %504 = tpu.matmul %502, %503, %cst_239 {dimension_numbers = #tpu.dot_dimension_numbers<[1], [0], [0], [1], [0, 0, 1, 1], [], []>} : vector<8x96xf32>, vector<96x32xf32>, vector<8x32xf32> -> vector<8x32xf32>
    %c0_240 = arith.constant 0 : index
    %c0_241 = arith.constant 0 : index
    %505 = vector.load %arg6[%c0_240, %c0_241] : memref<1x32xf32, #tpu.memory_space<vmem>>, vector<1x32xf32>
    %506 = vector.broadcast %505 : vector<1x32xf32> to vector<8x32xf32>
    %507 = arith.addf %504, %506 : vector<8x32xf32>
    %cst_242 = arith.constant 0.000000e+00 : f32
    %508 = vector.broadcast %cst_242 : f32 to vector<8x32xf32>
    %509 = arith.maximumf %507, %508 : vector<8x32xf32>
    %c0_243 = arith.constant 0 : index
    %c0_244 = arith.constant 0 : index
    %510 = vector.load %arg7[%c0_243, %c0_244] : memref<32x96xf32, #tpu.memory_space<vmem>>, vector<32x96xf32>
    %cst_245 = arith.constant dense<0.000000e+00> : vector<8x96xf32>
    %511 = tpu.matmul %509, %510, %cst_245 {dimension_numbers = #tpu.dot_dimension_numbers<[1], [0], [0], [1], [0, 0, 1, 1], [], []>} : vector<8x32xf32>, vector<32x96xf32>, vector<8x96xf32> -> vector<8x96xf32>
    %c0_246 = arith.constant 0 : index
    %c0_247 = arith.constant 0 : index
    %512 = vector.load %arg8[%c0_246, %c0_247] : memref<1x96xf32, #tpu.memory_space<vmem>>, vector<1x96xf32>
    %513 = vector.broadcast %512 : vector<1x96xf32> to vector<8x96xf32>
    %514 = arith.addf %511, %513 : vector<8x96xf32>
    %cst_248 = arith.constant dense<0xFF800000> : vector<8xf32>
    %515 = vector.multi_reduction <maximumf>, %514, %cst_248 [1] : vector<8x96xf32> to vector<8xf32>
    %516 = vector.shape_cast %515 : vector<8xf32> to vector<8x1xf32>
    %517 = vector.broadcast %516 : vector<8x1xf32> to vector<8x96xf32>
    %518 = arith.subf %514, %517 : vector<8x96xf32>
    %519 = math.exp %518 : vector<8x96xf32>
    %cst_249 = arith.constant dense<0.000000e+00> : vector<8xf32>
    %520 = vector.multi_reduction <add>, %519, %cst_249 [1] : vector<8x96xf32> to vector<8xf32>
    %521 = vector.shape_cast %520 : vector<8xf32> to vector<8x1xf32>
    %522 = tpu.reciprocal %521 {approx = true} : vector<8x1xf32> -> vector<8x1xf32>
    %523 = vector.broadcast %522 : vector<8x1xf32> to vector<8x96xf32>
    %524 = arith.mulf %519, %523 : vector<8x96xf32>
    %525 = arith.mulf %524, %502 : vector<8x96xf32>
    %c0_250 = arith.constant 0 : index
    %c0_251 = arith.constant 0 : index
    %526 = vector.load %arg9[%c0_250, %c0_251] : memref<96x32xf32, #tpu.memory_space<vmem>>, vector<96x32xf32>
    %cst_252 = arith.constant dense<0.000000e+00> : vector<8x32xf32>
    %527 = tpu.matmul %525, %526, %cst_252 {dimension_numbers = #tpu.dot_dimension_numbers<[1], [0], [0], [1], [0, 0, 1, 1], [], []>} : vector<8x96xf32>, vector<96x32xf32>, vector<8x32xf32> -> vector<8x32xf32>
    %c0_253 = arith.constant 0 : index
    %c0_254 = arith.constant 0 : index
    %528 = vector.load %arg10[%c0_253, %c0_254] : memref<1x32xf32, #tpu.memory_space<vmem>>, vector<1x32xf32>
    %529 = vector.broadcast %528 : vector<1x32xf32> to vector<8x32xf32>
    %530 = arith.addf %527, %529 : vector<8x32xf32>
    %cst_255 = arith.constant 0.000000e+00 : f32
    %531 = vector.broadcast %cst_255 : f32 to vector<8x32xf32>
    %532 = arith.maximumf %530, %531 : vector<8x32xf32>
    %c0_256 = arith.constant 0 : index
    %c0_257 = arith.constant 0 : index
    %533 = vector.load %arg11[%c0_256, %c0_257] : memref<32x32xf32, #tpu.memory_space<vmem>>, vector<32x32xf32>
    %cst_258 = arith.constant dense<0.000000e+00> : vector<8x32xf32>
    %534 = tpu.matmul %532, %533, %cst_258 {dimension_numbers = #tpu.dot_dimension_numbers<[1], [0], [0], [1], [0, 0, 1, 1], [], []>} : vector<8x32xf32>, vector<32x32xf32>, vector<8x32xf32> -> vector<8x32xf32>
    %c0_259 = arith.constant 0 : index
    %c0_260 = arith.constant 0 : index
    %535 = vector.load %arg12[%c0_259, %c0_260] : memref<1x32xf32, #tpu.memory_space<vmem>>, vector<1x32xf32>
    %536 = vector.broadcast %535 : vector<1x32xf32> to vector<8x32xf32>
    %537 = arith.addf %534, %536 : vector<8x32xf32>
    %538 = math.tanh %537 : vector<8x32xf32>
    %539 = tpu.concatenate %525, %469 in 1 : vector<8x96xf32>, vector<8x32xf32> -> vector<8x128xf32>
    %c0_261 = arith.constant 0 : index
    %c0_262 = arith.constant 0 : index
    %540 = vector.load %arg13[%c0_261, %c0_262] : memref<128x64xf32, #tpu.memory_space<vmem>>, vector<128x64xf32>
    %cst_263 = arith.constant dense<0.000000e+00> : vector<8x64xf32>
    %541 = tpu.matmul %539, %540, %cst_263 {dimension_numbers = #tpu.dot_dimension_numbers<[1], [0], [0], [1], [0, 0, 1, 1], [], []>} : vector<8x128xf32>, vector<128x64xf32>, vector<8x64xf32> -> vector<8x64xf32>
    %c0_264 = arith.constant 0 : index
    %c0_265 = arith.constant 0 : index
    %542 = vector.load %arg14[%c0_264, %c0_265] : memref<1x64xf32, #tpu.memory_space<vmem>>, vector<1x64xf32>
    %543 = vector.broadcast %542 : vector<1x64xf32> to vector<8x64xf32>
    %544 = arith.addf %541, %543 : vector<8x64xf32>
    %cst_266 = arith.constant 0.000000e+00 : f32
    %545 = vector.broadcast %cst_266 : f32 to vector<8x64xf32>
    %546 = arith.maximumf %544, %545 : vector<8x64xf32>
    %c0_267 = arith.constant 0 : index
    %c0_268 = arith.constant 0 : index
    %547 = vector.load %arg15[%c0_267, %c0_268] : memref<64x64xf32, #tpu.memory_space<vmem>>, vector<64x64xf32>
    %cst_269 = arith.constant dense<0.000000e+00> : vector<8x64xf32>
    %548 = tpu.matmul %546, %547, %cst_269 {dimension_numbers = #tpu.dot_dimension_numbers<[1], [0], [0], [1], [0, 0, 1, 1], [], []>} : vector<8x64xf32>, vector<64x64xf32>, vector<8x64xf32> -> vector<8x64xf32>
    %c0_270 = arith.constant 0 : index
    %c0_271 = arith.constant 0 : index
    %549 = vector.load %arg16[%c0_270, %c0_271] : memref<1x64xf32, #tpu.memory_space<vmem>>, vector<1x64xf32>
    %550 = vector.broadcast %549 : vector<1x64xf32> to vector<8x64xf32>
    %551 = arith.addf %548, %550 : vector<8x64xf32>
    %552 = arith.negf %551 : vector<8x64xf32>
    %553 = math.exp %552 : vector<8x64xf32>
    %cst_272 = arith.constant 1.000000e+00 : f32
    %554 = vector.broadcast %cst_272 : f32 to vector<8x64xf32>
    %555 = arith.addf %554, %553 : vector<8x64xf32>
    %556 = arith.divf %554, %555 : vector<8x64xf32>
    %557 = vector.extract_strided_slice %556 {offsets = [0, 0], sizes = [8, 32], strides = [1, 1]} : vector<8x64xf32> to vector<8x32xf32>
    %558 = vector.extract_strided_slice %556 {offsets = [0, 32], sizes = [8, 32], strides = [1, 1]} : vector<8x64xf32> to vector<8x32xf32>
    %559 = arith.mulf %557, %469 : vector<8x32xf32>
    %560 = arith.mulf %558, %538 : vector<8x32xf32>
    %561 = arith.addf %559, %560 : vector<8x32xf32>
    %c6_i32 = arith.constant 6 : i32
    %c8_i32_273 = arith.constant 8 : i32
    %562 = arith.muli %c6_i32, %c8_i32_273 : i32
    %563 = tpu.assume_multiple %562, 8 : i32
    %564 = arith.index_cast %563 : i32 to index
    %c0_274 = arith.constant 0 : index
    %565 = vector.load %arg22[%564, %c0_274] : memref<64x192xf32, #tpu.memory_space<vmem>>, vector<8x192xf32>
    %c0_275 = arith.constant 0 : index
    %c0_276 = arith.constant 0 : index
    %566 = vector.load %arg3[%c0_275, %c0_276] : memref<48x192xf32, #tpu.memory_space<vmem>>, vector<48x192xf32>
    %cst_277 = arith.constant dense<0.000000e+00> : vector<8x192xf32>
    %567 = tpu.matmul %501, %566, %cst_277 {dimension_numbers = #tpu.dot_dimension_numbers<[1], [0], [0], [1], [0, 0, 1, 1], [], []>} : vector<8x48xf32>, vector<48x192xf32>, vector<8x192xf32> -> vector<8x192xf32>
    %568 = arith.addf %565, %567 : vector<8x192xf32>
    %569 = vector.extract_strided_slice %568 {offsets = [0, 0], sizes = [8, 48], strides = [1, 1]} : vector<8x192xf32> to vector<8x48xf32>
    %570 = arith.negf %569 : vector<8x48xf32>
    %571 = math.exp %570 : vector<8x48xf32>
    %cst_278 = arith.constant 1.000000e+00 : f32
    %572 = vector.broadcast %cst_278 : f32 to vector<8x48xf32>
    %573 = arith.addf %572, %571 : vector<8x48xf32>
    %574 = arith.divf %572, %573 : vector<8x48xf32>
    %575 = vector.extract_strided_slice %568 {offsets = [0, 48], sizes = [8, 48], strides = [1, 1]} : vector<8x192xf32> to vector<8x48xf32>
    %576 = arith.negf %575 : vector<8x48xf32>
    %577 = math.exp %576 : vector<8x48xf32>
    %cst_279 = arith.constant 1.000000e+00 : f32
    %578 = vector.broadcast %cst_279 : f32 to vector<8x48xf32>
    %579 = arith.addf %578, %577 : vector<8x48xf32>
    %580 = arith.divf %578, %579 : vector<8x48xf32>
    %581 = vector.extract_strided_slice %568 {offsets = [0, 96], sizes = [8, 48], strides = [1, 1]} : vector<8x192xf32> to vector<8x48xf32>
    %582 = math.tanh %581 : vector<8x48xf32>
    %583 = vector.extract_strided_slice %568 {offsets = [0, 144], sizes = [8, 48], strides = [1, 1]} : vector<8x192xf32> to vector<8x48xf32>
    %584 = arith.negf %583 : vector<8x48xf32>
    %585 = math.exp %584 : vector<8x48xf32>
    %cst_280 = arith.constant 1.000000e+00 : f32
    %586 = vector.broadcast %cst_280 : f32 to vector<8x48xf32>
    %587 = arith.addf %586, %585 : vector<8x48xf32>
    %588 = arith.divf %586, %587 : vector<8x48xf32>
    %589 = arith.mulf %580, %499 : vector<8x48xf32>
    %590 = arith.mulf %574, %582 : vector<8x48xf32>
    %591 = arith.addf %589, %590 : vector<8x48xf32>
    %592 = math.tanh %591 : vector<8x48xf32>
    %593 = arith.mulf %588, %592 : vector<8x48xf32>
    %594 = tpu.concatenate %499, %591 in 1 : vector<8x48xf32>, vector<8x48xf32> -> vector<8x96xf32>
    %c0_281 = arith.constant 0 : index
    %c0_282 = arith.constant 0 : index
    %595 = vector.load %arg5[%c0_281, %c0_282] : memref<96x32xf32, #tpu.memory_space<vmem>>, vector<96x32xf32>
    %cst_283 = arith.constant dense<0.000000e+00> : vector<8x32xf32>
    %596 = tpu.matmul %594, %595, %cst_283 {dimension_numbers = #tpu.dot_dimension_numbers<[1], [0], [0], [1], [0, 0, 1, 1], [], []>} : vector<8x96xf32>, vector<96x32xf32>, vector<8x32xf32> -> vector<8x32xf32>
    %c0_284 = arith.constant 0 : index
    %c0_285 = arith.constant 0 : index
    %597 = vector.load %arg6[%c0_284, %c0_285] : memref<1x32xf32, #tpu.memory_space<vmem>>, vector<1x32xf32>
    %598 = vector.broadcast %597 : vector<1x32xf32> to vector<8x32xf32>
    %599 = arith.addf %596, %598 : vector<8x32xf32>
    %cst_286 = arith.constant 0.000000e+00 : f32
    %600 = vector.broadcast %cst_286 : f32 to vector<8x32xf32>
    %601 = arith.maximumf %599, %600 : vector<8x32xf32>
    %c0_287 = arith.constant 0 : index
    %c0_288 = arith.constant 0 : index
    %602 = vector.load %arg7[%c0_287, %c0_288] : memref<32x96xf32, #tpu.memory_space<vmem>>, vector<32x96xf32>
    %cst_289 = arith.constant dense<0.000000e+00> : vector<8x96xf32>
    %603 = tpu.matmul %601, %602, %cst_289 {dimension_numbers = #tpu.dot_dimension_numbers<[1], [0], [0], [1], [0, 0, 1, 1], [], []>} : vector<8x32xf32>, vector<32x96xf32>, vector<8x96xf32> -> vector<8x96xf32>
    %c0_290 = arith.constant 0 : index
    %c0_291 = arith.constant 0 : index
    %604 = vector.load %arg8[%c0_290, %c0_291] : memref<1x96xf32, #tpu.memory_space<vmem>>, vector<1x96xf32>
    %605 = vector.broadcast %604 : vector<1x96xf32> to vector<8x96xf32>
    %606 = arith.addf %603, %605 : vector<8x96xf32>
    %cst_292 = arith.constant dense<0xFF800000> : vector<8xf32>
    %607 = vector.multi_reduction <maximumf>, %606, %cst_292 [1] : vector<8x96xf32> to vector<8xf32>
    %608 = vector.shape_cast %607 : vector<8xf32> to vector<8x1xf32>
    %609 = vector.broadcast %608 : vector<8x1xf32> to vector<8x96xf32>
    %610 = arith.subf %606, %609 : vector<8x96xf32>
    %611 = math.exp %610 : vector<8x96xf32>
    %cst_293 = arith.constant dense<0.000000e+00> : vector<8xf32>
    %612 = vector.multi_reduction <add>, %611, %cst_293 [1] : vector<8x96xf32> to vector<8xf32>
    %613 = vector.shape_cast %612 : vector<8xf32> to vector<8x1xf32>
    %614 = tpu.reciprocal %613 {approx = true} : vector<8x1xf32> -> vector<8x1xf32>
    %615 = vector.broadcast %614 : vector<8x1xf32> to vector<8x96xf32>
    %616 = arith.mulf %611, %615 : vector<8x96xf32>
    %617 = arith.mulf %616, %594 : vector<8x96xf32>
    %c0_294 = arith.constant 0 : index
    %c0_295 = arith.constant 0 : index
    %618 = vector.load %arg9[%c0_294, %c0_295] : memref<96x32xf32, #tpu.memory_space<vmem>>, vector<96x32xf32>
    %cst_296 = arith.constant dense<0.000000e+00> : vector<8x32xf32>
    %619 = tpu.matmul %617, %618, %cst_296 {dimension_numbers = #tpu.dot_dimension_numbers<[1], [0], [0], [1], [0, 0, 1, 1], [], []>} : vector<8x96xf32>, vector<96x32xf32>, vector<8x32xf32> -> vector<8x32xf32>
    %c0_297 = arith.constant 0 : index
    %c0_298 = arith.constant 0 : index
    %620 = vector.load %arg10[%c0_297, %c0_298] : memref<1x32xf32, #tpu.memory_space<vmem>>, vector<1x32xf32>
    %621 = vector.broadcast %620 : vector<1x32xf32> to vector<8x32xf32>
    %622 = arith.addf %619, %621 : vector<8x32xf32>
    %cst_299 = arith.constant 0.000000e+00 : f32
    %623 = vector.broadcast %cst_299 : f32 to vector<8x32xf32>
    %624 = arith.maximumf %622, %623 : vector<8x32xf32>
    %c0_300 = arith.constant 0 : index
    %c0_301 = arith.constant 0 : index
    %625 = vector.load %arg11[%c0_300, %c0_301] : memref<32x32xf32, #tpu.memory_space<vmem>>, vector<32x32xf32>
    %cst_302 = arith.constant dense<0.000000e+00> : vector<8x32xf32>
    %626 = tpu.matmul %624, %625, %cst_302 {dimension_numbers = #tpu.dot_dimension_numbers<[1], [0], [0], [1], [0, 0, 1, 1], [], []>} : vector<8x32xf32>, vector<32x32xf32>, vector<8x32xf32> -> vector<8x32xf32>
    %c0_303 = arith.constant 0 : index
    %c0_304 = arith.constant 0 : index
    %627 = vector.load %arg12[%c0_303, %c0_304] : memref<1x32xf32, #tpu.memory_space<vmem>>, vector<1x32xf32>
    %628 = vector.broadcast %627 : vector<1x32xf32> to vector<8x32xf32>
    %629 = arith.addf %626, %628 : vector<8x32xf32>
    %630 = math.tanh %629 : vector<8x32xf32>
    %631 = tpu.concatenate %617, %561 in 1 : vector<8x96xf32>, vector<8x32xf32> -> vector<8x128xf32>
    %c0_305 = arith.constant 0 : index
    %c0_306 = arith.constant 0 : index
    %632 = vector.load %arg13[%c0_305, %c0_306] : memref<128x64xf32, #tpu.memory_space<vmem>>, vector<128x64xf32>
    %cst_307 = arith.constant dense<0.000000e+00> : vector<8x64xf32>
    %633 = tpu.matmul %631, %632, %cst_307 {dimension_numbers = #tpu.dot_dimension_numbers<[1], [0], [0], [1], [0, 0, 1, 1], [], []>} : vector<8x128xf32>, vector<128x64xf32>, vector<8x64xf32> -> vector<8x64xf32>
    %c0_308 = arith.constant 0 : index
    %c0_309 = arith.constant 0 : index
    %634 = vector.load %arg14[%c0_308, %c0_309] : memref<1x64xf32, #tpu.memory_space<vmem>>, vector<1x64xf32>
    %635 = vector.broadcast %634 : vector<1x64xf32> to vector<8x64xf32>
    %636 = arith.addf %633, %635 : vector<8x64xf32>
    %cst_310 = arith.constant 0.000000e+00 : f32
    %637 = vector.broadcast %cst_310 : f32 to vector<8x64xf32>
    %638 = arith.maximumf %636, %637 : vector<8x64xf32>
    %c0_311 = arith.constant 0 : index
    %c0_312 = arith.constant 0 : index
    %639 = vector.load %arg15[%c0_311, %c0_312] : memref<64x64xf32, #tpu.memory_space<vmem>>, vector<64x64xf32>
    %cst_313 = arith.constant dense<0.000000e+00> : vector<8x64xf32>
    %640 = tpu.matmul %638, %639, %cst_313 {dimension_numbers = #tpu.dot_dimension_numbers<[1], [0], [0], [1], [0, 0, 1, 1], [], []>} : vector<8x64xf32>, vector<64x64xf32>, vector<8x64xf32> -> vector<8x64xf32>
    %c0_314 = arith.constant 0 : index
    %c0_315 = arith.constant 0 : index
    %641 = vector.load %arg16[%c0_314, %c0_315] : memref<1x64xf32, #tpu.memory_space<vmem>>, vector<1x64xf32>
    %642 = vector.broadcast %641 : vector<1x64xf32> to vector<8x64xf32>
    %643 = arith.addf %640, %642 : vector<8x64xf32>
    %644 = arith.negf %643 : vector<8x64xf32>
    %645 = math.exp %644 : vector<8x64xf32>
    %cst_316 = arith.constant 1.000000e+00 : f32
    %646 = vector.broadcast %cst_316 : f32 to vector<8x64xf32>
    %647 = arith.addf %646, %645 : vector<8x64xf32>
    %648 = arith.divf %646, %647 : vector<8x64xf32>
    %649 = vector.extract_strided_slice %648 {offsets = [0, 0], sizes = [8, 32], strides = [1, 1]} : vector<8x64xf32> to vector<8x32xf32>
    %650 = vector.extract_strided_slice %648 {offsets = [0, 32], sizes = [8, 32], strides = [1, 1]} : vector<8x64xf32> to vector<8x32xf32>
    %651 = arith.mulf %649, %561 : vector<8x32xf32>
    %652 = arith.mulf %650, %630 : vector<8x32xf32>
    %653 = arith.addf %651, %652 : vector<8x32xf32>
    %c7_i32 = arith.constant 7 : i32
    %c8_i32_317 = arith.constant 8 : i32
    %654 = arith.muli %c7_i32, %c8_i32_317 : i32
    %655 = tpu.assume_multiple %654, 8 : i32
    %656 = arith.index_cast %655 : i32 to index
    %c0_318 = arith.constant 0 : index
    %657 = vector.load %arg22[%656, %c0_318] : memref<64x192xf32, #tpu.memory_space<vmem>>, vector<8x192xf32>
    %c0_319 = arith.constant 0 : index
    %c0_320 = arith.constant 0 : index
    %658 = vector.load %arg3[%c0_319, %c0_320] : memref<48x192xf32, #tpu.memory_space<vmem>>, vector<48x192xf32>
    %cst_321 = arith.constant dense<0.000000e+00> : vector<8x192xf32>
    %659 = tpu.matmul %593, %658, %cst_321 {dimension_numbers = #tpu.dot_dimension_numbers<[1], [0], [0], [1], [0, 0, 1, 1], [], []>} : vector<8x48xf32>, vector<48x192xf32>, vector<8x192xf32> -> vector<8x192xf32>
    %660 = arith.addf %657, %659 : vector<8x192xf32>
    %661 = vector.extract_strided_slice %660 {offsets = [0, 0], sizes = [8, 48], strides = [1, 1]} : vector<8x192xf32> to vector<8x48xf32>
    %662 = arith.negf %661 : vector<8x48xf32>
    %663 = math.exp %662 : vector<8x48xf32>
    %cst_322 = arith.constant 1.000000e+00 : f32
    %664 = vector.broadcast %cst_322 : f32 to vector<8x48xf32>
    %665 = arith.addf %664, %663 : vector<8x48xf32>
    %666 = arith.divf %664, %665 : vector<8x48xf32>
    %667 = vector.extract_strided_slice %660 {offsets = [0, 48], sizes = [8, 48], strides = [1, 1]} : vector<8x192xf32> to vector<8x48xf32>
    %668 = arith.negf %667 : vector<8x48xf32>
    %669 = math.exp %668 : vector<8x48xf32>
    %cst_323 = arith.constant 1.000000e+00 : f32
    %670 = vector.broadcast %cst_323 : f32 to vector<8x48xf32>
    %671 = arith.addf %670, %669 : vector<8x48xf32>
    %672 = arith.divf %670, %671 : vector<8x48xf32>
    %673 = vector.extract_strided_slice %660 {offsets = [0, 96], sizes = [8, 48], strides = [1, 1]} : vector<8x192xf32> to vector<8x48xf32>
    %674 = math.tanh %673 : vector<8x48xf32>
    %675 = vector.extract_strided_slice %660 {offsets = [0, 144], sizes = [8, 48], strides = [1, 1]} : vector<8x192xf32> to vector<8x48xf32>
    %676 = arith.negf %675 : vector<8x48xf32>
    %677 = math.exp %676 : vector<8x48xf32>
    %cst_324 = arith.constant 1.000000e+00 : f32
    %678 = vector.broadcast %cst_324 : f32 to vector<8x48xf32>
    %679 = arith.addf %678, %677 : vector<8x48xf32>
    %680 = arith.divf %678, %679 : vector<8x48xf32>
    %681 = arith.mulf %672, %591 : vector<8x48xf32>
    %682 = arith.mulf %666, %674 : vector<8x48xf32>
    %683 = arith.addf %681, %682 : vector<8x48xf32>
    %684 = math.tanh %683 : vector<8x48xf32>
    %685 = arith.mulf %680, %684 : vector<8x48xf32>
    %686 = tpu.concatenate %591, %683 in 1 : vector<8x48xf32>, vector<8x48xf32> -> vector<8x96xf32>
    %c0_325 = arith.constant 0 : index
    %c0_326 = arith.constant 0 : index
    %687 = vector.load %arg5[%c0_325, %c0_326] : memref<96x32xf32, #tpu.memory_space<vmem>>, vector<96x32xf32>
    %cst_327 = arith.constant dense<0.000000e+00> : vector<8x32xf32>
    %688 = tpu.matmul %686, %687, %cst_327 {dimension_numbers = #tpu.dot_dimension_numbers<[1], [0], [0], [1], [0, 0, 1, 1], [], []>} : vector<8x96xf32>, vector<96x32xf32>, vector<8x32xf32> -> vector<8x32xf32>
    %c0_328 = arith.constant 0 : index
    %c0_329 = arith.constant 0 : index
    %689 = vector.load %arg6[%c0_328, %c0_329] : memref<1x32xf32, #tpu.memory_space<vmem>>, vector<1x32xf32>
    %690 = vector.broadcast %689 : vector<1x32xf32> to vector<8x32xf32>
    %691 = arith.addf %688, %690 : vector<8x32xf32>
    %cst_330 = arith.constant 0.000000e+00 : f32
    %692 = vector.broadcast %cst_330 : f32 to vector<8x32xf32>
    %693 = arith.maximumf %691, %692 : vector<8x32xf32>
    %c0_331 = arith.constant 0 : index
    %c0_332 = arith.constant 0 : index
    %694 = vector.load %arg7[%c0_331, %c0_332] : memref<32x96xf32, #tpu.memory_space<vmem>>, vector<32x96xf32>
    %cst_333 = arith.constant dense<0.000000e+00> : vector<8x96xf32>
    %695 = tpu.matmul %693, %694, %cst_333 {dimension_numbers = #tpu.dot_dimension_numbers<[1], [0], [0], [1], [0, 0, 1, 1], [], []>} : vector<8x32xf32>, vector<32x96xf32>, vector<8x96xf32> -> vector<8x96xf32>
    %c0_334 = arith.constant 0 : index
    %c0_335 = arith.constant 0 : index
    %696 = vector.load %arg8[%c0_334, %c0_335] : memref<1x96xf32, #tpu.memory_space<vmem>>, vector<1x96xf32>
    %697 = vector.broadcast %696 : vector<1x96xf32> to vector<8x96xf32>
    %698 = arith.addf %695, %697 : vector<8x96xf32>
    %cst_336 = arith.constant dense<0xFF800000> : vector<8xf32>
    %699 = vector.multi_reduction <maximumf>, %698, %cst_336 [1] : vector<8x96xf32> to vector<8xf32>
    %700 = vector.shape_cast %699 : vector<8xf32> to vector<8x1xf32>
    %701 = vector.broadcast %700 : vector<8x1xf32> to vector<8x96xf32>
    %702 = arith.subf %698, %701 : vector<8x96xf32>
    %703 = math.exp %702 : vector<8x96xf32>
    %cst_337 = arith.constant dense<0.000000e+00> : vector<8xf32>
    %704 = vector.multi_reduction <add>, %703, %cst_337 [1] : vector<8x96xf32> to vector<8xf32>
    %705 = vector.shape_cast %704 : vector<8xf32> to vector<8x1xf32>
    %706 = tpu.reciprocal %705 {approx = true} : vector<8x1xf32> -> vector<8x1xf32>
    %707 = vector.broadcast %706 : vector<8x1xf32> to vector<8x96xf32>
    %708 = arith.mulf %703, %707 : vector<8x96xf32>
    %709 = arith.mulf %708, %686 : vector<8x96xf32>
    %c0_338 = arith.constant 0 : index
    %c0_339 = arith.constant 0 : index
    %710 = vector.load %arg9[%c0_338, %c0_339] : memref<96x32xf32, #tpu.memory_space<vmem>>, vector<96x32xf32>
    %cst_340 = arith.constant dense<0.000000e+00> : vector<8x32xf32>
    %711 = tpu.matmul %709, %710, %cst_340 {dimension_numbers = #tpu.dot_dimension_numbers<[1], [0], [0], [1], [0, 0, 1, 1], [], []>} : vector<8x96xf32>, vector<96x32xf32>, vector<8x32xf32> -> vector<8x32xf32>
    %c0_341 = arith.constant 0 : index
    %c0_342 = arith.constant 0 : index
    %712 = vector.load %arg10[%c0_341, %c0_342] : memref<1x32xf32, #tpu.memory_space<vmem>>, vector<1x32xf32>
    %713 = vector.broadcast %712 : vector<1x32xf32> to vector<8x32xf32>
    %714 = arith.addf %711, %713 : vector<8x32xf32>
    %cst_343 = arith.constant 0.000000e+00 : f32
    %715 = vector.broadcast %cst_343 : f32 to vector<8x32xf32>
    %716 = arith.maximumf %714, %715 : vector<8x32xf32>
    %c0_344 = arith.constant 0 : index
    %c0_345 = arith.constant 0 : index
    %717 = vector.load %arg11[%c0_344, %c0_345] : memref<32x32xf32, #tpu.memory_space<vmem>>, vector<32x32xf32>
    %cst_346 = arith.constant dense<0.000000e+00> : vector<8x32xf32>
    %718 = tpu.matmul %716, %717, %cst_346 {dimension_numbers = #tpu.dot_dimension_numbers<[1], [0], [0], [1], [0, 0, 1, 1], [], []>} : vector<8x32xf32>, vector<32x32xf32>, vector<8x32xf32> -> vector<8x32xf32>
    %c0_347 = arith.constant 0 : index
    %c0_348 = arith.constant 0 : index
    %719 = vector.load %arg12[%c0_347, %c0_348] : memref<1x32xf32, #tpu.memory_space<vmem>>, vector<1x32xf32>
    %720 = vector.broadcast %719 : vector<1x32xf32> to vector<8x32xf32>
    %721 = arith.addf %718, %720 : vector<8x32xf32>
    %722 = math.tanh %721 : vector<8x32xf32>
    %723 = tpu.concatenate %709, %653 in 1 : vector<8x96xf32>, vector<8x32xf32> -> vector<8x128xf32>
    %c0_349 = arith.constant 0 : index
    %c0_350 = arith.constant 0 : index
    %724 = vector.load %arg13[%c0_349, %c0_350] : memref<128x64xf32, #tpu.memory_space<vmem>>, vector<128x64xf32>
    %cst_351 = arith.constant dense<0.000000e+00> : vector<8x64xf32>
    %725 = tpu.matmul %723, %724, %cst_351 {dimension_numbers = #tpu.dot_dimension_numbers<[1], [0], [0], [1], [0, 0, 1, 1], [], []>} : vector<8x128xf32>, vector<128x64xf32>, vector<8x64xf32> -> vector<8x64xf32>
    %c0_352 = arith.constant 0 : index
    %c0_353 = arith.constant 0 : index
    %726 = vector.load %arg14[%c0_352, %c0_353] : memref<1x64xf32, #tpu.memory_space<vmem>>, vector<1x64xf32>
    %727 = vector.broadcast %726 : vector<1x64xf32> to vector<8x64xf32>
    %728 = arith.addf %725, %727 : vector<8x64xf32>
    %cst_354 = arith.constant 0.000000e+00 : f32
    %729 = vector.broadcast %cst_354 : f32 to vector<8x64xf32>
    %730 = arith.maximumf %728, %729 : vector<8x64xf32>
    %c0_355 = arith.constant 0 : index
    %c0_356 = arith.constant 0 : index
    %731 = vector.load %arg15[%c0_355, %c0_356] : memref<64x64xf32, #tpu.memory_space<vmem>>, vector<64x64xf32>
    %cst_357 = arith.constant dense<0.000000e+00> : vector<8x64xf32>
    %732 = tpu.matmul %730, %731, %cst_357 {dimension_numbers = #tpu.dot_dimension_numbers<[1], [0], [0], [1], [0, 0, 1, 1], [], []>} : vector<8x64xf32>, vector<64x64xf32>, vector<8x64xf32> -> vector<8x64xf32>
    %c0_358 = arith.constant 0 : index
    %c0_359 = arith.constant 0 : index
    %733 = vector.load %arg16[%c0_358, %c0_359] : memref<1x64xf32, #tpu.memory_space<vmem>>, vector<1x64xf32>
    %734 = vector.broadcast %733 : vector<1x64xf32> to vector<8x64xf32>
    %735 = arith.addf %732, %734 : vector<8x64xf32>
    %736 = arith.negf %735 : vector<8x64xf32>
    %737 = math.exp %736 : vector<8x64xf32>
    %cst_360 = arith.constant 1.000000e+00 : f32
    %738 = vector.broadcast %cst_360 : f32 to vector<8x64xf32>
    %739 = arith.addf %738, %737 : vector<8x64xf32>
    %740 = arith.divf %738, %739 : vector<8x64xf32>
    %741 = vector.extract_strided_slice %740 {offsets = [0, 0], sizes = [8, 32], strides = [1, 1]} : vector<8x64xf32> to vector<8x32xf32>
    %742 = vector.extract_strided_slice %740 {offsets = [0, 32], sizes = [8, 32], strides = [1, 1]} : vector<8x64xf32> to vector<8x32xf32>
    %743 = arith.mulf %741, %653 : vector<8x32xf32>
    %744 = arith.mulf %742, %722 : vector<8x32xf32>
    %745 = arith.addf %743, %744 : vector<8x32xf32>
    %c8_i32_361 = arith.constant 8 : i32
    %746 = tpu.concatenate %685, %745 in 1 : vector<8x48xf32>, vector<8x32xf32> -> vector<8x80xf32>
    %c0_362 = arith.constant 0 : index
    %c0_363 = arith.constant 0 : index
    %747 = vector.load %arg17[%c0_362, %c0_363] : memref<80x32xf32, #tpu.memory_space<vmem>>, vector<80x32xf32>
    %cst_364 = arith.constant dense<0.000000e+00> : vector<8x32xf32>
    %748 = tpu.matmul %746, %747, %cst_364 {dimension_numbers = #tpu.dot_dimension_numbers<[1], [0], [0], [1], [0, 0, 1, 1], [], []>} : vector<8x80xf32>, vector<80x32xf32>, vector<8x32xf32> -> vector<8x32xf32>
    %c0_365 = arith.constant 0 : index
    %c0_366 = arith.constant 0 : index
    %749 = vector.load %arg18[%c0_365, %c0_366] : memref<1x32xf32, #tpu.memory_space<vmem>>, vector<1x32xf32>
    %750 = vector.broadcast %749 : vector<1x32xf32> to vector<8x32xf32>
    %751 = arith.addf %748, %750 : vector<8x32xf32>
    %cst_367 = arith.constant 0.000000e+00 : f32
    %752 = vector.broadcast %cst_367 : f32 to vector<8x32xf32>
    %753 = arith.maximumf %751, %752 : vector<8x32xf32>
    %c0_368 = arith.constant 0 : index
    %c0_369 = arith.constant 0 : index
    %754 = vector.load %arg19[%c0_368, %c0_369] : memref<32x128xf32, #tpu.memory_space<vmem>>, vector<32x128xf32>
    %cst_370 = arith.constant dense<0.000000e+00> : vector<8x128xf32>
    %755 = tpu.matmul %753, %754, %cst_370 {dimension_numbers = #tpu.dot_dimension_numbers<[1], [0], [0], [1], [0, 0, 1, 1], [], []>} : vector<8x32xf32>, vector<32x128xf32>, vector<8x128xf32> -> vector<8x128xf32>
    %c0_371 = arith.constant 0 : index
    %c0_372 = arith.constant 0 : index
    %756 = vector.load %arg20[%c0_371, %c0_372] : memref<1x128xf32, #tpu.memory_space<vmem>>, vector<1x128xf32>
    %757 = vector.broadcast %756 : vector<1x128xf32> to vector<8x128xf32>
    %758 = arith.addf %755, %757 : vector<8x128xf32>
    %c0_373 = arith.constant 0 : index
    %c0_374 = arith.constant 0 : index
    %759 = vector.load %arg21[%c0_373, %c0_374] : memref<8x128xf32, #tpu.memory_space<vmem>>, vector<8x128xf32>
    tpu.vector_store %arg21[%c0_373, %c0_374], %758 {strides = array<i32>} : memref<8x128xf32, #tpu.memory_space<vmem>>, vector<8x128xf32>,
    return
  }
  func.func @transform_0(%arg0: i32) -> (i32, i32) {
    %c0_i32 = arith.constant 0 : i32
    %c0_i32_0 = arith.constant 0 : i32
    %c0_i32_1 = arith.constant 0 : i32
    return %c0_i32, %c0_i32_0 : i32, i32
  }
  func.func @transform_1(%arg0: i32) -> (i32, i32) {
    %c0_i32 = arith.constant 0 : i32
    %c0_i32_0 = arith.constant 0 : i32
    %c0_i32_1 = arith.constant 0 : i32
    return %c0_i32, %c0_i32_0 : i32, i32
  }
  func.func @transform_2(%arg0: i32) -> (i32, i32) {
    %c0_i32 = arith.constant 0 : i32
    %c0_i32_0 = arith.constant 0 : i32
    %c0_i32_1 = arith.constant 0 : i32
    return %c0_i32, %c0_i32_0 : i32, i32
  }
  func.func @transform_3(%arg0: i32) -> (i32, i32) {
    %c0_i32 = arith.constant 0 : i32
    %c0_i32_0 = arith.constant 0 : i32
    %c0_i32_1 = arith.constant 0 : i32
    return %c0_i32, %c0_i32_0 : i32, i32
  }
  func.func @transform_4(%arg0: i32) -> (i32, i32) {
    %c0_i32 = arith.constant 0 : i32
    %c0_i32_0 = arith.constant 0 : i32
    %c0_i32_1 = arith.constant 0 : i32
    return %c0_i32, %c0_i32_0 : i32, i32
  }
  func.func @transform_5(%arg0: i32) -> (i32, i32) {
    %c0_i32 = arith.constant 0 : i32
    %c0_i32_0 = arith.constant 0 : i32
    %c0_i32_1 = arith.constant 0 : i32
    return %c0_i32, %c0_i32_0 : i32, i32
  }
  func.func @transform_6(%arg0: i32) -> (i32, i32) {
    %c0_i32 = arith.constant 0 : i32
    %c0_i32_0 = arith.constant 0 : i32
    %c0_i32_1 = arith.constant 0 : i32
    return %c0_i32, %c0_i32_0 : i32, i32
  }
  func.func @transform_7(%arg0: i32) -> (i32, i32) {
    %c0_i32 = arith.constant 0 : i32
    %c0_i32_0 = arith.constant 0 : i32
    %c0_i32_1 = arith.constant 0 : i32
    return %c0_i32, %c0_i32_0 : i32, i32
  }
  func.func @transform_8(%arg0: i32) -> (i32, i32) {
    %c0_i32 = arith.constant 0 : i32
    %c0_i32_0 = arith.constant 0 : i32
    %c0_i32_1 = arith.constant 0 : i32
    return %c0_i32, %c0_i32_0 : i32, i32
  }
  func.func @transform_9(%arg0: i32) -> (i32, i32) {
    %c0_i32 = arith.constant 0 : i32
    %c0_i32_0 = arith.constant 0 : i32
    %c0_i32_1 = arith.constant 0 : i32
    return %c0_i32, %c0_i32_0 : i32, i32
  }
  func.func @transform_10(%arg0: i32) -> (i32, i32) {
    %c0_i32 = arith.constant 0 : i32
    %c0_i32_0 = arith.constant 0 : i32
    %c0_i32_1 = arith.constant 0 : i32
    return %c0_i32, %c0_i32_0 : i32, i32
  }
  func.func @transform_11(%arg0: i32) -> (i32, i32) {
    %c0_i32 = arith.constant 0 : i32
    %c0_i32_0 = arith.constant 0 : i32
    %c0_i32_1 = arith.constant 0 : i32
    return %c0_i32, %c0_i32_0 : i32, i32
  }
  func.func @transform_12(%arg0: i32) -> (i32, i32) {
    %c0_i32 = arith.constant 0 : i32
    %c0_i32_0 = arith.constant 0 : i32
    %c0_i32_1 = arith.constant 0 : i32
    return %c0_i32, %c0_i32_0 : i32, i32
  }
  func.func @transform_13(%arg0: i32) -> (i32, i32) {
    %c0_i32 = arith.constant 0 : i32
    %c0_i32_0 = arith.constant 0 : i32
    %c0_i32_1 = arith.constant 0 : i32
    return %c0_i32, %c0_i32_0 : i32, i32
  }
  func.func @transform_14(%arg0: i32) -> (i32, i32) {
    %c0_i32 = arith.constant 0 : i32
    %c0_i32_0 = arith.constant 0 : i32
    %c0_i32_1 = arith.constant 0 : i32
    return %c0_i32, %c0_i32_0 : i32, i32
  }
  func.func @transform_15(%arg0: i32) -> (i32, i32) {
    %c0_i32 = arith.constant 0 : i32
    %c0_i32_0 = arith.constant 0 : i32
    %c0_i32_1 = arith.constant 0 : i32
    return %c0_i32, %c0_i32_0 : i32, i32
  }
  func.func @transform_16(%arg0: i32) -> (i32, i32) {
    %c0_i32 = arith.constant 0 : i32
    %c0_i32_0 = arith.constant 0 : i32
    %c0_i32_1 = arith.constant 0 : i32
    return %c0_i32, %c0_i32_0 : i32, i32
  }
  func.func @transform_17(%arg0: i32) -> (i32, i32) {
    %c0_i32 = arith.constant 0 : i32
    %c0_i32_0 = arith.constant 0 : i32
    %c0_i32_1 = arith.constant 0 : i32
    return %c0_i32, %c0_i32_0 : i32, i32
  }
  func.func @transform_18(%arg0: i32) -> (i32, i32) {
    %c0_i32 = arith.constant 0 : i32
    %c0_i32_0 = arith.constant 0 : i32
    %c0_i32_1 = arith.constant 0 : i32
    return %c0_i32, %c0_i32_0 : i32, i32
  }
  func.func @transform_19(%arg0: i32) -> (i32, i32) {
    %c0_i32 = arith.constant 0 : i32
    %c0_i32_0 = arith.constant 0 : i32
    %c0_i32_1 = arith.constant 0 : i32
    return %c0_i32, %c0_i32_0 : i32, i32
  }
  func.func @transform_20(%arg0: i32) -> (i32, i32) {
    %c0_i32 = arith.constant 0 : i32
    %c0_i32_0 = arith.constant 0 : i32
    %c0_i32_1 = arith.constant 0 : i32
    return %c0_i32, %c0_i32_0 : i32, i32
  }
}

</mosaic_0001>

<llo_original>
// kernel: tpu_custom_call.1
$region0: #{tpu_custom_call.1}
  #allocation0 [shape = 'u32[]', space=smem, size = 0x4, offset = 0x4, fixed_abs, tag = 'smem constant byte address 0x4 - core index']
  #allocation1 [shape = 'u32[72,128]{1,0:T(1,128)}', space=vmem, size = 0x9000, scoped, tag = 'internal scratch']
  #allocation2 [shape = 'f32[64,192]{1,0:T(8,128)}', space=vmem, size = 0x10000, scoped, tag = 'scratch operand']
  %s0 = inlined_call_operand.vmem [shape: f32[64,36], index: 0, kind: input, shape index: {}]
  %s1 = inlined_call_operand.vmem [shape: f32[36,192], index: 1, kind: input, shape index: {}]
  %s2 = inlined_call_operand.vmem [shape: f32[48,192], index: 2, kind: input, shape index: {}]
  %s3 = inlined_call_operand.vmem [shape: f32[1,192], index: 3, kind: input, shape index: {}]
  %s4 = inlined_call_operand.vmem [shape: f32[96,32], index: 4, kind: input, shape index: {}]
  %s5 = inlined_call_operand.vmem [shape: f32[1,32], index: 5, kind: input, shape index: {}]
  %s6 = inlined_call_operand.vmem [shape: f32[32,96], index: 6, kind: input, shape index: {}]
  %s7 = inlined_call_operand.vmem [shape: f32[1,96], index: 7, kind: input, shape index: {}]
  %s8 = inlined_call_operand.vmem [shape: f32[96,32], index: 8, kind: input, shape index: {}]
  %s9 = inlined_call_operand.vmem [shape: f32[1,32], index: 9, kind: input, shape index: {}]
  %s10 = inlined_call_operand.vmem [shape: f32[32,32], index: 10, kind: input, shape index: {}]
  %s11 = inlined_call_operand.vmem [shape: f32[1,32], index: 11, kind: input, shape index: {}]
  %s12 = inlined_call_operand.vmem [shape: f32[128,64], index: 12, kind: input, shape index: {}]
  %s13 = inlined_call_operand.vmem [shape: f32[1,64], index: 13, kind: input, shape index: {}]
  %s14 = inlined_call_operand.vmem [shape: f32[64,64], index: 14, kind: input, shape index: {}]
  %s15 = inlined_call_operand.vmem [shape: f32[1,64], index: 15, kind: input, shape index: {}]
  %s16 = inlined_call_operand.vmem [shape: f32[80,32], index: 16, kind: input, shape index: {}]
  %s17 = inlined_call_operand.vmem [shape: f32[1,32], index: 17, kind: input, shape index: {}]
  %s18 = inlined_call_operand.vmem [shape: f32[32,128], index: 18, kind: input, shape index: {}]
  %s19 = inlined_call_operand.vmem [shape: f32[1,128], index: 19, kind: input, shape index: {}]
  %s20 = inlined_call_operand.hbm [shape: f32[8,128], index: 20, kind: output, shape index: {}]
  %s21 = sld [smem:[#allocation0]]
  $region90: #{tpu_custom_call.1} parent=0
    _
  %s23 = ssub.s32 1, %s21
  %s24 = scalar_select 0, %s23, %s21
  $region1: #{tpu_custom_call.1} parent=0
    #allocation3 [shape = 'u8[4096]{0}', space=vmem, size = 0x1000, scoped, tag = 'output window, operand 0, single buffered']
    #allocation4 [shape = 's32[1]{0}', space=sflag, size = 0x4, scoped, tag = 'scoped memory for tpu_custom_call.1']
    %25 = vsyncpa [#allocation4], 0
    // Predicated region
    $region2: #{tpu_custom_call.1} parent=1 // pred_check
      _
    $region3: #{tpu_custom_call.1} parent=1 // pred_check_branch
      %27 = sbr.rel (0) target = $region5
    $region4: #{tpu_custom_call.1} parent=1 // pred_region
      _
    $region5: #{tpu_custom_call.1} parent=1 // pred_fallthru
      _
    // Predicated region
    $region6: #{tpu_custom_call.1} parent=1 // pred_check
      _
    $region7: #{tpu_custom_call.1} parent=1 // pred_check_branch
      %29 = sbr.rel (0) target = $region9
    $region8: #{tpu_custom_call.1} parent=1 // pred_region
      _
    $region9: #{tpu_custom_call.1} parent=1 // pred_fallthru
      _
    // Predicated region
    $region10: #{tpu_custom_call.1} parent=1 // pred_check
      _
    $region11: #{tpu_custom_call.1} parent=1 // pred_check_branch
      %31 = sbr.rel (0) target = $region13
    $region12: #{tpu_custom_call.1} parent=1 // pred_region
      _
    $region13: #{tpu_custom_call.1} parent=1 // pred_fallthru
      _
    // Predicated region
    $region14: #{tpu_custom_call.1} parent=1 // pred_check
      _
    $region15: #{tpu_custom_call.1} parent=1 // pred_check_branch
      %33 = sbr.rel (0) target = $region17
    $region16: #{tpu_custom_call.1} parent=1 // pred_region
      _
    $region17: #{tpu_custom_call.1} parent=1 // pred_fallthru
      _
    // Predicated region
    $region18: #{tpu_custom_call.1} parent=1 // pred_check
      _
    $region19: #{tpu_custom_call.1} parent=1 // pred_check_branch
      %35 = sbr.rel (0) target = $region21
    $region20: #{tpu_custom_call.1} parent=1 // pred_region
      _
    $region21: #{tpu_custom_call.1} parent=1 // pred_fallthru
      _
    // Predicated region
    $region22: #{tpu_custom_call.1} parent=1 // pred_check
      _
    $region23: #{tpu_custom_call.1} parent=1 // pred_check_branch
      %37 = sbr.rel (0) target = $region25
    $region24: #{tpu_custom_call.1} parent=1 // pred_region
      _
    $region25: #{tpu_custom_call.1} parent=1 // pred_fallthru
      _
    // Predicated region
    $region26: #{tpu_custom_call.1} parent=1 // pred_check
      _
    $region27: #{tpu_custom_call.1} parent=1 // pred_check_branch
      %39 = sbr.rel (0) target = $region29
    $region28: #{tpu_custom_call.1} parent=1 // pred_region
      _
    $region29: #{tpu_custom_call.1} parent=1 // pred_fallthru
      _
    // Predicated region
    $region30: #{tpu_custom_call.1} parent=1 // pred_check
      _
    $region31: #{tpu_custom_call.1} parent=1 // pred_check_branch
      %41 = sbr.rel (0) target = $region33
    $region32: #{tpu_custom_call.1} parent=1 // pred_region
      _
    $region33: #{tpu_custom_call.1} parent=1 // pred_fallthru
      _
    // Predicated region
    $region34: #{tpu_custom_call.1} parent=1 // pred_check
      _
    $region35: #{tpu_custom_call.1} parent=1 // pred_check_branch
      %43 = sbr.rel (0) target = $region37
    $region36: #{tpu_custom_call.1} parent=1 // pred_region
      _
    $region37: #{tpu_custom_call.1} parent=1 // pred_fallthru
      _
    // Predicated region
    $region38: #{tpu_custom_call.1} parent=1 // pred_check
      _
    $region39: #{tpu_custom_call.1} parent=1 // pred_check_branch
      %45 = sbr.rel (0) target = $region41
    $region40: #{tpu_custom_call.1} parent=1 // pred_region
      _
    $region41: #{tpu_custom_call.1} parent=1 // pred_fallthru
      _
    // Predicated region
    $region42: #{tpu_custom_call.1} parent=1 // pred_check
      _
    $region43: #{tpu_custom_call.1} parent=1 // pred_check_branch
      %47 = sbr.rel (0) target = $region45
    $region44: #{tpu_custom_call.1} parent=1 // pred_region
      _
    $region45: #{tpu_custom_call.1} parent=1 // pred_fallthru
      _
    // Predicated region
    $region46: #{tpu_custom_call.1} parent=1 // pred_check
      _
    $region47: #{tpu_custom_call.1} parent=1 // pred_check_branch
      %49 = sbr.rel (0) target = $region49
    $region48: #{tpu_custom_call.1} parent=1 // pred_region
      _
    $region49: #{tpu_custom_call.1} parent=1 // pred_fallthru
      _
    // Predicated region
    $region50: #{tpu_custom_call.1} parent=1 // pred_check
      _
    $region51: #{tpu_custom_call.1} parent=1 // pred_check_branch
      %51 = sbr.rel (0) target = $region53
    $region52: #{tpu_custom_call.1} parent=1 // pred_region
      _
    $region53: #{tpu_custom_call.1} parent=1 // pred_fallthru
      _
    // Predicated region
    $region54: #{tpu_custom_call.1} parent=1 // pred_check
      _
    $region55: #{tpu_custom_call.1} parent=1 // pred_check_branch
      %53 = sbr.rel (0) target = $region57
    $region56: #{tpu_custom_call.1} parent=1 // pred_region
      _
    $region57: #{tpu_custom_call.1} parent=1 // pred_fallthru
      _
    // Predicated region
    $region58: #{tpu_custom_call.1} parent=1 // pred_check
      _
    $region59: #{tpu_custom_call.1} parent=1 // pred_check_branch
      %55 = sbr.rel (0) target = $region61
    $region60: #{tpu_custom_call.1} parent=1 // pred_region
      _
    $region61: #{tpu_custom_call.1} parent=1 // pred_fallthru
      _
    // Predicated region
    $region62: #{tpu_custom_call.1} parent=1 // pred_check
      _
    $region63: #{tpu_custom_call.1} parent=1 // pred_check_branch
      %57 = sbr.rel (0) target = $region65
    $region64: #{tpu_custom_call.1} parent=1 // pred_region
      _
    $region65: #{tpu_custom_call.1} parent=1 // pred_fallthru
      _
    // Predicated region
    $region66: #{tpu_custom_call.1} parent=1 // pred_check
      _
    $region67: #{tpu_custom_call.1} parent=1 // pred_check_branch
      %59 = sbr.rel (0) target = $region69
    $region68: #{tpu_custom_call.1} parent=1 // pred_region
      _
    $region69: #{tpu_custom_call.1} parent=1 // pred_fallthru
      _
    // Predicated region
    $region70: #{tpu_custom_call.1} parent=1 // pred_check
      _
    $region71: #{tpu_custom_call.1} parent=1 // pred_check_branch
      %61 = sbr.rel (0) target = $region73
    $region72: #{tpu_custom_call.1} parent=1 // pred_region
      _
    $region73: #{tpu_custom_call.1} parent=1 // pred_fallthru
      _
    // Predicated region
    $region74: #{tpu_custom_call.1} parent=1 // pred_check
      _
    $region75: #{tpu_custom_call.1} parent=1 // pred_check_branch
      %63 = sbr.rel (0) target = $region77
    $region76: #{tpu_custom_call.1} parent=1 // pred_region
      _
    $region77: #{tpu_custom_call.1} parent=1 // pred_fallthru
      _
    // Predicated region
    $region78: #{tpu_custom_call.1} parent=1 // pred_check
      _
    $region79: #{tpu_custom_call.1} parent=1 // pred_check_branch
      %65 = sbr.rel (0) target = $region81
    $region80: #{tpu_custom_call.1} parent=1 // pred_region
      _
    $region81: #{tpu_custom_call.1} parent=1 // pred_fallthru
      _
    %v66 = vld [vmem:[%s0] sm:$0xff]
    %v67 = vld [vmem:[%s0 + $0x8] sm:$0xff]
    %v68 = vld [vmem:[%s0 + $0x10] sm:$0xff]
    %v69 = vld [vmem:[%s0 + $0x18] sm:$0xff]
    %v70 = vld [vmem:[%s0 + $0x20] sm:$0xff]
    %v71 = vld [vmem:[%s0 + $0x28] sm:$0xff]
    %v72 = vld [vmem:[%s0 + $0x30] sm:$0xff]
    %v73 = vld [vmem:[%s0 + $0x38] sm:$0xff]
    %v74 = vld [vmem:[%s1] sm:$0xff]
    %v75 = vld [vmem:[%s1 + $0x8] sm:$0xff]
    %v76 = vld [vmem:[%s1 + $0x10] sm:$0xff]
    %v77 = vld [vmem:[%s1 + $0x18] sm:$0xff]
    %v78 = vld [vmem:[%s1 + $0x20] sm:$0xff]
    %v79 = vld [vmem:[%s1 + $0x28] sm:$0xff]
    %v80 = vld [vmem:[%s1 + $0x30] sm:$0xff]
    %v81 = vld [vmem:[%s1 + $0x38] sm:$0xff]
    %v82 = vld [vmem:[%s1 + $0x40] sm:$0xf]
    %v83 = vld [vmem:[%s1 + $0x48] sm:$0xf]
    %v84 = vld [vmem:[%s3] sm:$0x3]
    %v86 = vperm.slane %v84, 0
    %v87 = vperm.slane %v84, 1
    %vm90 = vcmask 293888
    %v92 = vsel %vm90, %v66, 0
    %v95 = vsel %vm90, %v67, 0
    %v98 = vsel %vm90, %v68, 0
    %v101 = vsel %vm90, %v69, 0
    %v104 = vsel %vm90, %v70, 0
    %v107 = vsel %vm90, %v71, 0
    %v110 = vsel %vm90, %v72, 0
    %v113 = vsel %vm90, %v73, 0
    %vm115 = vcmask 1043456
    %v117 = vsel %vm115, %v82, 0
    %v120 = vsel %vm115, %v83, 0
    %122 = vmatpush.msra.mxu0 0.0
    %123 = vmatpush.msra.mxu0 0.0
    %124 = vmatpush.msra.mxu0 0.0
    %125 = vmatpush.msra.mxu0 0.0
    %126 = vmatpush.msra.mxu0 0.0
    %127 = vmatpush.msra.mxu0 0.0
    %128 = vmatpush.msra.mxu0 0.0
    %129 = vmatpush.msra.mxu0 0.0
    %130 = vmatpush.msra.mxu0 0.0
    %131 = vmatpush.msra.mxu0 0.0
    %132 = vmatpush.msra.mxu0 0.0
    %133 = vmatpush.msra.mxu0 %v117
    %134 = vmatpush.msra.mxu0 %v80
    %135 = vmatpush.msra.mxu0 %v78
    %136 = vmatpush.msra.mxu0 %v76
    %137 = vmatpush.msra.mxu0 %v74
    %138 = vmatmul.f32.gmra.mxu0 %v92
    %v139 = vpop.f32.mrf.mxu0
    %v140 = vadd.f32 %v86, %v139
    %141 = vmatmul.f32.gmra.mxu0 %v95
    %v142 = vpop.f32.mrf.mxu0
    %v143 = vadd.f32 %v86, %v142
    %144 = vmatmul.f32.gmra.mxu0 %v98
    %v145 = vpop.f32.mrf.mxu0
    %v146 = vadd.f32 %v86, %v145
    %147 = vmatmul.f32.gmra.mxu0 %v101
    %v148 = vpop.f32.mrf.mxu0
    %v149 = vadd.f32 %v86, %v148
    %150 = vmatmul.f32.gmra.mxu0 %v104
    %v151 = vpop.f32.mrf.mxu0
    %v152 = vadd.f32 %v86, %v151
    %153 = vmatmul.f32.gmra.mxu0 %v107
    %v154 = vpop.f32.mrf.mxu0
    %v155 = vadd.f32 %v86, %v154
    %156 = vmatmul.f32.gmra.mxu0 %v110
    %v157 = vpop.f32.mrf.mxu0
    %v158 = vadd.f32 %v86, %v157
    %159 = vmatmul.f32.gmra.mxu0 %v113
    %v160 = vpop.f32.mrf.mxu0
    %v161 = vadd.f32 %v86, %v160
    %162 = vdwg.mxu0
    %163 = vmatpush.msra.mxu0 0.0
    %164 = vmatpush.msra.mxu0 0.0
    %165 = vmatpush.msra.mxu0 0.0
    %166 = vmatpush.msra.mxu0 0.0
    %167 = vmatpush.msra.mxu0 0.0
    %168 = vmatpush.msra.mxu0 0.0
    %169 = vmatpush.msra.mxu0 0.0
    %170 = vmatpush.msra.mxu0 0.0
    %171 = vmatpush.msra.mxu0 0.0
    %172 = vmatpush.msra.mxu0 0.0
    %173 = vmatpush.msra.mxu0 0.0
    %174 = vmatpush.msra.mxu0 %v120
    %175 = vmatpush.msra.mxu0 %v81
    %176 = vmatpush.msra.mxu0 %v79
    %177 = vmatpush.msra.mxu0 %v77
    %178 = vmatpush.msra.mxu0 %v75
    %179 = vmatmul.f32.gmra.mxu0 %v92
    %v180 = vpop.f32.mrf.mxu0
    %v181 = vadd.f32 %v87, %v180
    %182 = vmatmul.f32.gmra.mxu0 %v95
    %v183 = vpop.f32.mrf.mxu0
    %v184 = vadd.f32 %v87, %v183
    %185 = vmatmul.f32.gmra.mxu0 %v98
    %v186 = vpop.f32.mrf.mxu0
    %v187 = vadd.f32 %v87, %v186
    %188 = vmatmul.f32.gmra.mxu0 %v101
    %v189 = vpop.f32.mrf.mxu0
    %v190 = vadd.f32 %v87, %v189
    %191 = vmatmul.f32.gmra.mxu0 %v104
    %v192 = vpop.f32.mrf.mxu0
    %v193 = vadd.f32 %v87, %v192
    %194 = vmatmul.f32.gmra.mxu0 %v107
    %v195 = vpop.f32.mrf.mxu0
    %v196 = vadd.f32 %v87, %v195
    %197 = vmatmul.f32.gmra.mxu0 %v110
    %v198 = vpop.f32.mrf.mxu0
    %v199 = vadd.f32 %v87, %v198
    %200 = vmatmul.f32.gmra.mxu0 %v113
    %v201 = vpop.f32.mrf.mxu0
    %v202 = vadd.f32 %v87, %v201
    %203 = vdwg.mxu0
    %204 = vst [vmem:[#allocation2] sm:$0xff] %v140
    %vm205 = vcmask 523264
    %206 = vst.msk [vmem:[#allocation2 + $0x8] sm:$0xff] %vm205, %v181
    %207 = vst [vmem:[#allocation2 + $0x10] sm:$0xff] %v143
    %208 = vst.msk [vmem:[#allocation2 + $0x18] sm:$0xff] %vm205, %v184
    %209 = vst [vmem:[#allocation2 + $0x20] sm:$0xff] %v146
    %210 = vst.msk [vmem:[#allocation2 + $0x28] sm:$0xff] %vm205, %v187
    %211 = vst [vmem:[#allocation2 + $0x30] sm:$0xff] %v149
    %212 = vst.msk [vmem:[#allocation2 + $0x38] sm:$0xff] %vm205, %v190
    %213 = vst [vmem:[#allocation2 + $0x40] sm:$0xff] %v152
    %214 = vst.msk [vmem:[#allocation2 + $0x48] sm:$0xff] %vm205, %v193
    %215 = vst [vmem:[#allocation2 + $0x50] sm:$0xff] %v155
    %216 = vst.msk [vmem:[#allocation2 + $0x58] sm:$0xff] %vm205, %v196
    %217 = vst [vmem:[#allocation2 + $0x60] sm:$0xff] %v158
    %218 = vst.msk [vmem:[#allocation2 + $0x68] sm:$0xff] %vm205, %v199
    %219 = vst [vmem:[#allocation2 + $0x70] sm:$0xff] %v161
    %220 = vst.msk [vmem:[#allocation2 + $0x78] sm:$0xff] %vm205, %v202
    %s221 = smul.u32 0, 2
    %s222 = smul.addr %s221, 8
    %s223 = scalar_lea.vmem [#allocation2], %s222
    %v224 = vld [vmem:[%s223] sm:$0xff]
    %v225 = vld [vmem:[%s223 + $0x8] sm:$0xff]
    %v226 = vld [vmem:[%s2] sm:$0xff]
    %v227 = vld [vmem:[%s2 + $0x8] sm:$0xff]
    %v228 = vld [vmem:[%s2 + $0x10] sm:$0xff]
    %v229 = vld [vmem:[%s2 + $0x18] sm:$0xff]
    %v230 = vld [vmem:[%s2 + $0x20] sm:$0xff]
    %v231 = vld [vmem:[%s2 + $0x28] sm:$0xff]
    %v232 = vld [vmem:[%s2 + $0x30] sm:$0xff]
    %v233 = vld [vmem:[%s2 + $0x38] sm:$0xff]
    %v234 = vld [vmem:[%s2 + $0x40] sm:$0xff]
    %v235 = vld [vmem:[%s2 + $0x48] sm:$0xff]
    %v236 = vld [vmem:[%s2 + $0x50] sm:$0xff]
    %v237 = vld [vmem:[%s2 + $0x58] sm:$0xff]
    %vm238 = vcmask 392192
    %v240 = vsel %vm238, 0.0, 0
    %242 = vmatpush.msra.mxu0 0.0
    %243 = vmatpush.msra.mxu0 0.0
    %244 = vmatpush.msra.mxu0 0.0
    %245 = vmatpush.msra.mxu0 0.0
    %246 = vmatpush.msra.mxu0 0.0
    %247 = vmatpush.msra.mxu0 0.0
    %248 = vmatpush.msra.mxu0 0.0
    %249 = vmatpush.msra.mxu0 0.0
    %250 = vmatpush.msra.mxu0 0.0
    %251 = vmatpush.msra.mxu0 0.0
    %252 = vmatpush.msra.mxu0 %v236
    %253 = vmatpush.msra.mxu0 %v234
    %254 = vmatpush.msra.mxu0 %v232
    %255 = vmatpush.msra.mxu0 %v230
    %256 = vmatpush.msra.mxu0 %v228
    %257 = vmatpush.msra.mxu0 %v226
    %258 = vmatmul.f32.gmra.mxu0 %v240
    %v259 = vpop.f32.mrf.mxu0
    %v260 = vadd.f32 0.0, %v259
    %261 = vdwg.mxu0
    %262 = vmatpush.msra.mxu0 0.0
    %263 = vmatpush.msra.mxu0 0.0
    %264 = vmatpush.msra.mxu0 0.0
    %265 = vmatpush.msra.mxu0 0.0
    %266 = vmatpush.msra.mxu0 0.0
    %267 = vmatpush.msra.mxu0 0.0
    %268 = vmatpush.msra.mxu0 0.0
    %269 = vmatpush.msra.mxu0 0.0
    %270 = vmatpush.msra.mxu0 0.0
    %271 = vmatpush.msra.mxu0 0.0
    %272 = vmatpush.msra.mxu0 %v237
    %273 = vmatpush.msra.mxu0 %v235
    %274 = vmatpush.msra.mxu0 %v233
    %275 = vmatpush.msra.mxu0 %v231
    %276 = vmatpush.msra.mxu0 %v229
    %277 = vmatpush.msra.mxu0 %v227
    %278 = vmatmul.f32.gmra.mxu0 %v240
    %v279 = vpop.f32.mrf.mxu0
    %v280 = vadd.f32 0.0, %v279
    %281 = vdwg.mxu0
    %v282 = vadd.f32 %v224, %v260
    %v283 = vadd.f32 %v225, %v280
    %v284 = vxor.u32 %v282, 2147483648
    %v285 = vmul.f32 %v284, 1.442695
    %v286 = vpow.pop %v285
    %v287 = vadd.f32 %v286, 1.0
    %v288 = vrcp.pop %v287
    %v289 = vmul.f32 %v287, %v288
    %v290 = vsub.f32 1.0, %v289
    %v291 = vmul.f32 %v288, %v290
    %v292 = vadd.f32 %v288, %v291
    %vm293 = vweird.f32 %v287
    %vm294 = vweird.f32 %v288
    %vm295 = vmor %vm293, %vm294
    %v296 = vsel %vm295, %v288, %v292
    %v297 = vand.u32 2147483647, %v287
    %vm298 = vcmp.eq.f32.partialorder %v297, 8.507059e+37
    %v299 = vand.u32 %v287, 2147483648
    %v300 = vor.u32 1.1754944e-38, %v299
    %v301 = vsel %vm298, %v300, %v296
    %v302 = vmul.f32 1.0, %v301
    %v303 = vtanh.pop %v282
    %v304 = vtanh.pop %v283
    %v305 = vxor.u32 %v283, 2147483648
    %v306 = vmul.f32 %v305, 1.442695
    %v307 = vpow.pop %v306
    %v308 = vadd.f32 %v307, 1.0
    %v309 = vrcp.pop %v308
    %v310 = vmul.f32 %v308, %v309
    %v311 = vsub.f32 1.0, %v310
    %v312 = vmul.f32 %v309, %v311
    %v313 = vadd.f32 %v309, %v312
    %vm314 = vweird.f32 %v308
    %vm315 = vweird.f32 %v309
    %vm316 = vmor %vm314, %vm315
    %v317 = vsel %vm316, %v309, %v313
    %v318 = vand.u32 2147483647, %v308
    %vm319 = vcmp.eq.f32.partialorder %v318, 8.507059e+37
    %v320 = vand.u32 %v308, 2147483648
    %v321 = vor.u32 1.1754944e-38, %v320
    %v322 = vsel %vm319, %v321, %v317
    %v323 = vmul.f32 1.0, %v322
    %v324 = vmul.f32 %v302, 0.0
    %327 = vrot.lane.b32.xlu0 %v303, 32
    %v328 = vpop.permute.xlu0 %327
    %329 = vrot.lane.b32.xlu0 %v304, 32
    %v330 = vpop.permute.xlu0 %329
    %vm331 = vcmask 261120
    %v332 = vsel %vm331, %v328, %v330
    %v334 = vmul.f32 %v302, %v332
    %336 = vrot.lane.b32.xlu0 %v334, 48
    %v337 = vpop.permute.xlu0 %336
    %v339 = vadd.f32 %v324, %v337
    %v340 = vtanh.pop %v339
    %342 = vrot.lane.b32.xlu0 %v340, 96
    %v343 = vpop.permute.xlu0 %342
    %v345 = vmul.f32 %v323, %v343
    %v346 = vsel %vm238, 0.0, %v339
    %v347 = vld [vmem:[%s4] sm:$0xff]
    %v348 = vld [vmem:[%s4 + $0x8] sm:$0xff]
    %v349 = vld [vmem:[%s4 + $0x10] sm:$0xff]
    %v350 = vld [vmem:[%s4 + $0x18] sm:$0xff]
    %v351 = vld [vmem:[%s4 + $0x20] sm:$0xff]
    %v352 = vld [vmem:[%s4 + $0x28] sm:$0xff]
    %v353 = vld [vmem:[%s4 + $0x30] sm:$0xff]
    %v354 = vld [vmem:[%s4 + $0x38] sm:$0xff]
    %v355 = vld [vmem:[%s4 + $0x40] sm:$0xff]
    %v356 = vld [vmem:[%s4 + $0x48] sm:$0xff]
    %v357 = vld [vmem:[%s4 + $0x50] sm:$0xff]
    %v358 = vld [vmem:[%s4 + $0x58] sm:$0xff]
    %v359 = vld [vmem:[%s5] sm:$0x1]
    %v361 = vperm.slane %v359, 0
    %vm363 = vcmask 785408
    %v365 = vsel %vm363, %v346, 0
    %367 = vmatpush.msra.mxu0 0.0
    %368 = vmatpush.msra.mxu0 0.0
    %369 = vmatpush.msra.mxu0 0.0
    %370 = vmatpush.msra.mxu0 0.0
    %371 = vmatpush.msra.mxu0 %v358
    %372 = vmatpush.msra.mxu0 %v357
    %373 = vmatpush.msra.mxu0 %v356
    %374 = vmatpush.msra.mxu0 %v355
    %375 = vmatpush.msra.mxu0 %v354
    %376 = vmatpush.msra.mxu0 %v353
    %377 = vmatpush.msra.mxu0 %v352
    %378 = vmatpush.msra.mxu0 %v351
    %379 = vmatpush.msra.mxu0 %v350
    %380 = vmatpush.msra.mxu0 %v349
    %381 = vmatpush.msra.mxu0 %v348
    %382 = vmatpush.msra.mxu0 %v347
    %383 = vmatmul.f32.gmra.mxu0 %v365
    %v384 = vpop.f32.mrf.mxu0
    %v385 = vadd.f32 %v361, %v384
    %386 = vdwg.mxu0
    %v387 = vmax.f32 %v385, 0.0
    %v388 = vld [vmem:[%s6] sm:$0xff]
    %v389 = vld [vmem:[%s6 + $0x8] sm:$0xff]
    %v390 = vld [vmem:[%s6 + $0x10] sm:$0xff]
    %v391 = vld [vmem:[%s6 + $0x18] sm:$0xff]
    %v392 = vld [vmem:[%s7] sm:$0x1]
    %v394 = vperm.slane %v392, 0
    %v397 = vsel %vm331, %v387, 0
    %399 = vmatpush.msra.mxu0 0.0
    %400 = vmatpush.msra.mxu0 0.0
    %401 = vmatpush.msra.mxu0 0.0
    %402 = vmatpush.msra.mxu0 0.0
    %403 = vmatpush.msra.mxu0 0.0
    %404 = vmatpush.msra.mxu0 0.0
    %405 = vmatpush.msra.mxu0 0.0
    %406 = vmatpush.msra.mxu0 0.0
    %407 = vmatpush.msra.mxu0 0.0
    %408 = vmatpush.msra.mxu0 0.0
    %409 = vmatpush.msra.mxu0 0.0
    %410 = vmatpush.msra.mxu0 0.0
    %411 = vmatpush.msra.mxu0 %v391
    %412 = vmatpush.msra.mxu0 %v390
    %413 = vmatpush.msra.mxu0 %v389
    %414 = vmatpush.msra.mxu0 %v388
    %415 = vmatmul.f32.gmra.mxu0 %v397
    %v416 = vpop.f32.mrf.mxu0
    %v417 = vadd.f32 %v394, %v416
    %418 = vdwg.mxu0
    %v419 = vsel %vm363, %v417, -inf
    %420 = vmax.xlane.f32.xlu0 %v419
    %v421 = vpop.xlane.xlu0 %420
    %v422 = vsub.f32 %v417, %v421
    %v423 = vmul.f32 %v422, 1.442695
    %v424 = vpow.pop %v423
    %v425 = vsel %vm363, %v424, 0.0
    %426 = vadd.xlane.f32.xlu0 %v425
    %v427 = vpop.xlane.xlu0 %426
    %v428 = vrcp.pop %v427
    %v429 = vmul.f32 %v424, %v428
    %v430 = vmul.f32 %v429, %v346
    %v431 = vld [vmem:[%s8] sm:$0xff]
    %v432 = vld [vmem:[%s8 + $0x8] sm:$0xff]
    %v433 = vld [vmem:[%s8 + $0x10] sm:$0xff]
    %v434 = vld [vmem:[%s8 + $0x18] sm:$0xff]
    %v435 = vld [vmem:[%s8 + $0x20] sm:$0xff]
    %v436 = vld [vmem:[%s8 + $0x28] sm:$0xff]
    %v437 = vld [vmem:[%s8 + $0x30] sm:$0xff]
    %v438 = vld [vmem:[%s8 + $0x38] sm:$0xff]
    %v439 = vld [vmem:[%s8 + $0x40] sm:$0xff]
    %v440 = vld [vmem:[%s8 + $0x48] sm:$0xff]
    %v441 = vld [vmem:[%s8 + $0x50] sm:$0xff]
    %v442 = vld [vmem:[%s8 + $0x58] sm:$0xff]
    %v443 = vld [vmem:[%s9] sm:$0x1]
    %v445 = vperm.slane %v443, 0
    %v448 = vsel %vm363, %v430, 0
    %450 = vmatpush.msra.mxu0 0.0
    %451 = vmatpush.msra.mxu0 0.0
    %452 = vmatpush.msra.mxu0 0.0
    %453 = vmatpush.msra.mxu0 0.0
    %454 = vmatpush.msra.mxu0 %v442
    %455 = vmatpush.msra.mxu0 %v441
    %456 = vmatpush.msra.mxu0 %v440
    %457 = vmatpush.msra.mxu0 %v439
    %458 = vmatpush.msra.mxu0 %v438
    %459 = vmatpush.msra.mxu0 %v437
    %460 = vmatpush.msra.mxu0 %v436
    %461 = vmatpush.msra.mxu0 %v435
    %462 = vmatpush.msra.mxu0 %v434
    %463 = vmatpush.msra.mxu0 %v433
    %464 = vmatpush.msra.mxu0 %v432
    %465 = vmatpush.msra.mxu0 %v431
    %466 = vmatmul.f32.gmra.mxu0 %v448
    %v467 = vpop.f32.mrf.mxu0
    %v468 = vadd.f32 %v445, %v467
    %469 = vdwg.mxu0
    %v470 = vmax.f32 %v468, 0.0
    %v471 = vld [vmem:[%s10] sm:$0xff]
    %v472 = vld [vmem:[%s10 + $0x8] sm:$0xff]
    %v473 = vld [vmem:[%s10 + $0x10] sm:$0xff]
    %v474 = vld [vmem:[%s10 + $0x18] sm:$0xff]
    %v475 = vld [vmem:[%s11] sm:$0x1]
    %v477 = vperm.slane %v475, 0
    %v480 = vsel %vm331, %v470, 0
    %482 = vmatpush.msra.mxu0 0.0
    %483 = vmatpush.msra.mxu0 0.0
    %484 = vmatpush.msra.mxu0 0.0
    %485 = vmatpush.msra.mxu0 0.0
    %486 = vmatpush.msra.mxu0 0.0
    %487 = vmatpush.msra.mxu0 0.0
    %488 = vmatpush.msra.mxu0 0.0
    %489 = vmatpush.msra.mxu0 0.0
    %490 = vmatpush.msra.mxu0 0.0
    %491 = vmatpush.msra.mxu0 0.0
    %492 = vmatpush.msra.mxu0 0.0
    %493 = vmatpush.msra.mxu0 0.0
    %494 = vmatpush.msra.mxu0 %v474
    %495 = vmatpush.msra.mxu0 %v473
    %496 = vmatpush.msra.mxu0 %v472
    %497 = vmatpush.msra.mxu0 %v471
    %498 = vmatmul.f32.gmra.mxu0 %v480
    %v499 = vpop.f32.mrf.mxu0
    %v500 = vadd.f32 %v477, %v499
    %501 = vdwg.mxu0
    %v502 = vtanh.pop %v500
    %v503 = vsel %vm363, %v430, 0.0
    %v504 = vld [vmem:[%s12] sm:$0xff]
    %v505 = vld [vmem:[%s12 + $0x8] sm:$0xff]
    %v506 = vld [vmem:[%s12 + $0x10] sm:$0xff]
    %v507 = vld [vmem:[%s12 + $0x18] sm:$0xff]
    %v508 = vld [vmem:[%s12 + $0x20] sm:$0xff]
    %v509 = vld [vmem:[%s12 + $0x28] sm:$0xff]
    %v510 = vld [vmem:[%s12 + $0x30] sm:$0xff]
    %v511 = vld [vmem:[%s12 + $0x38] sm:$0xff]
    %v512 = vld [vmem:[%s12 + $0x40] sm:$0xff]
    %v513 = vld [vmem:[%s12 + $0x48] sm:$0xff]
    %v514 = vld [vmem:[%s12 + $0x50] sm:$0xff]
    %v515 = vld [vmem:[%s12 + $0x58] sm:$0xff]
    %v516 = vld [vmem:[%s12 + $0x60] sm:$0xff]
    %v517 = vld [vmem:[%s12 + $0x68] sm:$0xff]
    %v518 = vld [vmem:[%s12 + $0x70] sm:$0xff]
    %v519 = vld [vmem:[%s12 + $0x78] sm:$0xff]
    %v520 = vld [vmem:[%s13] sm:$0x1]
    %v522 = vperm.slane %v520, 0
    %524 = vmatpush.msra.mxu0 %v519
    %525 = vmatpush.msra.mxu0 %v518
    %526 = vmatpush.msra.mxu0 %v517
    %527 = vmatpush.msra.mxu0 %v516
    %528 = vmatpush.msra.mxu0 %v515
    %529 = vmatpush.msra.mxu0 %v514
    %530 = vmatpush.msra.mxu0 %v513
    %531 = vmatpush.msra.mxu0 %v512
    %532 = vmatpush.msra.mxu0 %v511
    %533 = vmatpush.msra.mxu0 %v510
    %534 = vmatpush.msra.mxu0 %v509
    %535 = vmatpush.msra.mxu0 %v508
    %536 = vmatpush.msra.mxu0 %v507
    %537 = vmatpush.msra.mxu0 %v506
    %538 = vmatpush.msra.mxu0 %v505
    %539 = vmatpush.msra.mxu0 %v504
    %540 = vmatmul.f32.gmra.mxu0 %v503
    %v541 = vpop.f32.mrf.mxu0
    %v542 = vadd.f32 %v522, %v541
    %543 = vdwg.mxu0
    %v544 = vmax.f32 %v542, 0.0
    %v545 = vld [vmem:[%s14] sm:$0xff]
    %v546 = vld [vmem:[%s14 + $0x8] sm:$0xff]
    %v547 = vld [vmem:[%s14 + $0x10] sm:$0xff]
    %v548 = vld [vmem:[%s14 + $0x18] sm:$0xff]
    %v549 = vld [vmem:[%s14 + $0x20] sm:$0xff]
    %v550 = vld [vmem:[%s14 + $0x28] sm:$0xff]
    %v551 = vld [vmem:[%s14 + $0x30] sm:$0xff]
    %v552 = vld [vmem:[%s14 + $0x38] sm:$0xff]
    %v553 = vld [vmem:[%s15] sm:$0x1]
    %v555 = vperm.slane %v553, 0
    %v558 = vsel %vm205, %v544, 0
    %560 = vmatpush.msra.mxu0 0.0
    %561 = vmatpush.msra.mxu0 0.0
    %562 = vmatpush.msra.mxu0 0.0
    %563 = vmatpush.msra.mxu0 0.0
    %564 = vmatpush.msra.mxu0 0.0
    %565 = vmatpush.msra.mxu0 0.0
    %566 = vmatpush.msra.mxu0 0.0
    %567 = vmatpush.msra.mxu0 0.0
    %568 = vmatpush.msra.mxu0 %v552
    %569 = vmatpush.msra.mxu0 %v551
    %570 = vmatpush.msra.mxu0 %v550
    %571 = vmatpush.msra.mxu0 %v549
    %572 = vmatpush.msra.mxu0 %v548
    %573 = vmatpush.msra.mxu0 %v547
    %574 = vmatpush.msra.mxu0 %v546
    %575 = vmatpush.msra.mxu0 %v545
    %576 = vmatmul.f32.gmra.mxu0 %v558
    %v577 = vpop.f32.mrf.mxu0
    %v578 = vadd.f32 %v555, %v577
    %579 = vdwg.mxu0
    %v580 = vxor.u32 %v578, 2147483648
    %v581 = vmul.f32 %v580, 1.442695
    %v582 = vpow.pop %v581
    %v583 = vadd.f32 %v582, 1.0
    %v584 = vrcp.pop %v583
    %v585 = vmul.f32 %v583, %v584
    %v586 = vsub.f32 1.0, %v585
    %v587 = vmul.f32 %v584, %v586
    %v588 = vadd.f32 %v584, %v587
    %vm589 = vweird.f32 %v583
    %vm590 = vweird.f32 %v584
    %vm591 = vmor %vm589, %vm590
    %v592 = vsel %vm591, %v584, %v588
    %v593 = vand.u32 2147483647, %v583
    %vm594 = vcmp.eq.f32.partialorder %v593, 8.507059e+37
    %v595 = vand.u32 %v583, 2147483648
    %v596 = vor.u32 1.1754944e-38, %v595
    %v597 = vsel %vm594, %v596, %v592
    %v598 = vmul.f32 1.0, %v597
    %v599 = vmul.f32 %v598, 0.0
    %601 = vrot.lane.b32.xlu0 %v502, 32
    %v602 = vpop.permute.xlu0 %601
    %v604 = vmul.f32 %v598, %v602
    %606 = vrot.lane.b32.xlu0 %v604, 96
    %v607 = vpop.permute.xlu0 %606
    %v609 = vadd.f32 %v599, %v607
    %s610 = smul.u32 1, 2
    %s611 = smul.addr %s610, 8
    %s612 = scalar_lea.vmem [#allocation2], %s611
    %v613 = vld [vmem:[%s612] sm:$0xff]
    %v614 = vld [vmem:[%s612 + $0x8] sm:$0xff]
    %616 = vrot.lane.b32.xlu0 %v345, 112
    %v617 = vpop.permute.xlu0 %616
    %v618 = vsel %vm238, %v617, 0
    %620 = vmatpush.msra.mxu0 0.0
    %621 = vmatpush.msra.mxu0 0.0
    %622 = vmatpush.msra.mxu0 0.0
    %623 = vmatpush.msra.mxu0 0.0
    %624 = vmatpush.msra.mxu0 0.0
    %625 = vmatpush.msra.mxu0 0.0
    %626 = vmatpush.msra.mxu0 0.0
    %627 = vmatpush.msra.mxu0 0.0
    %628 = vmatpush.msra.mxu0 0.0
    %629 = vmatpush.msra.mxu0 0.0
    %630 = vmatpush.msra.mxu0 %v236
    %631 = vmatpush.msra.mxu0 %v234
    %632 = vmatpush.msra.mxu0 %v232
    %633 = vmatpush.msra.mxu0 %v230
    %634 = vmatpush.msra.mxu0 %v228
    %635 = vmatpush.msra.mxu0 %v226
    %636 = vmatmul.f32.gmra.mxu0 %v618
    %v637 = vpop.f32.mrf.mxu0
    %v638 = vadd.f32 0.0, %v637
    %639 = vdwg.mxu0
    %640 = vmatpush.msra.mxu0 0.0
    %641 = vmatpush.msra.mxu0 0.0
    %642 = vmatpush.msra.mxu0 0.0
    %643 = vmatpush.msra.mxu0 0.0
    %644 = vmatpush.msra.mxu0 0.0
    %645 = vmatpush.msra.mxu0 0.0
    %646 = vmatpush.msra.mxu0 0.0
    %647 = vmatpush.msra.mxu0 0.0
    %648 = vmatpush.msra.mxu0 0.0
    %649 = vmatpush.msra.mxu0 0.0
    %650 = vmatpush.msra.mxu0 %v237
    %651 = vmatpush.msra.mxu0 %v235
    %652 = vmatpush.msra.mxu0 %v233
    %653 = vmatpush.msra.mxu0 %v231
    %654 = vmatpush.msra.mxu0 %v229
    %655 = vmatpush.msra.mxu0 %v227
    %656 = vmatmul.f32.gmra.mxu0 %v618
    %v657 = vpop.f32.mrf.mxu0
    %v658 = vadd.f32 0.0, %v657
    %659 = vdwg.mxu0
    %v660 = vadd.f32 %v613, %v638
    %v661 = vadd.f32 %v614, %v658
    %v662 = vxor.u32 %v660, 2147483648
    %v663 = vmul.f32 %v662, 1.442695
    %v664 = vpow.pop %v663
    %v665 = vadd.f32 %v664, 1.0
    %v666 = vrcp.pop %v665
    %v667 = vmul.f32 %v665, %v666
    %v668 = vsub.f32 1.0, %v667
    %v669 = vmul.f32 %v666, %v668
    %v670 = vadd.f32 %v666, %v669
    %vm671 = vweird.f32 %v665
    %vm672 = vweird.f32 %v666
    %vm673 = vmor %vm671, %vm672
    %v674 = vsel %vm673, %v666, %v670
    %v675 = vand.u32 2147483647, %v665
    %vm676 = vcmp.eq.f32.partialorder %v675, 8.507059e+37
    %v677 = vand.u32 %v665, 2147483648
    %v678 = vor.u32 1.1754944e-38, %v677
    %v679 = vsel %vm676, %v678, %v674
    %v680 = vmul.f32 1.0, %v679
    %v681 = vtanh.pop %v660
    %v682 = vtanh.pop %v661
    %v683 = vxor.u32 %v661, 2147483648
    %v684 = vmul.f32 %v683, 1.442695
    %v685 = vpow.pop %v684
    %v686 = vadd.f32 %v685, 1.0
    %v687 = vrcp.pop %v686
    %v688 = vmul.f32 %v686, %v687
    %v689 = vsub.f32 1.0, %v688
    %v690 = vmul.f32 %v687, %v689
    %v691 = vadd.f32 %v687, %v690
    %vm692 = vweird.f32 %v686
    %vm693 = vweird.f32 %v687
    %vm694 = vmor %vm692, %vm693
    %v695 = vsel %vm694, %v687, %v691
    %v696 = vand.u32 2147483647, %v686
    %vm697 = vcmp.eq.f32.partialorder %v696, 8.507059e+37
    %v698 = vand.u32 %v686, 2147483648
    %v699 = vor.u32 1.1754944e-38, %v698
    %v700 = vsel %vm697, %v699, %v695
    %v701 = vmul.f32 1.0, %v700
    %v702 = vmul.f32 %v680, %v339
    %705 = vrot.lane.b32.xlu0 %v681, 32
    %v706 = vpop.permute.xlu0 %705
    %707 = vrot.lane.b32.xlu0 %v682, 32
    %v708 = vpop.permute.xlu0 %707
    %v709 = vsel %vm331, %v706, %v708
    %v711 = vmul.f32 %v680, %v709
    %713 = vrot.lane.b32.xlu0 %v711, 48
    %v714 = vpop.permute.xlu0 %713
    %v716 = vadd.f32 %v702, %v714
    %v717 = vtanh.pop %v716
    %719 = vrot.lane.b32.xlu0 %v717, 96
    %v720 = vpop.permute.xlu0 %719
    %v722 = vmul.f32 %v701, %v720
    %724 = vrot.lane.b32.xlu0 %v339, 80
    %v725 = vpop.permute.xlu0 %724
    %v727 = vsel %vm238, %v725, %v716
    %v729 = vsel %vm363, %v727, 0
    %731 = vmatpush.msra.mxu0 0.0
    %732 = vmatpush.msra.mxu0 0.0
    %733 = vmatpush.msra.mxu0 0.0
    %734 = vmatpush.msra.mxu0 0.0
    %735 = vmatpush.msra.mxu0 %v358
    %736 = vmatpush.msra.mxu0 %v357
    %737 = vmatpush.msra.mxu0 %v356
    %738 = vmatpush.msra.mxu0 %v355
    %739 = vmatpush.msra.mxu0 %v354
    %740 = vmatpush.msra.mxu0 %v353
    %741 = vmatpush.msra.mxu0 %v352
    %742 = vmatpush.msra.mxu0 %v351
    %743 = vmatpush.msra.mxu0 %v350
    %744 = vmatpush.msra.mxu0 %v349
    %745 = vmatpush.msra.mxu0 %v348
    %746 = vmatpush.msra.mxu0 %v347
    %747 = vmatmul.f32.gmra.mxu0 %v729
    %v748 = vpop.f32.mrf.mxu0
    %v749 = vadd.f32 %v361, %v748
    %750 = vdwg.mxu0
    %v751 = vmax.f32 %v749, 0.0
    %v753 = vsel %vm331, %v751, 0
    %755 = vmatpush.msra.mxu0 0.0
    %756 = vmatpush.msra.mxu0 0.0
    %757 = vmatpush.msra.mxu0 0.0
    %758 = vmatpush.msra.mxu0 0.0
    %759 = vmatpush.msra.mxu0 0.0
    %760 = vmatpush.msra.mxu0 0.0
    %761 = vmatpush.msra.mxu0 0.0
    %762 = vmatpush.msra.mxu0 0.0
    %763 = vmatpush.msra.mxu0 0.0
    %764 = vmatpush.msra.mxu0 0.0
    %765 = vmatpush.msra.mxu0 0.0
    %766 = vmatpush.msra.mxu0 0.0
    %767 = vmatpush.msra.mxu0 %v391
    %768 = vmatpush.msra.mxu0 %v390
    %769 = vmatpush.msra.mxu0 %v389
    %770 = vmatpush.msra.mxu0 %v388
    %771 = vmatmul.f32.gmra.mxu0 %v753
    %v772 = vpop.f32.mrf.mxu0
    %v773 = vadd.f32 %v394, %v772
    %774 = vdwg.mxu0
    %v775 = vsel %vm363, %v773, -inf
    %776 = vmax.xlane.f32.xlu0 %v775
    %v777 = vpop.xlane.xlu0 %776
    %v778 = vsub.f32 %v773, %v777
    %v779 = vmul.f32 %v778, 1.442695
    %v780 = vpow.pop %v779
    %v781 = vsel %vm363, %v780, 0.0
    %782 = vadd.xlane.f32.xlu0 %v781
    %v783 = vpop.xlane.xlu0 %782
    %v784 = vrcp.pop %v783
    %v785 = vmul.f32 %v780, %v784
    %v786 = vmul.f32 %v785, %v727
    %v788 = vsel %vm363, %v786, 0
    %790 = vmatpush.msra.mxu0 0.0
    %791 = vmatpush.msra.mxu0 0.0
    %792 = vmatpush.msra.mxu0 0.0
    %793 = vmatpush.msra.mxu0 0.0
    %794 = vmatpush.msra.mxu0 %v442
    %795 = vmatpush.msra.mxu0 %v441
    %796 = vmatpush.msra.mxu0 %v440
    %797 = vmatpush.msra.mxu0 %v439
    %798 = vmatpush.msra.mxu0 %v438
    %799 = vmatpush.msra.mxu0 %v437
    %800 = vmatpush.msra.mxu0 %v436
    %801 = vmatpush.msra.mxu0 %v435
    %802 = vmatpush.msra.mxu0 %v434
    %803 = vmatpush.msra.mxu0 %v433
    %804 = vmatpush.msra.mxu0 %v432
    %805 = vmatpush.msra.mxu0 %v431
    %806 = vmatmul.f32.gmra.mxu0 %v788
    %v807 = vpop.f32.mrf.mxu0
    %v808 = vadd.f32 %v445, %v807
    %809 = vdwg.mxu0
    %v810 = vmax.f32 %v808, 0.0
    %v812 = vsel %vm331, %v810, 0
    %814 = vmatpush.msra.mxu0 0.0
    %815 = vmatpush.msra.mxu0 0.0
    %816 = vmatpush.msra.mxu0 0.0
    %817 = vmatpush.msra.mxu0 0.0
    %818 = vmatpush.msra.mxu0 0.0
    %819 = vmatpush.msra.mxu0 0.0
    %820 = vmatpush.msra.mxu0 0.0
    %821 = vmatpush.msra.mxu0 0.0
    %822 = vmatpush.msra.mxu0 0.0
    %823 = vmatpush.msra.mxu0 0.0
    %824 = vmatpush.msra.mxu0 0.0
    %825 = vmatpush.msra.mxu0 0.0
    %826 = vmatpush.msra.mxu0 %v474
    %827 = vmatpush.msra.mxu0 %v473
    %828 = vmatpush.msra.mxu0 %v472
    %829 = vmatpush.msra.mxu0 %v471
    %830 = vmatmul.f32.gmra.mxu0 %v812
    %v831 = vpop.f32.mrf.mxu0
    %v832 = vadd.f32 %v477, %v831
    %833 = vdwg.mxu0
    %v834 = vtanh.pop %v832
    %836 = vrot.lane.b32.xlu0 %v609, 96
    %v837 = vpop.permute.xlu0 %836
    %v839 = vsel %vm363, %v786, %v837
    %840 = vmatpush.msra.mxu0 %v519
    %841 = vmatpush.msra.mxu0 %v518
    %842 = vmatpush.msra.mxu0 %v517
    %843 = vmatpush.msra.mxu0 %v516
    %844 = vmatpush.msra.mxu0 %v515
    %845 = vmatpush.msra.mxu0 %v514
    %846 = vmatpush.msra.mxu0 %v513
    %847 = vmatpush.msra.mxu0 %v512
    %848 = vmatpush.msra.mxu0 %v511
    %849 = vmatpush.msra.mxu0 %v510
    %850 = vmatpush.msra.mxu0 %v509
    %851 = vmatpush.msra.mxu0 %v508
    %852 = vmatpush.msra.mxu0 %v507
    %853 = vmatpush.msra.mxu0 %v506
    %854 = vmatpush.msra.mxu0 %v505
    %855 = vmatpush.msra.mxu0 %v504
    %856 = vmatmul.f32.gmra.mxu0 %v839
    %v857 = vpop.f32.mrf.mxu0
    %v858 = vadd.f32 %v522, %v857
    %859 = vdwg.mxu0
    %v860 = vmax.f32 %v858, 0.0
    %v862 = vsel %vm205, %v860, 0
    %864 = vmatpush.msra.mxu0 0.0
    %865 = vmatpush.msra.mxu0 0.0
    %866 = vmatpush.msra.mxu0 0.0
    %867 = vmatpush.msra.mxu0 0.0
    %868 = vmatpush.msra.mxu0 0.0
    %869 = vmatpush.msra.mxu0 0.0
    %870 = vmatpush.msra.mxu0 0.0
    %871 = vmatpush.msra.mxu0 0.0
    %872 = vmatpush.msra.mxu0 %v552
    %873 = vmatpush.msra.mxu0 %v551
    %874 = vmatpush.msra.mxu0 %v550
    %875 = vmatpush.msra.mxu0 %v549
    %876 = vmatpush.msra.mxu0 %v548
    %877 = vmatpush.msra.mxu0 %v547
    %878 = vmatpush.msra.mxu0 %v546
    %879 = vmatpush.msra.mxu0 %v545
    %880 = vmatmul.f32.gmra.mxu0 %v862
    %v881 = vpop.f32.mrf.mxu0
    %v882 = vadd.f32 %v555, %v881
    %883 = vdwg.mxu0
    %v884 = vxor.u32 %v882, 2147483648
    %v885 = vmul.f32 %v884, 1.442695
    %v886 = vpow.pop %v885
    %v887 = vadd.f32 %v886, 1.0
    %v888 = vrcp.pop %v887
    %v889 = vmul.f32 %v887, %v888
    %v890 = vsub.f32 1.0, %v889
    %v891 = vmul.f32 %v888, %v890
    %v892 = vadd.f32 %v888, %v891
    %vm893 = vweird.f32 %v887
    %vm894 = vweird.f32 %v888
    %vm895 = vmor %vm893, %vm894
    %v896 = vsel %vm895, %v888, %v892
    %v897 = vand.u32 2147483647, %v887
    %vm898 = vcmp.eq.f32.partialorder %v897, 8.507059e+37
    %v899 = vand.u32 %v887, 2147483648
    %v900 = vor.u32 1.1754944e-38, %v899
    %v901 = vsel %vm898, %v900, %v896
    %v902 = vmul.f32 1.0, %v901
    %v903 = vmul.f32 %v902, %v609
    %905 = vrot.lane.b32.xlu0 %v834, 32
    %v906 = vpop.permute.xlu0 %905
    %v908 = vmul.f32 %v902, %v906
    %910 = vrot.lane.b32.xlu0 %v908, 96
    %v911 = vpop.permute.xlu0 %910
    %v913 = vadd.f32 %v903, %v911
    %s914 = smul.u32 2, 2
    %s915 = smul.addr %s914, 8
    %s916 = scalar_lea.vmem [#allocation2], %s915
    %v917 = vld [vmem:[%s916] sm:$0xff]
    %v918 = vld [vmem:[%s916 + $0x8] sm:$0xff]
    %920 = vrot.lane.b32.xlu0 %v722, 112
    %v921 = vpop.permute.xlu0 %920
    %v922 = vsel %vm238, %v921, 0
    %924 = vmatpush.msra.mxu0 0.0
    %925 = vmatpush.msra.mxu0 0.0
    %926 = vmatpush.msra.mxu0 0.0
    %927 = vmatpush.msra.mxu0 0.0
    %928 = vmatpush.msra.mxu0 0.0
    %929 = vmatpush.msra.mxu0 0.0
    %930 = vmatpush.msra.mxu0 0.0
    %931 = vmatpush.msra.mxu0 0.0
    %932 = vmatpush.msra.mxu0 0.0
    %933 = vmatpush.msra.mxu0 0.0
    %934 = vmatpush.msra.mxu0 %v236
    %935 = vmatpush.msra.mxu0 %v234
    %936 = vmatpush.msra.mxu0 %v232
    %937 = vmatpush.msra.mxu0 %v230
    %938 = vmatpush.msra.mxu0 %v228
    %939 = vmatpush.msra.mxu0 %v226
    %940 = vmatmul.f32.gmra.mxu0 %v922
    %v941 = vpop.f32.mrf.mxu0
    %v942 = vadd.f32 0.0, %v941
    %943 = vdwg.mxu0
    %944 = vmatpush.msra.mxu0 0.0
    %945 = vmatpush.msra.mxu0 0.0
    %946 = vmatpush.msra.mxu0 0.0
    %947 = vmatpush.msra.mxu0 0.0
    %948 = vmatpush.msra.mxu0 0.0
    %949 = vmatpush.msra.mxu0 0.0
    %950 = vmatpush.msra.mxu0 0.0
    %951 = vmatpush.msra.mxu0 0.0
    %952 = vmatpush.msra.mxu0 0.0
    %953 = vmatpush.msra.mxu0 0.0
    %954 = vmatpush.msra.mxu0 %v237
    %955 = vmatpush.msra.mxu0 %v235
    %956 = vmatpush.msra.mxu0 %v233
    %957 = vmatpush.msra.mxu0 %v231
    %958 = vmatpush.msra.mxu0 %v229
    %959 = vmatpush.msra.mxu0 %v227
    %960 = vmatmul.f32.gmra.mxu0 %v922
    %v961 = vpop.f32.mrf.mxu0
    %v962 = vadd.f32 0.0, %v961
    %963 = vdwg.mxu0
    %v964 = vadd.f32 %v917, %v942
    %v965 = vadd.f32 %v918, %v962
    %v966 = vxor.u32 %v964, 2147483648
    %v967 = vmul.f32 %v966, 1.442695
    %v968 = vpow.pop %v967
    %v969 = vadd.f32 %v968, 1.0
    %v970 = vrcp.pop %v969
    %v971 = vmul.f32 %v969, %v970
    %v972 = vsub.f32 1.0, %v971
    %v973 = vmul.f32 %v970, %v972
    %v974 = vadd.f32 %v970, %v973
    %vm975 = vweird.f32 %v969
    %vm976 = vweird.f32 %v970
    %vm977 = vmor %vm975, %vm976
    %v978 = vsel %vm977, %v970, %v974
    %v979 = vand.u32 2147483647, %v969
    %vm980 = vcmp.eq.f32.partialorder %v979, 8.507059e+37
    %v981 = vand.u32 %v969, 2147483648
    %v982 = vor.u32 1.1754944e-38, %v981
    %v983 = vsel %vm980, %v982, %v978
    %v984 = vmul.f32 1.0, %v983
    %v985 = vtanh.pop %v964
    %v986 = vtanh.pop %v965
    %v987 = vxor.u32 %v965, 2147483648
    %v988 = vmul.f32 %v987, 1.442695
    %v989 = vpow.pop %v988
    %v990 = vadd.f32 %v989, 1.0
    %v991 = vrcp.pop %v990
    %v992 = vmul.f32 %v990, %v991
    %v993 = vsub.f32 1.0, %v992
    %v994 = vmul.f32 %v991, %v993
    %v995 = vadd.f32 %v991, %v994
    %vm996 = vweird.f32 %v990
    %vm997 = vweird.f32 %v991
    %vm998 = vmor %vm996, %vm997
    %v999 = vsel %vm998, %v991, %v995
    %v1000 = vand.u32 2147483647, %v990
    %vm1001 = vcmp.eq.f32.partialorder %v1000, 8.507059e+37
    %v1002 = vand.u32 %v990, 2147483648
    %v1003 = vor.u32 1.1754944e-38, %v1002
    %v1004 = vsel %vm1001, %v1003, %v999
    %v1005 = vmul.f32 1.0, %v1004
    %v1006 = vmul.f32 %v984, %v716
    %1009 = vrot.lane.b32.xlu0 %v985, 32
    %v1010 = vpop.permute.xlu0 %1009
    %1011 = vrot.lane.b32.xlu0 %v986, 32
    %v1012 = vpop.permute.xlu0 %1011
    %v1013 = vsel %vm331, %v1010, %v1012
    %v1015 = vmul.f32 %v984, %v1013
    %1017 = vrot.lane.b32.xlu0 %v1015, 48
    %v1018 = vpop.permute.xlu0 %1017
    %v1020 = vadd.f32 %v1006, %v1018
    %v1021 = vtanh.pop %v1020
    %1023 = vrot.lane.b32.xlu0 %v1021, 96
    %v1024 = vpop.permute.xlu0 %1023
    %v1026 = vmul.f32 %v1005, %v1024
    %1028 = vrot.lane.b32.xlu0 %v716, 80
    %v1029 = vpop.permute.xlu0 %1028
    %v1031 = vsel %vm238, %v1029, %v1020
    %v1033 = vsel %vm363, %v1031, 0
    %1035 = vmatpush.msra.mxu0 0.0
    %1036 = vmatpush.msra.mxu0 0.0
    %1037 = vmatpush.msra.mxu0 0.0
    %1038 = vmatpush.msra.mxu0 0.0
    %1039 = vmatpush.msra.mxu0 %v358
    %1040 = vmatpush.msra.mxu0 %v357
    %1041 = vmatpush.msra.mxu0 %v356
    %1042 = vmatpush.msra.mxu0 %v355
    %1043 = vmatpush.msra.mxu0 %v354
    %1044 = vmatpush.msra.mxu0 %v353
    %1045 = vmatpush.msra.mxu0 %v352
    %1046 = vmatpush.msra.mxu0 %v351
    %1047 = vmatpush.msra.mxu0 %v350
    %1048 = vmatpush.msra.mxu0 %v349
    %1049 = vmatpush.msra.mxu0 %v348
    %1050 = vmatpush.msra.mxu0 %v347
    %1051 = vmatmul.f32.gmra.mxu0 %v1033
    %v1052 = vpop.f32.mrf.mxu0
    %v1053 = vadd.f32 %v361, %v1052
    %1054 = vdwg.mxu0
    %v1055 = vmax.f32 %v1053, 0.0
    %v1057 = vsel %vm331, %v1055, 0
    %1059 = vmatpush.msra.mxu0 0.0
    %1060 = vmatpush.msra.mxu0 0.0
    %1061 = vmatpush.msra.mxu0 0.0
    %1062 = vmatpush.msra.mxu0 0.0
    %1063 = vmatpush.msra.mxu0 0.0
    %1064 = vmatpush.msra.mxu0 0.0
    %1065 = vmatpush.msra.mxu0 0.0
    %1066 = vmatpush.msra.mxu0 0.0
    %1067 = vmatpush.msra.mxu0 0.0
    %1068 = vmatpush.msra.mxu0 0.0
    %1069 = vmatpush.msra.mxu0 0.0
    %1070 = vmatpush.msra.mxu0 0.0
    %1071 = vmatpush.msra.mxu0 %v391
    %1072 = vmatpush.msra.mxu0 %v390
    %1073 = vmatpush.msra.mxu0 %v389
    %1074 = vmatpush.msra.mxu0 %v388
    %1075 = vmatmul.f32.gmra.mxu0 %v1057
    %v1076 = vpop.f32.mrf.mxu0
    %v1077 = vadd.f32 %v394, %v1076
    %1078 = vdwg.mxu0
    %v1079 = vsel %vm363, %v1077, -inf
    %1080 = vmax.xlane.f32.xlu0 %v1079
    %v1081 = vpop.xlane.xlu0 %1080
    %v1082 = vsub.f32 %v1077, %v1081
    %v1083 = vmul.f32 %v1082, 1.442695
    %v1084 = vpow.pop %v1083
    %v1085 = vsel %vm363, %v1084, 0.0
    %1086 = vadd.xlane.f32.xlu0 %v1085
    %v1087 = vpop.xlane.xlu0 %1086
    %v1088 = vrcp.pop %v1087
    %v1089 = vmul.f32 %v1084, %v1088
    %v1090 = vmul.f32 %v1089, %v1031
    %v1092 = vsel %vm363, %v1090, 0
    %1094 = vmatpush.msra.mxu0 0.0
    %1095 = vmatpush.msra.mxu0 0.0
    %1096 = vmatpush.msra.mxu0 0.0
    %1097 = vmatpush.msra.mxu0 0.0
    %1098 = vmatpush.msra.mxu0 %v442
    %1099 = vmatpush.msra.mxu0 %v441
    %1100 = vmatpush.msra.mxu0 %v440
    %1101 = vmatpush.msra.mxu0 %v439
    %1102 = vmatpush.msra.mxu0 %v438
    %1103 = vmatpush.msra.mxu0 %v437
    %1104 = vmatpush.msra.mxu0 %v436
    %1105 = vmatpush.msra.mxu0 %v435
    %1106 = vmatpush.msra.mxu0 %v434
    %1107 = vmatpush.msra.mxu0 %v433
    %1108 = vmatpush.msra.mxu0 %v432
    %1109 = vmatpush.msra.mxu0 %v431
    %1110 = vmatmul.f32.gmra.mxu0 %v1092
    %v1111 = vpop.f32.mrf.mxu0
    %v1112 = vadd.f32 %v445, %v1111
    %1113 = vdwg.mxu0
    %v1114 = vmax.f32 %v1112, 0.0
    %v1116 = vsel %vm331, %v1114, 0
    %1118 = vmatpush.msra.mxu0 0.0
    %1119 = vmatpush.msra.mxu0 0.0
    %1120 = vmatpush.msra.mxu0 0.0
    %1121 = vmatpush.msra.mxu0 0.0
    %1122 = vmatpush.msra.mxu0 0.0
    %1123 = vmatpush.msra.mxu0 0.0
    %1124 = vmatpush.msra.mxu0 0.0
    %1125 = vmatpush.msra.mxu0 0.0
    %1126 = vmatpush.msra.mxu0 0.0
    %1127 = vmatpush.msra.mxu0 0.0
    %1128 = vmatpush.msra.mxu0 0.0
    %1129 = vmatpush.msra.mxu0 0.0
    %1130 = vmatpush.msra.mxu0 %v474
    %1131 = vmatpush.msra.mxu0 %v473
    %1132 = vmatpush.msra.mxu0 %v472
    %1133 = vmatpush.msra.mxu0 %v471
    %1134 = vmatmul.f32.gmra.mxu0 %v1116
    %v1135 = vpop.f32.mrf.mxu0
    %v1136 = vadd.f32 %v477, %v1135
    %1137 = vdwg.mxu0
    %v1138 = vtanh.pop %v1136
    %1140 = vrot.lane.b32.xlu0 %v913, 96
    %v1141 = vpop.permute.xlu0 %1140
    %v1143 = vsel %vm363, %v1090, %v1141
    %1144 = vmatpush.msra.mxu0 %v519
    %1145 = vmatpush.msra.mxu0 %v518
    %1146 = vmatpush.msra.mxu0 %v517
    %1147 = vmatpush.msra.mxu0 %v516
    %1148 = vmatpush.msra.mxu0 %v515
    %1149 = vmatpush.msra.mxu0 %v514
    %1150 = vmatpush.msra.mxu0 %v513
    %1151 = vmatpush.msra.mxu0 %v512
    %1152 = vmatpush.msra.mxu0 %v511
    %1153 = vmatpush.msra.mxu0 %v510
    %1154 = vmatpush.msra.mxu0 %v509
    %1155 = vmatpush.msra.mxu0 %v508
    %1156 = vmatpush.msra.mxu0 %v507
    %1157 = vmatpush.msra.mxu0 %v506
    %1158 = vmatpush.msra.mxu0 %v505
    %1159 = vmatpush.msra.mxu0 %v504
    %1160 = vmatmul.f32.gmra.mxu0 %v1143
    %v1161 = vpop.f32.mrf.mxu0
    %v1162 = vadd.f32 %v522, %v1161
    %1163 = vdwg.mxu0
    %v1164 = vmax.f32 %v1162, 0.0
    %v1166 = vsel %vm205, %v1164, 0
    %1168 = vmatpush.msra.mxu0 0.0
    %1169 = vmatpush.msra.mxu0 0.0
    %1170 = vmatpush.msra.mxu0 0.0
    %1171 = vmatpush.msra.mxu0 0.0
    %1172 = vmatpush.msra.mxu0 0.0
    %1173 = vmatpush.msra.mxu0 0.0
    %1174 = vmatpush.msra.mxu0 0.0
    %1175 = vmatpush.msra.mxu0 0.0
    %1176 = vmatpush.msra.mxu0 %v552
    %1177 = vmatpush.msra.mxu0 %v551
    %1178 = vmatpush.msra.mxu0 %v550
    %1179 = vmatpush.msra.mxu0 %v549
    %1180 = vmatpush.msra.mxu0 %v548
    %1181 = vmatpush.msra.mxu0 %v547
    %1182 = vmatpush.msra.mxu0 %v546
    %1183 = vmatpush.msra.mxu0 %v545
    %1184 = vmatmul.f32.gmra.mxu0 %v1166
    %v1185 = vpop.f32.mrf.mxu0
    %v1186 = vadd.f32 %v555, %v1185
    %1187 = vdwg.mxu0
    %v1188 = vxor.u32 %v1186, 2147483648
    %v1189 = vmul.f32 %v1188, 1.442695
    %v1190 = vpow.pop %v1189
    %v1191 = vadd.f32 %v1190, 1.0
    %v1192 = vrcp.pop %v1191
    %v1193 = vmul.f32 %v1191, %v1192
    %v1194 = vsub.f32 1.0, %v1193
    %v1195 = vmul.f32 %v1192, %v1194
    %v1196 = vadd.f32 %v1192, %v1195
    %vm1197 = vweird.f32 %v1191
    %vm1198 = vweird.f32 %v1192
    %vm1199 = vmor %vm1197, %vm1198
    %v1200 = vsel %vm1199, %v1192, %v1196
    %v1201 = vand.u32 2147483647, %v1191
    %vm1202 = vcmp.eq.f32.partialorder %v1201, 8.507059e+37
    %v1203 = vand.u32 %v1191, 2147483648
    %v1204 = vor.u32 1.1754944e-38, %v1203
    %v1205 = vsel %vm1202, %v1204, %v1200
    %v1206 = vmul.f32 1.0, %v1205
    %v1207 = vmul.f32 %v1206, %v913
    %1209 = vrot.lane.b32.xlu0 %v1138, 32
    %v1210 = vpop.permute.xlu0 %1209
    %v1212 = vmul.f32 %v1206, %v1210
    %1214 = vrot.lane.b32.xlu0 %v1212, 96
    %v1215 = vpop.permute.xlu0 %1214
    %v1217 = vadd.f32 %v1207, %v1215
    %s1218 = smul.u32 3, 2
    %s1219 = smul.addr %s1218, 8
    %s1220 = scalar_lea.vmem [#allocation2], %s1219
    %v1221 = vld [vmem:[%s1220] sm:$0xff]
    %v1222 = vld [vmem:[%s1220 + $0x8] sm:$0xff]
    %1224 = vrot.lane.b32.xlu0 %v1026, 112
    %v1225 = vpop.permute.xlu0 %1224
    %v1226 = vsel %vm238, %v1225, 0
    %1228 = vmatpush.msra.mxu0 0.0
    %1229 = vmatpush.msra.mxu0 0.0
    %1230 = vmatpush.msra.mxu0 0.0
    %1231 = vmatpush.msra.mxu0 0.0
    %1232 = vmatpush.msra.mxu0 0.0
    %1233 = vmatpush.msra.mxu0 0.0
    %1234 = vmatpush.msra.mxu0 0.0
    %1235 = vmatpush.msra.mxu0 0.0
    %1236 = vmatpush.msra.mxu0 0.0
    %1237 = vmatpush.msra.mxu0 0.0
    %1238 = vmatpush.msra.mxu0 %v236
    %1239 = vmatpush.msra.mxu0 %v234
    %1240 = vmatpush.msra.mxu0 %v232
    %1241 = vmatpush.msra.mxu0 %v230
    %1242 = vmatpush.msra.mxu0 %v228
    %1243 = vmatpush.msra.mxu0 %v226
    %1244 = vmatmul.f32.gmra.mxu0 %v1226
    %v1245 = vpop.f32.mrf.mxu0
    %v1246 = vadd.f32 0.0, %v1245
    %1247 = vdwg.mxu0
    %1248 = vmatpush.msra.mxu0 0.0
    %1249 = vmatpush.msra.mxu0 0.0
    %1250 = vmatpush.msra.mxu0 0.0
    %1251 = vmatpush.msra.mxu0 0.0
    %1252 = vmatpush.msra.mxu0 0.0
    %1253 = vmatpush.msra.mxu0 0.0
    %1254 = vmatpush.msra.mxu0 0.0
    %1255 = vmatpush.msra.mxu0 0.0
    %1256 = vmatpush.msra.mxu0 0.0
    %1257 = vmatpush.msra.mxu0 0.0
    %1258 = vmatpush.msra.mxu0 %v237
    %1259 = vmatpush.msra.mxu0 %v235
    %1260 = vmatpush.msra.mxu0 %v233
    %1261 = vmatpush.msra.mxu0 %v231
    %1262 = vmatpush.msra.mxu0 %v229
    %1263 = vmatpush.msra.mxu0 %v227
    %1264 = vmatmul.f32.gmra.mxu0 %v1226
    %v1265 = vpop.f32.mrf.mxu0
    %v1266 = vadd.f32 0.0, %v1265
    %1267 = vdwg.mxu0
    %v1268 = vadd.f32 %v1221, %v1246
    %v1269 = vadd.f32 %v1222, %v1266
    %v1270 = vxor.u32 %v1268, 2147483648
    %v1271 = vmul.f32 %v1270, 1.442695
    %v1272 = vpow.pop %v1271
    %v1273 = vadd.f32 %v1272, 1.0
    %v1274 = vrcp.pop %v1273
    %v1275 = vmul.f32 %v1273, %v1274
    %v1276 = vsub.f32 1.0, %v1275
    %v1277 = vmul.f32 %v1274, %v1276
    %v1278 = vadd.f32 %v1274, %v1277
    %vm1279 = vweird.f32 %v1273
    %vm1280 = vweird.f32 %v1274
    %vm1281 = vmor %vm1279, %vm1280
    %v1282 = vsel %vm1281, %v1274, %v1278
    %v1283 = vand.u32 2147483647, %v1273
    %vm1284 = vcmp.eq.f32.partialorder %v1283, 8.507059e+37
    %v1285 = vand.u32 %v1273, 2147483648
    %v1286 = vor.u32 1.1754944e-38, %v1285
    %v1287 = vsel %vm1284, %v1286, %v1282
    %v1288 = vmul.f32 1.0, %v1287
    %v1289 = vtanh.pop %v1268
    %v1290 = vtanh.pop %v1269
    %v1291 = vxor.u32 %v1269, 2147483648
    %v1292 = vmul.f32 %v1291, 1.442695
    %v1293 = vpow.pop %v1292
    %v1294 = vadd.f32 %v1293, 1.0
    %v1295 = vrcp.pop %v1294
    %v1296 = vmul.f32 %v1294, %v1295
    %v1297 = vsub.f32 1.0, %v1296
    %v1298 = vmul.f32 %v1295, %v1297
    %v1299 = vadd.f32 %v1295, %v1298
    %vm1300 = vweird.f32 %v1294
    %vm1301 = vweird.f32 %v1295
    %vm1302 = vmor %vm1300, %vm1301
    %v1303 = vsel %vm1302, %v1295, %v1299
    %v1304 = vand.u32 2147483647, %v1294
    %vm1305 = vcmp.eq.f32.partialorder %v1304, 8.507059e+37
    %v1306 = vand.u32 %v1294, 2147483648
    %v1307 = vor.u32 1.1754944e-38, %v1306
    %v1308 = vsel %vm1305, %v1307, %v1303
    %v1309 = vmul.f32 1.0, %v1308
    %v1310 = vmul.f32 %v1288, %v1020
    %1313 = vrot.lane.b32.xlu0 %v1289, 32
    %v1314 = vpop.permute.xlu0 %1313
    %1315 = vrot.lane.b32.xlu0 %v1290, 32
    %v1316 = vpop.permute.xlu0 %1315
    %v1317 = vsel %vm331, %v1314, %v1316
    %v1319 = vmul.f32 %v1288, %v1317
    %1321 = vrot.lane.b32.xlu0 %v1319, 48
    %v1322 = vpop.permute.xlu0 %1321
    %v1324 = vadd.f32 %v1310, %v1322
    %v1325 = vtanh.pop %v1324
    %1327 = vrot.lane.b32.xlu0 %v1325, 96
    %v1328 = vpop.permute.xlu0 %1327
    %v1330 = vmul.f32 %v1309, %v1328
    %1332 = vrot.lane.b32.xlu0 %v1020, 80
    %v1333 = vpop.permute.xlu0 %1332
    %v1335 = vsel %vm238, %v1333, %v1324
    %v1337 = vsel %vm363, %v1335, 0
    %1339 = vmatpush.msra.mxu0 0.0
    %1340 = vmatpush.msra.mxu0 0.0
    %1341 = vmatpush.msra.mxu0 0.0
    %1342 = vmatpush.msra.mxu0 0.0
    %1343 = vmatpush.msra.mxu0 %v358
    %1344 = vmatpush.msra.mxu0 %v357
    %1345 = vmatpush.msra.mxu0 %v356
    %1346 = vmatpush.msra.mxu0 %v355
    %1347 = vmatpush.msra.mxu0 %v354
    %1348 = vmatpush.msra.mxu0 %v353
    %1349 = vmatpush.msra.mxu0 %v352
    %1350 = vmatpush.msra.mxu0 %v351
    %1351 = vmatpush.msra.mxu0 %v350
    %1352 = vmatpush.msra.mxu0 %v349
    %1353 = vmatpush.msra.mxu0 %v348
    %1354 = vmatpush.msra.mxu0 %v347
    %1355 = vmatmul.f32.gmra.mxu0 %v1337
    %v1356 = vpop.f32.mrf.mxu0
    %v1357 = vadd.f32 %v361, %v1356
    %1358 = vdwg.mxu0
    %v1359 = vmax.f32 %v1357, 0.0
    %v1361 = vsel %vm331, %v1359, 0
    %1363 = vmatpush.msra.mxu0 0.0
    %1364 = vmatpush.msra.mxu0 0.0
    %1365 = vmatpush.msra.mxu0 0.0
    %1366 = vmatpush.msra.mxu0 0.0
    %1367 = vmatpush.msra.mxu0 0.0
    %1368 = vmatpush.msra.mxu0 0.0
    %1369 = vmatpush.msra.mxu0 0.0
    %1370 = vmatpush.msra.mxu0 0.0
    %1371 = vmatpush.msra.mxu0 0.0
    %1372 = vmatpush.msra.mxu0 0.0
    %1373 = vmatpush.msra.mxu0 0.0
    %1374 = vmatpush.msra.mxu0 0.0
    %1375 = vmatpush.msra.mxu0 %v391
    %1376 = vmatpush.msra.mxu0 %v390
    %1377 = vmatpush.msra.mxu0 %v389
    %1378 = vmatpush.msra.mxu0 %v388
    %1379 = vmatmul.f32.gmra.mxu0 %v1361
    %v1380 = vpop.f32.mrf.mxu0
    %v1381 = vadd.f32 %v394, %v1380
    %1382 = vdwg.mxu0
    %v1383 = vsel %vm363, %v1381, -inf
    %1384 = vmax.xlane.f32.xlu0 %v1383
    %v1385 = vpop.xlane.xlu0 %1384
    %v1386 = vsub.f32 %v1381, %v1385
    %v1387 = vmul.f32 %v1386, 1.442695
    %v1388 = vpow.pop %v1387
    %v1389 = vsel %vm363, %v1388, 0.0
    %1390 = vadd.xlane.f32.xlu0 %v1389
    %v1391 = vpop.xlane.xlu0 %1390
    %v1392 = vrcp.pop %v1391
    %v1393 = vmul.f32 %v1388, %v1392
    %v1394 = vmul.f32 %v1393, %v1335
    %v1396 = vsel %vm363, %v1394, 0
    %1398 = vmatpush.msra.mxu0 0.0
    %1399 = vmatpush.msra.mxu0 0.0
    %1400 = vmatpush.msra.mxu0 0.0
    %1401 = vmatpush.msra.mxu0 0.0
    %1402 = vmatpush.msra.mxu0 %v442
    %1403 = vmatpush.msra.mxu0 %v441
    %1404 = vmatpush.msra.mxu0 %v440
    %1405 = vmatpush.msra.mxu0 %v439
    %1406 = vmatpush.msra.mxu0 %v438
    %1407 = vmatpush.msra.mxu0 %v437
    %1408 = vmatpush.msra.mxu0 %v436
    %1409 = vmatpush.msra.mxu0 %v435
    %1410 = vmatpush.msra.mxu0 %v434
    %1411 = vmatpush.msra.mxu0 %v433
    %1412 = vmatpush.msra.mxu0 %v432
    %1413 = vmatpush.msra.mxu0 %v431
    %1414 = vmatmul.f32.gmra.mxu0 %v1396
    %v1415 = vpop.f32.mrf.mxu0
    %v1416 = vadd.f32 %v445, %v1415
    %1417 = vdwg.mxu0
    %v1418 = vmax.f32 %v1416, 0.0
    %v1420 = vsel %vm331, %v1418, 0
    %1422 = vmatpush.msra.mxu0 0.0
    %1423 = vmatpush.msra.mxu0 0.0
    %1424 = vmatpush.msra.mxu0 0.0
    %1425 = vmatpush.msra.mxu0 0.0
    %1426 = vmatpush.msra.mxu0 0.0
    %1427 = vmatpush.msra.mxu0 0.0
    %1428 = vmatpush.msra.mxu0 0.0
    %1429 = vmatpush.msra.mxu0 0.0
    %1430 = vmatpush.msra.mxu0 0.0
    %1431 = vmatpush.msra.mxu0 0.0
    %1432 = vmatpush.msra.mxu0 0.0
    %1433 = vmatpush.msra.mxu0 0.0
    %1434 = vmatpush.msra.mxu0 %v474
    %1435 = vmatpush.msra.mxu0 %v473
    %1436 = vmatpush.msra.mxu0 %v472
    %1437 = vmatpush.msra.mxu0 %v471
    %1438 = vmatmul.f32.gmra.mxu0 %v1420
    %v1439 = vpop.f32.mrf.mxu0
    %v1440 = vadd.f32 %v477, %v1439
    %1441 = vdwg.mxu0
    %v1442 = vtanh.pop %v1440
    %1444 = vrot.lane.b32.xlu0 %v1217, 96
    %v1445 = vpop.permute.xlu0 %1444
    %v1447 = vsel %vm363, %v1394, %v1445
    %1448 = vmatpush.msra.mxu0 %v519
    %1449 = vmatpush.msra.mxu0 %v518
    %1450 = vmatpush.msra.mxu0 %v517
    %1451 = vmatpush.msra.mxu0 %v516
    %1452 = vmatpush.msra.mxu0 %v515
    %1453 = vmatpush.msra.mxu0 %v514
    %1454 = vmatpush.msra.mxu0 %v513
    %1455 = vmatpush.msra.mxu0 %v512
    %1456 = vmatpush.msra.mxu0 %v511
    %1457 = vmatpush.msra.mxu0 %v510
    %1458 = vmatpush.msra.mxu0 %v509
    %1459 = vmatpush.msra.mxu0 %v508
    %1460 = vmatpush.msra.mxu0 %v507
    %1461 = vmatpush.msra.mxu0 %v506
    %1462 = vmatpush.msra.mxu0 %v505
    %1463 = vmatpush.msra.mxu0 %v504
    %1464 = vmatmul.f32.gmra.mxu0 %v1447
    %v1465 = vpop.f32.mrf.mxu0
    %v1466 = vadd.f32 %v522, %v1465
    %1467 = vdwg.mxu0
    %v1468 = vmax.f32 %v1466, 0.0
    %v1470 = vsel %vm205, %v1468, 0
    %1472 = vmatpush.msra.mxu0 0.0
    %1473 = vmatpush.msra.mxu0 0.0
    %1474 = vmatpush.msra.mxu0 0.0
    %1475 = vmatpush.msra.mxu0 0.0
    %1476 = vmatpush.msra.mxu0 0.0
    %1477 = vmatpush.msra.mxu0 0.0
    %1478 = vmatpush.msra.mxu0 0.0
    %1479 = vmatpush.msra.mxu0 0.0
    %1480 = vmatpush.msra.mxu0 %v552
    %1481 = vmatpush.msra.mxu0 %v551
    %1482 = vmatpush.msra.mxu0 %v550
    %1483 = vmatpush.msra.mxu0 %v549
    %1484 = vmatpush.msra.mxu0 %v548
    %1485 = vmatpush.msra.mxu0 %v547
    %1486 = vmatpush.msra.mxu0 %v546
    %1487 = vmatpush.msra.mxu0 %v545
    %1488 = vmatmul.f32.gmra.mxu0 %v1470
    %v1489 = vpop.f32.mrf.mxu0
    %v1490 = vadd.f32 %v555, %v1489
    %1491 = vdwg.mxu0
    %v1492 = vxor.u32 %v1490, 2147483648
    %v1493 = vmul.f32 %v1492, 1.442695
    %v1494 = vpow.pop %v1493
    %v1495 = vadd.f32 %v1494, 1.0
    %v1496 = vrcp.pop %v1495
    %v1497 = vmul.f32 %v1495, %v1496
    %v1498 = vsub.f32 1.0, %v1497
    %v1499 = vmul.f32 %v1496, %v1498
    %v1500 = vadd.f32 %v1496, %v1499
    %vm1501 = vweird.f32 %v1495
    %vm1502 = vweird.f32 %v1496
    %vm1503 = vmor %vm1501, %vm1502
    %v1504 = vsel %vm1503, %v1496, %v1500
    %v1505 = vand.u32 2147483647, %v1495
    %vm1506 = vcmp.eq.f32.partialorder %v1505, 8.507059e+37
    %v1507 = vand.u32 %v1495, 2147483648
    %v1508 = vor.u32 1.1754944e-38, %v1507
    %v1509 = vsel %vm1506, %v1508, %v1504
    %v1510 = vmul.f32 1.0, %v1509
    %v1511 = vmul.f32 %v1510, %v1217
    %1513 = vrot.lane.b32.xlu0 %v1442, 32
    %v1514 = vpop.permute.xlu0 %1513
    %v1516 = vmul.f32 %v1510, %v1514
    %1518 = vrot.lane.b32.xlu0 %v1516, 96
    %v1519 = vpop.permute.xlu0 %1518
    %v1521 = vadd.f32 %v1511, %v1519
    %s1522 = smul.u32 4, 2
    %s1523 = smul.addr %s1522, 8
    %s1524 = scalar_lea.vmem [#allocation2], %s1523
    %v1525 = vld [vmem:[%s1524] sm:$0xff]
    %v1526 = vld [vmem:[%s1524 + $0x8] sm:$0xff]
    %1528 = vrot.lane.b32.xlu0 %v1330, 112
    %v1529 = vpop.permute.xlu0 %1528
    %v1530 = vsel %vm238, %v1529, 0
    %1532 = vmatpush.msra.mxu0 0.0
    %1533 = vmatpush.msra.mxu0 0.0
    %1534 = vmatpush.msra.mxu0 0.0
    %1535 = vmatpush.msra.mxu0 0.0
    %1536 = vmatpush.msra.mxu0 0.0
    %1537 = vmatpush.msra.mxu0 0.0
    %1538 = vmatpush.msra.mxu0 0.0
    %1539 = vmatpush.msra.mxu0 0.0
    %1540 = vmatpush.msra.mxu0 0.0
    %1541 = vmatpush.msra.mxu0 0.0
    %1542 = vmatpush.msra.mxu0 %v236
    %1543 = vmatpush.msra.mxu0 %v234
    %1544 = vmatpush.msra.mxu0 %v232
    %1545 = vmatpush.msra.mxu0 %v230
    %1546 = vmatpush.msra.mxu0 %v228
    %1547 = vmatpush.msra.mxu0 %v226
    %1548 = vmatmul.f32.gmra.mxu0 %v1530
    %v1549 = vpop.f32.mrf.mxu0
    %v1550 = vadd.f32 0.0, %v1549
    %1551 = vdwg.mxu0
    %1552 = vmatpush.msra.mxu0 0.0
    %1553 = vmatpush.msra.mxu0 0.0
    %1554 = vmatpush.msra.mxu0 0.0
    %1555 = vmatpush.msra.mxu0 0.0
    %1556 = vmatpush.msra.mxu0 0.0
    %1557 = vmatpush.msra.mxu0 0.0
    %1558 = vmatpush.msra.mxu0 0.0
    %1559 = vmatpush.msra.mxu0 0.0
    %1560 = vmatpush.msra.mxu0 0.0
    %1561 = vmatpush.msra.mxu0 0.0
    %1562 = vmatpush.msra.mxu0 %v237
    %1563 = vmatpush.msra.mxu0 %v235
    %1564 = vmatpush.msra.mxu0 %v233
    %1565 = vmatpush.msra.mxu0 %v231
    %1566 = vmatpush.msra.mxu0 %v229
    %1567 = vmatpush.msra.mxu0 %v227
    %1568 = vmatmul.f32.gmra.mxu0 %v1530
    %v1569 = vpop.f32.mrf.mxu0
    %v1570 = vadd.f32 0.0, %v1569
    %1571 = vdwg.mxu0
    %v1572 = vadd.f32 %v1525, %v1550
    %v1573 = vadd.f32 %v1526, %v1570
    %v1574 = vxor.u32 %v1572, 2147483648
    %v1575 = vmul.f32 %v1574, 1.442695
    %v1576 = vpow.pop %v1575
    %v1577 = vadd.f32 %v1576, 1.0
    %v1578 = vrcp.pop %v1577
    %v1579 = vmul.f32 %v1577, %v1578
    %v1580 = vsub.f32 1.0, %v1579
    %v1581 = vmul.f32 %v1578, %v1580
    %v1582 = vadd.f32 %v1578, %v1581
    %vm1583 = vweird.f32 %v1577
    %vm1584 = vweird.f32 %v1578
    %vm1585 = vmor %vm1583, %vm1584
    %v1586 = vsel %vm1585, %v1578, %v1582
    %v1587 = vand.u32 2147483647, %v1577
    %vm1588 = vcmp.eq.f32.partialorder %v1587, 8.507059e+37
    %v1589 = vand.u32 %v1577, 2147483648
    %v1590 = vor.u32 1.1754944e-38, %v1589
    %v1591 = vsel %vm1588, %v1590, %v1586
    %v1592 = vmul.f32 1.0, %v1591
    %v1593 = vtanh.pop %v1572
    %v1594 = vtanh.pop %v1573
    %v1595 = vxor.u32 %v1573, 2147483648
    %v1596 = vmul.f32 %v1595, 1.442695
    %v1597 = vpow.pop %v1596
    %v1598 = vadd.f32 %v1597, 1.0
    %v1599 = vrcp.pop %v1598
    %v1600 = vmul.f32 %v1598, %v1599
    %v1601 = vsub.f32 1.0, %v1600
    %v1602 = vmul.f32 %v1599, %v1601
    %v1603 = vadd.f32 %v1599, %v1602
    %vm1604 = vweird.f32 %v1598
    %vm1605 = vweird.f32 %v1599
    %vm1606 = vmor %vm1604, %vm1605
    %v1607 = vsel %vm1606, %v1599, %v1603
    %v1608 = vand.u32 2147483647, %v1598
    %vm1609 = vcmp.eq.f32.partialorder %v1608, 8.507059e+37
    %v1610 = vand.u32 %v1598, 2147483648
    %v1611 = vor.u32 1.1754944e-38, %v1610
    %v1612 = vsel %vm1609, %v1611, %v1607
    %v1613 = vmul.f32 1.0, %v1612
    %v1614 = vmul.f32 %v1592, %v1324
    %1617 = vrot.lane.b32.xlu0 %v1593, 32
    %v1618 = vpop.permute.xlu0 %1617
    %1619 = vrot.lane.b32.xlu0 %v1594, 32
    %v1620 = vpop.permute.xlu0 %1619
    %v1621 = vsel %vm331, %v1618, %v1620
    %v1623 = vmul.f32 %v1592, %v1621
    %1625 = vrot.lane.b32.xlu0 %v1623, 48
    %v1626 = vpop.permute.xlu0 %1625
    %v1628 = vadd.f32 %v1614, %v1626
    %v1629 = vtanh.pop %v1628
    %1631 = vrot.lane.b32.xlu0 %v1629, 96
    %v1632 = vpop.permute.xlu0 %1631
    %v1634 = vmul.f32 %v1613, %v1632
    %1636 = vrot.lane.b32.xlu0 %v1324, 80
    %v1637 = vpop.permute.xlu0 %1636
    %v1639 = vsel %vm238, %v1637, %v1628
    %v1641 = vsel %vm363, %v1639, 0
    %1643 = vmatpush.msra.mxu0 0.0
    %1644 = vmatpush.msra.mxu0 0.0
    %1645 = vmatpush.msra.mxu0 0.0
    %1646 = vmatpush.msra.mxu0 0.0
    %1647 = vmatpush.msra.mxu0 %v358
    %1648 = vmatpush.msra.mxu0 %v357
    %1649 = vmatpush.msra.mxu0 %v356
    %1650 = vmatpush.msra.mxu0 %v355
    %1651 = vmatpush.msra.mxu0 %v354
    %1652 = vmatpush.msra.mxu0 %v353
    %1653 = vmatpush.msra.mxu0 %v352
    %1654 = vmatpush.msra.mxu0 %v351
    %1655 = vmatpush.msra.mxu0 %v350
    %1656 = vmatpush.msra.mxu0 %v349
    %1657 = vmatpush.msra.mxu0 %v348
    %1658 = vmatpush.msra.mxu0 %v347
    %1659 = vmatmul.f32.gmra.mxu0 %v1641
    %v1660 = vpop.f32.mrf.mxu0
    %v1661 = vadd.f32 %v361, %v1660
    %1662 = vdwg.mxu0
    %v1663 = vmax.f32 %v1661, 0.0
    %v1665 = vsel %vm331, %v1663, 0
    %1667 = vmatpush.msra.mxu0 0.0
    %1668 = vmatpush.msra.mxu0 0.0
    %1669 = vmatpush.msra.mxu0 0.0
    %1670 = vmatpush.msra.mxu0 0.0
    %1671 = vmatpush.msra.mxu0 0.0
    %1672 = vmatpush.msra.mxu0 0.0
    %1673 = vmatpush.msra.mxu0 0.0
    %1674 = vmatpush.msra.mxu0 0.0
    %1675 = vmatpush.msra.mxu0 0.0
    %1676 = vmatpush.msra.mxu0 0.0
    %1677 = vmatpush.msra.mxu0 0.0
    %1678 = vmatpush.msra.mxu0 0.0
    %1679 = vmatpush.msra.mxu0 %v391
    %1680 = vmatpush.msra.mxu0 %v390
    %1681 = vmatpush.msra.mxu0 %v389
    %1682 = vmatpush.msra.mxu0 %v388
    %1683 = vmatmul.f32.gmra.mxu0 %v1665
    %v1684 = vpop.f32.mrf.mxu0
    %v1685 = vadd.f32 %v394, %v1684
    %1686 = vdwg.mxu0
    %v1687 = vsel %vm363, %v1685, -inf
    %1688 = vmax.xlane.f32.xlu0 %v1687
    %v1689 = vpop.xlane.xlu0 %1688
    %v1690 = vsub.f32 %v1685, %v1689
    %v1691 = vmul.f32 %v1690, 1.442695
    %v1692 = vpow.pop %v1691
    %v1693 = vsel %vm363, %v1692, 0.0
    %1694 = vadd.xlane.f32.xlu0 %v1693
    %v1695 = vpop.xlane.xlu0 %1694
    %v1696 = vrcp.pop %v1695
    %v1697 = vmul.f32 %v1692, %v1696
    %v1698 = vmul.f32 %v1697, %v1639
    %v1700 = vsel %vm363, %v1698, 0
    %1702 = vmatpush.msra.mxu0 0.0
    %1703 = vmatpush.msra.mxu0 0.0
    %1704 = vmatpush.msra.mxu0 0.0
    %1705 = vmatpush.msra.mxu0 0.0
    %1706 = vmatpush.msra.mxu0 %v442
    %1707 = vmatpush.msra.mxu0 %v441
    %1708 = vmatpush.msra.mxu0 %v440
    %1709 = vmatpush.msra.mxu0 %v439
    %1710 = vmatpush.msra.mxu0 %v438
    %1711 = vmatpush.msra.mxu0 %v437
    %1712 = vmatpush.msra.mxu0 %v436
    %1713 = vmatpush.msra.mxu0 %v435
    %1714 = vmatpush.msra.mxu0 %v434
    %1715 = vmatpush.msra.mxu0 %v433
    %1716 = vmatpush.msra.mxu0 %v432
    %1717 = vmatpush.msra.mxu0 %v431
    %1718 = vmatmul.f32.gmra.mxu0 %v1700
    %v1719 = vpop.f32.mrf.mxu0
    %v1720 = vadd.f32 %v445, %v1719
    %1721 = vdwg.mxu0
    %v1722 = vmax.f32 %v1720, 0.0
    %v1724 = vsel %vm331, %v1722, 0
    %1726 = vmatpush.msra.mxu0 0.0
    %1727 = vmatpush.msra.mxu0 0.0
    %1728 = vmatpush.msra.mxu0 0.0
    %1729 = vmatpush.msra.mxu0 0.0
    %1730 = vmatpush.msra.mxu0 0.0
    %1731 = vmatpush.msra.mxu0 0.0
    %1732 = vmatpush.msra.mxu0 0.0
    %1733 = vmatpush.msra.mxu0 0.0
    %1734 = vmatpush.msra.mxu0 0.0
    %1735 = vmatpush.msra.mxu0 0.0
    %1736 = vmatpush.msra.mxu0 0.0
    %1737 = vmatpush.msra.mxu0 0.0
    %1738 = vmatpush.msra.mxu0 %v474
    %1739 = vmatpush.msra.mxu0 %v473
    %1740 = vmatpush.msra.mxu0 %v472
    %1741 = vmatpush.msra.mxu0 %v471
    %1742 = vmatmul.f32.gmra.mxu0 %v1724
    %v1743 = vpop.f32.mrf.mxu0
    %v1744 = vadd.f32 %v477, %v1743
    %1745 = vdwg.mxu0
    %v1746 = vtanh.pop %v1744
    %1748 = vrot.lane.b32.xlu0 %v1521, 96
    %v1749 = vpop.permute.xlu0 %1748
    %v1751 = vsel %vm363, %v1698, %v1749
    %1752 = vmatpush.msra.mxu0 %v519
    %1753 = vmatpush.msra.mxu0 %v518
    %1754 = vmatpush.msra.mxu0 %v517
    %1755 = vmatpush.msra.mxu0 %v516
    %1756 = vmatpush.msra.mxu0 %v515
    %1757 = vmatpush.msra.mxu0 %v514
    %1758 = vmatpush.msra.mxu0 %v513
    %1759 = vmatpush.msra.mxu0 %v512
    %1760 = vmatpush.msra.mxu0 %v511
    %1761 = vmatpush.msra.mxu0 %v510
    %1762 = vmatpush.msra.mxu0 %v509
    %1763 = vmatpush.msra.mxu0 %v508
    %1764 = vmatpush.msra.mxu0 %v507
    %1765 = vmatpush.msra.mxu0 %v506
    %1766 = vmatpush.msra.mxu0 %v505
    %1767 = vmatpush.msra.mxu0 %v504
    %1768 = vmatmul.f32.gmra.mxu0 %v1751
    %v1769 = vpop.f32.mrf.mxu0
    %v1770 = vadd.f32 %v522, %v1769
    %1771 = vdwg.mxu0
    %v1772 = vmax.f32 %v1770, 0.0
    %v1774 = vsel %vm205, %v1772, 0
    %1776 = vmatpush.msra.mxu0 0.0
    %1777 = vmatpush.msra.mxu0 0.0
    %1778 = vmatpush.msra.mxu0 0.0
    %1779 = vmatpush.msra.mxu0 0.0
    %1780 = vmatpush.msra.mxu0 0.0
    %1781 = vmatpush.msra.mxu0 0.0
    %1782 = vmatpush.msra.mxu0 0.0
    %1783 = vmatpush.msra.mxu0 0.0
    %1784 = vmatpush.msra.mxu0 %v552
    %1785 = vmatpush.msra.mxu0 %v551
    %1786 = vmatpush.msra.mxu0 %v550
    %1787 = vmatpush.msra.mxu0 %v549
    %1788 = vmatpush.msra.mxu0 %v548
    %1789 = vmatpush.msra.mxu0 %v547
    %1790 = vmatpush.msra.mxu0 %v546
    %1791 = vmatpush.msra.mxu0 %v545
    %1792 = vmatmul.f32.gmra.mxu0 %v1774
    %v1793 = vpop.f32.mrf.mxu0
    %v1794 = vadd.f32 %v555, %v1793
    %1795 = vdwg.mxu0
    %v1796 = vxor.u32 %v1794, 2147483648
    %v1797 = vmul.f32 %v1796, 1.442695
    %v1798 = vpow.pop %v1797
    %v1799 = vadd.f32 %v1798, 1.0
    %v1800 = vrcp.pop %v1799
    %v1801 = vmul.f32 %v1799, %v1800
    %v1802 = vsub.f32 1.0, %v1801
    %v1803 = vmul.f32 %v1800, %v1802
    %v1804 = vadd.f32 %v1800, %v1803
    %vm1805 = vweird.f32 %v1799
    %vm1806 = vweird.f32 %v1800
    %vm1807 = vmor %vm1805, %vm1806
    %v1808 = vsel %vm1807, %v1800, %v1804
    %v1809 = vand.u32 2147483647, %v1799
    %vm1810 = vcmp.eq.f32.partialorder %v1809, 8.507059e+37
    %v1811 = vand.u32 %v1799, 2147483648
    %v1812 = vor.u32 1.1754944e-38, %v1811
    %v1813 = vsel %vm1810, %v1812, %v1808
    %v1814 = vmul.f32 1.0, %v1813
    %v1815 = vmul.f32 %v1814, %v1521
    %1817 = vrot.lane.b32.xlu0 %v1746, 32
    %v1818 = vpop.permute.xlu0 %1817
    %v1820 = vmul.f32 %v1814, %v1818
    %1822 = vrot.lane.b32.xlu0 %v1820, 96
    %v1823 = vpop.permute.xlu0 %1822
    %v1825 = vadd.f32 %v1815, %v1823
    %s1826 = smul.u32 5, 2
    %s1827 = smul.addr %s1826, 8
    %s1828 = scalar_lea.vmem [#allocation2], %s1827
    %v1829 = vld [vmem:[%s1828] sm:$0xff]
    %v1830 = vld [vmem:[%s1828 + $0x8] sm:$0xff]
    %1832 = vrot.lane.b32.xlu0 %v1634, 112
    %v1833 = vpop.permute.xlu0 %1832
    %v1834 = vsel %vm238, %v1833, 0
    %1836 = vmatpush.msra.mxu0 0.0
    %1837 = vmatpush.msra.mxu0 0.0
    %1838 = vmatpush.msra.mxu0 0.0
    %1839 = vmatpush.msra.mxu0 0.0
    %1840 = vmatpush.msra.mxu0 0.0
    %1841 = vmatpush.msra.mxu0 0.0
    %1842 = vmatpush.msra.mxu0 0.0
    %1843 = vmatpush.msra.mxu0 0.0
    %1844 = vmatpush.msra.mxu0 0.0
    %1845 = vmatpush.msra.mxu0 0.0
    %1846 = vmatpush.msra.mxu0 %v236
    %1847 = vmatpush.msra.mxu0 %v234
    %1848 = vmatpush.msra.mxu0 %v232
    %1849 = vmatpush.msra.mxu0 %v230
    %1850 = vmatpush.msra.mxu0 %v228
    %1851 = vmatpush.msra.mxu0 %v226
    %1852 = vmatmul.f32.gmra.mxu0 %v1834
    %v1853 = vpop.f32.mrf.mxu0
    %v1854 = vadd.f32 0.0, %v1853
    %1855 = vdwg.mxu0
    %1856 = vmatpush.msra.mxu0 0.0
    %1857 = vmatpush.msra.mxu0 0.0
    %1858 = vmatpush.msra.mxu0 0.0
    %1859 = vmatpush.msra.mxu0 0.0
    %1860 = vmatpush.msra.mxu0 0.0
    %1861 = vmatpush.msra.mxu0 0.0
    %1862 = vmatpush.msra.mxu0 0.0
    %1863 = vmatpush.msra.mxu0 0.0
    %1864 = vmatpush.msra.mxu0 0.0
    %1865 = vmatpush.msra.mxu0 0.0
    %1866 = vmatpush.msra.mxu0 %v237
    %1867 = vmatpush.msra.mxu0 %v235
    %1868 = vmatpush.msra.mxu0 %v233
    %1869 = vmatpush.msra.mxu0 %v231
    %1870 = vmatpush.msra.mxu0 %v229
    %1871 = vmatpush.msra.mxu0 %v227
    %1872 = vmatmul.f32.gmra.mxu0 %v1834
    %v1873 = vpop.f32.mrf.mxu0
    %v1874 = vadd.f32 0.0, %v1873
    %1875 = vdwg.mxu0
    %v1876 = vadd.f32 %v1829, %v1854
    %v1877 = vadd.f32 %v1830, %v1874
    %v1878 = vxor.u32 %v1876, 2147483648
    %v1879 = vmul.f32 %v1878, 1.442695
    %v1880 = vpow.pop %v1879
    %v1881 = vadd.f32 %v1880, 1.0
    %v1882 = vrcp.pop %v1881
    %v1883 = vmul.f32 %v1881, %v1882
    %v1884 = vsub.f32 1.0, %v1883
    %v1885 = vmul.f32 %v1882, %v1884
    %v1886 = vadd.f32 %v1882, %v1885
    %vm1887 = vweird.f32 %v1881
    %vm1888 = vweird.f32 %v1882
    %vm1889 = vmor %vm1887, %vm1888
    %v1890 = vsel %vm1889, %v1882, %v1886
    %v1891 = vand.u32 2147483647, %v1881
    %vm1892 = vcmp.eq.f32.partialorder %v1891, 8.507059e+37
    %v1893 = vand.u32 %v1881, 2147483648
    %v1894 = vor.u32 1.1754944e-38, %v1893
    %v1895 = vsel %vm1892, %v1894, %v1890
    %v1896 = vmul.f32 1.0, %v1895
    %v1897 = vtanh.pop %v1876
    %v1898 = vtanh.pop %v1877
    %v1899 = vxor.u32 %v1877, 2147483648
    %v1900 = vmul.f32 %v1899, 1.442695
    %v1901 = vpow.pop %v1900
    %v1902 = vadd.f32 %v1901, 1.0
    %v1903 = vrcp.pop %v1902
    %v1904 = vmul.f32 %v1902, %v1903
    %v1905 = vsub.f32 1.0, %v1904
    %v1906 = vmul.f32 %v1903, %v1905
    %v1907 = vadd.f32 %v1903, %v1906
    %vm1908 = vweird.f32 %v1902
    %vm1909 = vweird.f32 %v1903
    %vm1910 = vmor %vm1908, %vm1909
    %v1911 = vsel %vm1910, %v1903, %v1907
    %v1912 = vand.u32 2147483647, %v1902
    %vm1913 = vcmp.eq.f32.partialorder %v1912, 8.507059e+37
    %v1914 = vand.u32 %v1902, 2147483648
    %v1915 = vor.u32 1.1754944e-38, %v1914
    %v1916 = vsel %vm1913, %v1915, %v1911
    %v1917 = vmul.f32 1.0, %v1916
    %v1918 = vmul.f32 %v1896, %v1628
    %1921 = vrot.lane.b32.xlu0 %v1897, 32
    %v1922 = vpop.permute.xlu0 %1921
    %1923 = vrot.lane.b32.xlu0 %v1898, 32
    %v1924 = vpop.permute.xlu0 %1923
    %v1925 = vsel %vm331, %v1922, %v1924
    %v1927 = vmul.f32 %v1896, %v1925
    %1929 = vrot.lane.b32.xlu0 %v1927, 48
    %v1930 = vpop.permute.xlu0 %1929
    %v1932 = vadd.f32 %v1918, %v1930
    %v1933 = vtanh.pop %v1932
    %1935 = vrot.lane.b32.xlu0 %v1933, 96
    %v1936 = vpop.permute.xlu0 %1935
    %v1938 = vmul.f32 %v1917, %v1936
    %1940 = vrot.lane.b32.xlu0 %v1628, 80
    %v1941 = vpop.permute.xlu0 %1940
    %v1943 = vsel %vm238, %v1941, %v1932
    %v1945 = vsel %vm363, %v1943, 0
    %1947 = vmatpush.msra.mxu0 0.0
    %1948 = vmatpush.msra.mxu0 0.0
    %1949 = vmatpush.msra.mxu0 0.0
    %1950 = vmatpush.msra.mxu0 0.0
    %1951 = vmatpush.msra.mxu0 %v358
    %1952 = vmatpush.msra.mxu0 %v357
    %1953 = vmatpush.msra.mxu0 %v356
    %1954 = vmatpush.msra.mxu0 %v355
    %1955 = vmatpush.msra.mxu0 %v354
    %1956 = vmatpush.msra.mxu0 %v353
    %1957 = vmatpush.msra.mxu0 %v352
    %1958 = vmatpush.msra.mxu0 %v351
    %1959 = vmatpush.msra.mxu0 %v350
    %1960 = vmatpush.msra.mxu0 %v349
    %1961 = vmatpush.msra.mxu0 %v348
    %1962 = vmatpush.msra.mxu0 %v347
    %1963 = vmatmul.f32.gmra.mxu0 %v1945
    %v1964 = vpop.f32.mrf.mxu0
    %v1965 = vadd.f32 %v361, %v1964
    %1966 = vdwg.mxu0
    %v1967 = vmax.f32 %v1965, 0.0
    %v1969 = vsel %vm331, %v1967, 0
    %1971 = vmatpush.msra.mxu0 0.0
    %1972 = vmatpush.msra.mxu0 0.0
    %1973 = vmatpush.msra.mxu0 0.0
    %1974 = vmatpush.msra.mxu0 0.0
    %1975 = vmatpush.msra.mxu0 0.0
    %1976 = vmatpush.msra.mxu0 0.0
    %1977 = vmatpush.msra.mxu0 0.0
    %1978 = vmatpush.msra.mxu0 0.0
    %1979 = vmatpush.msra.mxu0 0.0
    %1980 = vmatpush.msra.mxu0 0.0
    %1981 = vmatpush.msra.mxu0 0.0
    %1982 = vmatpush.msra.mxu0 0.0
    %1983 = vmatpush.msra.mxu0 %v391
    %1984 = vmatpush.msra.mxu0 %v390
    %1985 = vmatpush.msra.mxu0 %v389
    %1986 = vmatpush.msra.mxu0 %v388
    %1987 = vmatmul.f32.gmra.mxu0 %v1969
    %v1988 = vpop.f32.mrf.mxu0
    %v1989 = vadd.f32 %v394, %v1988
    %1990 = vdwg.mxu0
    %v1991 = vsel %vm363, %v1989, -inf
    %1992 = vmax.xlane.f32.xlu0 %v1991
    %v1993 = vpop.xlane.xlu0 %1992
    %v1994 = vsub.f32 %v1989, %v1993
    %v1995 = vmul.f32 %v1994, 1.442695
    %v1996 = vpow.pop %v1995
    %v1997 = vsel %vm363, %v1996, 0.0
    %1998 = vadd.xlane.f32.xlu0 %v1997
    %v1999 = vpop.xlane.xlu0 %1998
    %v2000 = vrcp.pop %v1999
    %v2001 = vmul.f32 %v1996, %v2000
    %v2002 = vmul.f32 %v2001, %v1943
    %v2004 = vsel %vm363, %v2002, 0
    %2006 = vmatpush.msra.mxu0 0.0
    %2007 = vmatpush.msra.mxu0 0.0
    %2008 = vmatpush.msra.mxu0 0.0
    %2009 = vmatpush.msra.mxu0 0.0
    %2010 = vmatpush.msra.mxu0 %v442
    %2011 = vmatpush.msra.mxu0 %v441
    %2012 = vmatpush.msra.mxu0 %v440
    %2013 = vmatpush.msra.mxu0 %v439
    %2014 = vmatpush.msra.mxu0 %v438
    %2015 = vmatpush.msra.mxu0 %v437
    %2016 = vmatpush.msra.mxu0 %v436
    %2017 = vmatpush.msra.mxu0 %v435
    %2018 = vmatpush.msra.mxu0 %v434
    %2019 = vmatpush.msra.mxu0 %v433
    %2020 = vmatpush.msra.mxu0 %v432
    %2021 = vmatpush.msra.mxu0 %v431
    %2022 = vmatmul.f32.gmra.mxu0 %v2004
    %v2023 = vpop.f32.mrf.mxu0
    %v2024 = vadd.f32 %v445, %v2023
    %2025 = vdwg.mxu0
    %v2026 = vmax.f32 %v2024, 0.0
    %v2028 = vsel %vm331, %v2026, 0
    %2030 = vmatpush.msra.mxu0 0.0
    %2031 = vmatpush.msra.mxu0 0.0
    %2032 = vmatpush.msra.mxu0 0.0
    %2033 = vmatpush.msra.mxu0 0.0
    %2034 = vmatpush.msra.mxu0 0.0
    %2035 = vmatpush.msra.mxu0 0.0
    %2036 = vmatpush.msra.mxu0 0.0
    %2037 = vmatpush.msra.mxu0 0.0
    %2038 = vmatpush.msra.mxu0 0.0
    %2039 = vmatpush.msra.mxu0 0.0
    %2040 = vmatpush.msra.mxu0 0.0
    %2041 = vmatpush.msra.mxu0 0.0
    %2042 = vmatpush.msra.mxu0 %v474
    %2043 = vmatpush.msra.mxu0 %v473
    %2044 = vmatpush.msra.mxu0 %v472
    %2045 = vmatpush.msra.mxu0 %v471
    %2046 = vmatmul.f32.gmra.mxu0 %v2028
    %v2047 = vpop.f32.mrf.mxu0
    %v2048 = vadd.f32 %v477, %v2047
    %2049 = vdwg.mxu0
    %v2050 = vtanh.pop %v2048
    %2052 = vrot.lane.b32.xlu0 %v1825, 96
    %v2053 = vpop.permute.xlu0 %2052
    %v2055 = vsel %vm363, %v2002, %v2053
    %2056 = vmatpush.msra.mxu0 %v519
    %2057 = vmatpush.msra.mxu0 %v518
    %2058 = vmatpush.msra.mxu0 %v517
    %2059 = vmatpush.msra.mxu0 %v516
    %2060 = vmatpush.msra.mxu0 %v515
    %2061 = vmatpush.msra.mxu0 %v514
    %2062 = vmatpush.msra.mxu0 %v513
    %2063 = vmatpush.msra.mxu0 %v512
    %2064 = vmatpush.msra.mxu0 %v511
    %2065 = vmatpush.msra.mxu0 %v510
    %2066 = vmatpush.msra.mxu0 %v509
    %2067 = vmatpush.msra.mxu0 %v508
    %2068 = vmatpush.msra.mxu0 %v507
    %2069 = vmatpush.msra.mxu0 %v506
    %2070 = vmatpush.msra.mxu0 %v505
    %2071 = vmatpush.msra.mxu0 %v504
    %2072 = vmatmul.f32.gmra.mxu0 %v2055
    %v2073 = vpop.f32.mrf.mxu0
    %v2074 = vadd.f32 %v522, %v2073
    %2075 = vdwg.mxu0
    %v2076 = vmax.f32 %v2074, 0.0
    %v2078 = vsel %vm205, %v2076, 0
    %2080 = vmatpush.msra.mxu0 0.0
    %2081 = vmatpush.msra.mxu0 0.0
    %2082 = vmatpush.msra.mxu0 0.0
    %2083 = vmatpush.msra.mxu0 0.0
    %2084 = vmatpush.msra.mxu0 0.0
    %2085 = vmatpush.msra.mxu0 0.0
    %2086 = vmatpush.msra.mxu0 0.0
    %2087 = vmatpush.msra.mxu0 0.0
    %2088 = vmatpush.msra.mxu0 %v552
    %2089 = vmatpush.msra.mxu0 %v551
    %2090 = vmatpush.msra.mxu0 %v550
    %2091 = vmatpush.msra.mxu0 %v549
    %2092 = vmatpush.msra.mxu0 %v548
    %2093 = vmatpush.msra.mxu0 %v547
    %2094 = vmatpush.msra.mxu0 %v546
    %2095 = vmatpush.msra.mxu0 %v545
    %2096 = vmatmul.f32.gmra.mxu0 %v2078
    %v2097 = vpop.f32.mrf.mxu0
    %v2098 = vadd.f32 %v555, %v2097
    %2099 = vdwg.mxu0
    %v2100 = vxor.u32 %v2098, 2147483648
    %v2101 = vmul.f32 %v2100, 1.442695
    %v2102 = vpow.pop %v2101
    %v2103 = vadd.f32 %v2102, 1.0
    %v2104 = vrcp.pop %v2103
    %v2105 = vmul.f32 %v2103, %v2104
    %v2106 = vsub.f32 1.0, %v2105
    %v2107 = vmul.f32 %v2104, %v2106
    %v2108 = vadd.f32 %v2104, %v2107
    %vm2109 = vweird.f32 %v2103
    %vm2110 = vweird.f32 %v2104
    %vm2111 = vmor %vm2109, %vm2110
    %v2112 = vsel %vm2111, %v2104, %v2108
    %v2113 = vand.u32 2147483647, %v2103
    %vm2114 = vcmp.eq.f32.partialorder %v2113, 8.507059e+37
    %v2115 = vand.u32 %v2103, 2147483648
    %v2116 = vor.u32 1.1754944e-38, %v2115
    %v2117 = vsel %vm2114, %v2116, %v2112
    %v2118 = vmul.f32 1.0, %v2117
    %v2119 = vmul.f32 %v2118, %v1825
    %2121 = vrot.lane.b32.xlu0 %v2050, 32
    %v2122 = vpop.permute.xlu0 %2121
    %v2124 = vmul.f32 %v2118, %v2122
    %2126 = vrot.lane.b32.xlu0 %v2124, 96
    %v2127 = vpop.permute.xlu0 %2126
    %v2129 = vadd.f32 %v2119, %v2127
    %s2130 = smul.u32 6, 2
    %s2131 = smul.addr %s2130, 8
    %s2132 = scalar_lea.vmem [#allocation2], %s2131
    %v2133 = vld [vmem:[%s2132] sm:$0xff]
    %v2134 = vld [vmem:[%s2132 + $0x8] sm:$0xff]
    %2136 = vrot.lane.b32.xlu0 %v1938, 112
    %v2137 = vpop.permute.xlu0 %2136
    %v2138 = vsel %vm238, %v2137, 0
    %2140 = vmatpush.msra.mxu0 0.0
    %2141 = vmatpush.msra.mxu0 0.0
    %2142 = vmatpush.msra.mxu0 0.0
    %2143 = vmatpush.msra.mxu0 0.0
    %2144 = vmatpush.msra.mxu0 0.0
    %2145 = vmatpush.msra.mxu0 0.0
    %2146 = vmatpush.msra.mxu0 0.0
    %2147 = vmatpush.msra.mxu0 0.0
    %2148 = vmatpush.msra.mxu0 0.0
    %2149 = vmatpush.msra.mxu0 0.0
    %2150 = vmatpush.msra.mxu0 %v236
    %2151 = vmatpush.msra.mxu0 %v234
    %2152 = vmatpush.msra.mxu0 %v232
    %2153 = vmatpush.msra.mxu0 %v230
    %2154 = vmatpush.msra.mxu0 %v228
    %2155 = vmatpush.msra.mxu0 %v226
    %2156 = vmatmul.f32.gmra.mxu0 %v2138
    %v2157 = vpop.f32.mrf.mxu0
    %v2158 = vadd.f32 0.0, %v2157
    %2159 = vdwg.mxu0
    %2160 = vmatpush.msra.mxu0 0.0
    %2161 = vmatpush.msra.mxu0 0.0
    %2162 = vmatpush.msra.mxu0 0.0
    %2163 = vmatpush.msra.mxu0 0.0
    %2164 = vmatpush.msra.mxu0 0.0
    %2165 = vmatpush.msra.mxu0 0.0
    %2166 = vmatpush.msra.mxu0 0.0
    %2167 = vmatpush.msra.mxu0 0.0
    %2168 = vmatpush.msra.mxu0 0.0
    %2169 = vmatpush.msra.mxu0 0.0
    %2170 = vmatpush.msra.mxu0 %v237
    %2171 = vmatpush.msra.mxu0 %v235
    %2172 = vmatpush.msra.mxu0 %v233
    %2173 = vmatpush.msra.mxu0 %v231
    %2174 = vmatpush.msra.mxu0 %v229
    %2175 = vmatpush.msra.mxu0 %v227
    %2176 = vmatmul.f32.gmra.mxu0 %v2138
    %v2177 = vpop.f32.mrf.mxu0
    %v2178 = vadd.f32 0.0, %v2177
    %2179 = vdwg.mxu0
    %v2180 = vadd.f32 %v2133, %v2158
    %v2181 = vadd.f32 %v2134, %v2178
    %v2182 = vxor.u32 %v2180, 2147483648
    %v2183 = vmul.f32 %v2182, 1.442695
    %v2184 = vpow.pop %v2183
    %v2185 = vadd.f32 %v2184, 1.0
    %v2186 = vrcp.pop %v2185
    %v2187 = vmul.f32 %v2185, %v2186
    %v2188 = vsub.f32 1.0, %v2187
    %v2189 = vmul.f32 %v2186, %v2188
    %v2190 = vadd.f32 %v2186, %v2189
    %vm2191 = vweird.f32 %v2185
    %vm2192 = vweird.f32 %v2186
    %vm2193 = vmor %vm2191, %vm2192
    %v2194 = vsel %vm2193, %v2186, %v2190
    %v2195 = vand.u32 2147483647, %v2185
    %vm2196 = vcmp.eq.f32.partialorder %v2195, 8.507059e+37
    %v2197 = vand.u32 %v2185, 2147483648
    %v2198 = vor.u32 1.1754944e-38, %v2197
    %v2199 = vsel %vm2196, %v2198, %v2194
    %v2200 = vmul.f32 1.0, %v2199
    %v2201 = vtanh.pop %v2180
    %v2202 = vtanh.pop %v2181
    %v2203 = vxor.u32 %v2181, 2147483648
    %v2204 = vmul.f32 %v2203, 1.442695
    %v2205 = vpow.pop %v2204
    %v2206 = vadd.f32 %v2205, 1.0
    %v2207 = vrcp.pop %v2206
    %v2208 = vmul.f32 %v2206, %v2207
    %v2209 = vsub.f32 1.0, %v2208
    %v2210 = vmul.f32 %v2207, %v2209
    %v2211 = vadd.f32 %v2207, %v2210
    %vm2212 = vweird.f32 %v2206
    %vm2213 = vweird.f32 %v2207
    %vm2214 = vmor %vm2212, %vm2213
    %v2215 = vsel %vm2214, %v2207, %v2211
    %v2216 = vand.u32 2147483647, %v2206
    %vm2217 = vcmp.eq.f32.partialorder %v2216, 8.507059e+37
    %v2218 = vand.u32 %v2206, 2147483648
    %v2219 = vor.u32 1.1754944e-38, %v2218
    %v2220 = vsel %vm2217, %v2219, %v2215
    %v2221 = vmul.f32 1.0, %v2220
    %v2222 = vmul.f32 %v2200, %v1932
    %2225 = vrot.lane.b32.xlu0 %v2201, 32
    %v2226 = vpop.permute.xlu0 %2225
    %2227 = vrot.lane.b32.xlu0 %v2202, 32
    %v2228 = vpop.permute.xlu0 %2227
    %v2229 = vsel %vm331, %v2226, %v2228
    %v2231 = vmul.f32 %v2200, %v2229
    %2233 = vrot.lane.b32.xlu0 %v2231, 48
    %v2234 = vpop.permute.xlu0 %2233
    %v2236 = vadd.f32 %v2222, %v2234
    %v2237 = vtanh.pop %v2236
    %2239 = vrot.lane.b32.xlu0 %v2237, 96
    %v2240 = vpop.permute.xlu0 %2239
    %v2242 = vmul.f32 %v2221, %v2240
    %2244 = vrot.lane.b32.xlu0 %v1932, 80
    %v2245 = vpop.permute.xlu0 %2244
    %v2247 = vsel %vm238, %v2245, %v2236
    %v2249 = vsel %vm363, %v2247, 0
    %2251 = vmatpush.msra.mxu0 0.0
    %2252 = vmatpush.msra.mxu0 0.0
    %2253 = vmatpush.msra.mxu0 0.0
    %2254 = vmatpush.msra.mxu0 0.0
    %2255 = vmatpush.msra.mxu0 %v358
    %2256 = vmatpush.msra.mxu0 %v357
    %2257 = vmatpush.msra.mxu0 %v356
    %2258 = vmatpush.msra.mxu0 %v355
    %2259 = vmatpush.msra.mxu0 %v354
    %2260 = vmatpush.msra.mxu0 %v353
    %2261 = vmatpush.msra.mxu0 %v352
    %2262 = vmatpush.msra.mxu0 %v351
    %2263 = vmatpush.msra.mxu0 %v350
    %2264 = vmatpush.msra.mxu0 %v349
    %2265 = vmatpush.msra.mxu0 %v348
    %2266 = vmatpush.msra.mxu0 %v347
    %2267 = vmatmul.f32.gmra.mxu0 %v2249
    %v2268 = vpop.f32.mrf.mxu0
    %v2269 = vadd.f32 %v361, %v2268
    %2270 = vdwg.mxu0
    %v2271 = vmax.f32 %v2269, 0.0
    %v2273 = vsel %vm331, %v2271, 0
    %2275 = vmatpush.msra.mxu0 0.0
    %2276 = vmatpush.msra.mxu0 0.0
    %2277 = vmatpush.msra.mxu0 0.0
    %2278 = vmatpush.msra.mxu0 0.0
    %2279 = vmatpush.msra.mxu0 0.0
    %2280 = vmatpush.msra.mxu0 0.0
    %2281 = vmatpush.msra.mxu0 0.0
    %2282 = vmatpush.msra.mxu0 0.0
    %2283 = vmatpush.msra.mxu0 0.0
    %2284 = vmatpush.msra.mxu0 0.0
    %2285 = vmatpush.msra.mxu0 0.0
    %2286 = vmatpush.msra.mxu0 0.0
    %2287 = vmatpush.msra.mxu0 %v391
    %2288 = vmatpush.msra.mxu0 %v390
    %2289 = vmatpush.msra.mxu0 %v389
    %2290 = vmatpush.msra.mxu0 %v388
    %2291 = vmatmul.f32.gmra.mxu0 %v2273
    %v2292 = vpop.f32.mrf.mxu0
    %v2293 = vadd.f32 %v394, %v2292
    %2294 = vdwg.mxu0
    %v2295 = vsel %vm363, %v2293, -inf
    %2296 = vmax.xlane.f32.xlu0 %v2295
    %v2297 = vpop.xlane.xlu0 %2296
    %v2298 = vsub.f32 %v2293, %v2297
    %v2299 = vmul.f32 %v2298, 1.442695
    %v2300 = vpow.pop %v2299
    %v2301 = vsel %vm363, %v2300, 0.0
    %2302 = vadd.xlane.f32.xlu0 %v2301
    %v2303 = vpop.xlane.xlu0 %2302
    %v2304 = vrcp.pop %v2303
    %v2305 = vmul.f32 %v2300, %v2304
    %v2306 = vmul.f32 %v2305, %v2247
    %v2308 = vsel %vm363, %v2306, 0
    %2310 = vmatpush.msra.mxu0 0.0
    %2311 = vmatpush.msra.mxu0 0.0
    %2312 = vmatpush.msra.mxu0 0.0
    %2313 = vmatpush.msra.mxu0 0.0
    %2314 = vmatpush.msra.mxu0 %v442
    %2315 = vmatpush.msra.mxu0 %v441
    %2316 = vmatpush.msra.mxu0 %v440
    %2317 = vmatpush.msra.mxu0 %v439
    %2318 = vmatpush.msra.mxu0 %v438
    %2319 = vmatpush.msra.mxu0 %v437
    %2320 = vmatpush.msra.mxu0 %v436
    %2321 = vmatpush.msra.mxu0 %v435
    %2322 = vmatpush.msra.mxu0 %v434
    %2323 = vmatpush.msra.mxu0 %v433
    %2324 = vmatpush.msra.mxu0 %v432
    %2325 = vmatpush.msra.mxu0 %v431
    %2326 = vmatmul.f32.gmra.mxu0 %v2308
    %v2327 = vpop.f32.mrf.mxu0
    %v2328 = vadd.f32 %v445, %v2327
    %2329 = vdwg.mxu0
    %v2330 = vmax.f32 %v2328, 0.0
    %v2332 = vsel %vm331, %v2330, 0
    %2334 = vmatpush.msra.mxu0 0.0
    %2335 = vmatpush.msra.mxu0 0.0
    %2336 = vmatpush.msra.mxu0 0.0
    %2337 = vmatpush.msra.mxu0 0.0
    %2338 = vmatpush.msra.mxu0 0.0
    %2339 = vmatpush.msra.mxu0 0.0
    %2340 = vmatpush.msra.mxu0 0.0
    %2341 = vmatpush.msra.mxu0 0.0
    %2342 = vmatpush.msra.mxu0 0.0
    %2343 = vmatpush.msra.mxu0 0.0
    %2344 = vmatpush.msra.mxu0 0.0
    %2345 = vmatpush.msra.mxu0 0.0
    %2346 = vmatpush.msra.mxu0 %v474
    %2347 = vmatpush.msra.mxu0 %v473
    %2348 = vmatpush.msra.mxu0 %v472
    %2349 = vmatpush.msra.mxu0 %v471
    %2350 = vmatmul.f32.gmra.mxu0 %v2332
    %v2351 = vpop.f32.mrf.mxu0
    %v2352 = vadd.f32 %v477, %v2351
    %2353 = vdwg.mxu0
    %v2354 = vtanh.pop %v2352
    %2356 = vrot.lane.b32.xlu0 %v2129, 96
    %v2357 = vpop.permute.xlu0 %2356
    %v2359 = vsel %vm363, %v2306, %v2357
    %2360 = vmatpush.msra.mxu0 %v519
    %2361 = vmatpush.msra.mxu0 %v518
    %2362 = vmatpush.msra.mxu0 %v517
    %2363 = vmatpush.msra.mxu0 %v516
    %2364 = vmatpush.msra.mxu0 %v515
    %2365 = vmatpush.msra.mxu0 %v514
    %2366 = vmatpush.msra.mxu0 %v513
    %2367 = vmatpush.msra.mxu0 %v512
    %2368 = vmatpush.msra.mxu0 %v511
    %2369 = vmatpush.msra.mxu0 %v510
    %2370 = vmatpush.msra.mxu0 %v509
    %2371 = vmatpush.msra.mxu0 %v508
    %2372 = vmatpush.msra.mxu0 %v507
    %2373 = vmatpush.msra.mxu0 %v506
    %2374 = vmatpush.msra.mxu0 %v505
    %2375 = vmatpush.msra.mxu0 %v504
    %2376 = vmatmul.f32.gmra.mxu0 %v2359
    %v2377 = vpop.f32.mrf.mxu0
    %v2378 = vadd.f32 %v522, %v2377
    %2379 = vdwg.mxu0
    %v2380 = vmax.f32 %v2378, 0.0
    %v2382 = vsel %vm205, %v2380, 0
    %2384 = vmatpush.msra.mxu0 0.0
    %2385 = vmatpush.msra.mxu0 0.0
    %2386 = vmatpush.msra.mxu0 0.0
    %2387 = vmatpush.msra.mxu0 0.0
    %2388 = vmatpush.msra.mxu0 0.0
    %2389 = vmatpush.msra.mxu0 0.0
    %2390 = vmatpush.msra.mxu0 0.0
    %2391 = vmatpush.msra.mxu0 0.0
    %2392 = vmatpush.msra.mxu0 %v552
    %2393 = vmatpush.msra.mxu0 %v551
    %2394 = vmatpush.msra.mxu0 %v550
    %2395 = vmatpush.msra.mxu0 %v549
    %2396 = vmatpush.msra.mxu0 %v548
    %2397 = vmatpush.msra.mxu0 %v547
    %2398 = vmatpush.msra.mxu0 %v546
    %2399 = vmatpush.msra.mxu0 %v545
    %2400 = vmatmul.f32.gmra.mxu0 %v2382
    %v2401 = vpop.f32.mrf.mxu0
    %v2402 = vadd.f32 %v555, %v2401
    %2403 = vdwg.mxu0
    %v2404 = vxor.u32 %v2402, 2147483648
    %v2405 = vmul.f32 %v2404, 1.442695
    %v2406 = vpow.pop %v2405
    %v2407 = vadd.f32 %v2406, 1.0
    %v2408 = vrcp.pop %v2407
    %v2409 = vmul.f32 %v2407, %v2408
    %v2410 = vsub.f32 1.0, %v2409
    %v2411 = vmul.f32 %v2408, %v2410
    %v2412 = vadd.f32 %v2408, %v2411
    %vm2413 = vweird.f32 %v2407
    %vm2414 = vweird.f32 %v2408
    %vm2415 = vmor %vm2413, %vm2414
    %v2416 = vsel %vm2415, %v2408, %v2412
    %v2417 = vand.u32 2147483647, %v2407
    %vm2418 = vcmp.eq.f32.partialorder %v2417, 8.507059e+37
    %v2419 = vand.u32 %v2407, 2147483648
    %v2420 = vor.u32 1.1754944e-38, %v2419
    %v2421 = vsel %vm2418, %v2420, %v2416
    %v2422 = vmul.f32 1.0, %v2421
    %v2423 = vmul.f32 %v2422, %v2129
    %2425 = vrot.lane.b32.xlu0 %v2354, 32
    %v2426 = vpop.permute.xlu0 %2425
    %v2428 = vmul.f32 %v2422, %v2426
    %2430 = vrot.lane.b32.xlu0 %v2428, 96
    %v2431 = vpop.permute.xlu0 %2430
    %v2433 = vadd.f32 %v2423, %v2431
    %s2434 = smul.u32 7, 2
    %s2435 = smul.addr %s2434, 8
    %s2436 = scalar_lea.vmem [#allocation2], %s2435
    %v2437 = vld [vmem:[%s2436] sm:$0xff]
    %v2438 = vld [vmem:[%s2436 + $0x8] sm:$0xff]
    %2440 = vrot.lane.b32.xlu0 %v2242, 112
    %v2441 = vpop.permute.xlu0 %2440
    %v2442 = vsel %vm238, %v2441, 0
    %2444 = vmatpush.msra.mxu0 0.0
    %2445 = vmatpush.msra.mxu0 0.0
    %2446 = vmatpush.msra.mxu0 0.0
    %2447 = vmatpush.msra.mxu0 0.0
    %2448 = vmatpush.msra.mxu0 0.0
    %2449 = vmatpush.msra.mxu0 0.0
    %2450 = vmatpush.msra.mxu0 0.0
    %2451 = vmatpush.msra.mxu0 0.0
    %2452 = vmatpush.msra.mxu0 0.0
    %2453 = vmatpush.msra.mxu0 0.0
    %2454 = vmatpush.msra.mxu0 %v236
    %2455 = vmatpush.msra.mxu0 %v234
    %2456 = vmatpush.msra.mxu0 %v232
    %2457 = vmatpush.msra.mxu0 %v230
    %2458 = vmatpush.msra.mxu0 %v228
    %2459 = vmatpush.msra.mxu0 %v226
    %2460 = vmatmul.f32.gmra.mxu0 %v2442
    %v2461 = vpop.f32.mrf.mxu0
    %v2462 = vadd.f32 0.0, %v2461
    %2463 = vdwg.mxu0
    %2464 = vmatpush.msra.mxu0 0.0
    %2465 = vmatpush.msra.mxu0 0.0
    %2466 = vmatpush.msra.mxu0 0.0
    %2467 = vmatpush.msra.mxu0 0.0
    %2468 = vmatpush.msra.mxu0 0.0
    %2469 = vmatpush.msra.mxu0 0.0
    %2470 = vmatpush.msra.mxu0 0.0
    %2471 = vmatpush.msra.mxu0 0.0
    %2472 = vmatpush.msra.mxu0 0.0
    %2473 = vmatpush.msra.mxu0 0.0
    %2474 = vmatpush.msra.mxu0 %v237
    %2475 = vmatpush.msra.mxu0 %v235
    %2476 = vmatpush.msra.mxu0 %v233
    %2477 = vmatpush.msra.mxu0 %v231
    %2478 = vmatpush.msra.mxu0 %v229
    %2479 = vmatpush.msra.mxu0 %v227
    %2480 = vmatmul.f32.gmra.mxu0 %v2442
    %v2481 = vpop.f32.mrf.mxu0
    %v2482 = vadd.f32 0.0, %v2481
    %2483 = vdwg.mxu0
    %v2484 = vadd.f32 %v2437, %v2462
    %v2485 = vadd.f32 %v2438, %v2482
    %v2486 = vxor.u32 %v2484, 2147483648
    %v2487 = vmul.f32 %v2486, 1.442695
    %v2488 = vpow.pop %v2487
    %v2489 = vadd.f32 %v2488, 1.0
    %v2490 = vrcp.pop %v2489
    %v2491 = vmul.f32 %v2489, %v2490
    %v2492 = vsub.f32 1.0, %v2491
    %v2493 = vmul.f32 %v2490, %v2492
    %v2494 = vadd.f32 %v2490, %v2493
    %vm2495 = vweird.f32 %v2489
    %vm2496 = vweird.f32 %v2490
    %vm2497 = vmor %vm2495, %vm2496
    %v2498 = vsel %vm2497, %v2490, %v2494
    %v2499 = vand.u32 2147483647, %v2489
    %vm2500 = vcmp.eq.f32.partialorder %v2499, 8.507059e+37
    %v2501 = vand.u32 %v2489, 2147483648
    %v2502 = vor.u32 1.1754944e-38, %v2501
    %v2503 = vsel %vm2500, %v2502, %v2498
    %v2504 = vmul.f32 1.0, %v2503
    %v2505 = vtanh.pop %v2484
    %v2506 = vtanh.pop %v2485
    %v2507 = vxor.u32 %v2485, 2147483648
    %v2508 = vmul.f32 %v2507, 1.442695
    %v2509 = vpow.pop %v2508
    %v2510 = vadd.f32 %v2509, 1.0
    %v2511 = vrcp.pop %v2510
    %v2512 = vmul.f32 %v2510, %v2511
    %v2513 = vsub.f32 1.0, %v2512
    %v2514 = vmul.f32 %v2511, %v2513
    %v2515 = vadd.f32 %v2511, %v2514
    %vm2516 = vweird.f32 %v2510
    %vm2517 = vweird.f32 %v2511
    %vm2518 = vmor %vm2516, %vm2517
    %v2519 = vsel %vm2518, %v2511, %v2515
    %v2520 = vand.u32 2147483647, %v2510
    %vm2521 = vcmp.eq.f32.partialorder %v2520, 8.507059e+37
    %v2522 = vand.u32 %v2510, 2147483648
    %v2523 = vor.u32 1.1754944e-38, %v2522
    %v2524 = vsel %vm2521, %v2523, %v2519
    %v2525 = vmul.f32 1.0, %v2524
    %v2526 = vmul.f32 %v2504, %v2236
    %2529 = vrot.lane.b32.xlu0 %v2505, 32
    %v2530 = vpop.permute.xlu0 %2529
    %2531 = vrot.lane.b32.xlu0 %v2506, 32
    %v2532 = vpop.permute.xlu0 %2531
    %v2533 = vsel %vm331, %v2530, %v2532
    %v2535 = vmul.f32 %v2504, %v2533
    %2537 = vrot.lane.b32.xlu0 %v2535, 48
    %v2538 = vpop.permute.xlu0 %2537
    %v2540 = vadd.f32 %v2526, %v2538
    %v2541 = vtanh.pop %v2540
    %2543 = vrot.lane.b32.xlu0 %v2541, 96
    %v2544 = vpop.permute.xlu0 %2543
    %v2546 = vmul.f32 %v2525, %v2544
    %2548 = vrot.lane.b32.xlu0 %v2236, 80
    %v2549 = vpop.permute.xlu0 %2548
    %v2551 = vsel %vm238, %v2549, %v2540
    %v2553 = vsel %vm363, %v2551, 0
    %2555 = vmatpush.msra.mxu0 0.0
    %2556 = vmatpush.msra.mxu0 0.0
    %2557 = vmatpush.msra.mxu0 0.0
    %2558 = vmatpush.msra.mxu0 0.0
    %2559 = vmatpush.msra.mxu0 %v358
    %2560 = vmatpush.msra.mxu0 %v357
    %2561 = vmatpush.msra.mxu0 %v356
    %2562 = vmatpush.msra.mxu0 %v355
    %2563 = vmatpush.msra.mxu0 %v354
    %2564 = vmatpush.msra.mxu0 %v353
    %2565 = vmatpush.msra.mxu0 %v352
    %2566 = vmatpush.msra.mxu0 %v351
    %2567 = vmatpush.msra.mxu0 %v350
    %2568 = vmatpush.msra.mxu0 %v349
    %2569 = vmatpush.msra.mxu0 %v348
    %2570 = vmatpush.msra.mxu0 %v347
    %2571 = vmatmul.f32.gmra.mxu0 %v2553
    %v2572 = vpop.f32.mrf.mxu0
    %v2573 = vadd.f32 %v361, %v2572
    %2574 = vdwg.mxu0
    %v2575 = vmax.f32 %v2573, 0.0
    %v2577 = vsel %vm331, %v2575, 0
    %2579 = vmatpush.msra.mxu0 0.0
    %2580 = vmatpush.msra.mxu0 0.0
    %2581 = vmatpush.msra.mxu0 0.0
    %2582 = vmatpush.msra.mxu0 0.0
    %2583 = vmatpush.msra.mxu0 0.0
    %2584 = vmatpush.msra.mxu0 0.0
    %2585 = vmatpush.msra.mxu0 0.0
    %2586 = vmatpush.msra.mxu0 0.0
    %2587 = vmatpush.msra.mxu0 0.0
    %2588 = vmatpush.msra.mxu0 0.0
    %2589 = vmatpush.msra.mxu0 0.0
    %2590 = vmatpush.msra.mxu0 0.0
    %2591 = vmatpush.msra.mxu0 %v391
    %2592 = vmatpush.msra.mxu0 %v390
    %2593 = vmatpush.msra.mxu0 %v389
    %2594 = vmatpush.msra.mxu0 %v388
    %2595 = vmatmul.f32.gmra.mxu0 %v2577
    %v2596 = vpop.f32.mrf.mxu0
    %v2597 = vadd.f32 %v394, %v2596
    %2598 = vdwg.mxu0
    %v2599 = vsel %vm363, %v2597, -inf
    %2600 = vmax.xlane.f32.xlu0 %v2599
    %v2601 = vpop.xlane.xlu0 %2600
    %v2602 = vsub.f32 %v2597, %v2601
    %v2603 = vmul.f32 %v2602, 1.442695
    %v2604 = vpow.pop %v2603
    %v2605 = vsel %vm363, %v2604, 0.0
    %2606 = vadd.xlane.f32.xlu0 %v2605
    %v2607 = vpop.xlane.xlu0 %2606
    %v2608 = vrcp.pop %v2607
    %v2609 = vmul.f32 %v2604, %v2608
    %v2610 = vmul.f32 %v2609, %v2551
    %v2612 = vsel %vm363, %v2610, 0
    %2614 = vmatpush.msra.mxu0 0.0
    %2615 = vmatpush.msra.mxu0 0.0
    %2616 = vmatpush.msra.mxu0 0.0
    %2617 = vmatpush.msra.mxu0 0.0
    %2618 = vmatpush.msra.mxu0 %v442
    %2619 = vmatpush.msra.mxu0 %v441
    %2620 = vmatpush.msra.mxu0 %v440
    %2621 = vmatpush.msra.mxu0 %v439
    %2622 = vmatpush.msra.mxu0 %v438
    %2623 = vmatpush.msra.mxu0 %v437
    %2624 = vmatpush.msra.mxu0 %v436
    %2625 = vmatpush.msra.mxu0 %v435
    %2626 = vmatpush.msra.mxu0 %v434
    %2627 = vmatpush.msra.mxu0 %v433
    %2628 = vmatpush.msra.mxu0 %v432
    %2629 = vmatpush.msra.mxu0 %v431
    %2630 = vmatmul.f32.gmra.mxu0 %v2612
    %v2631 = vpop.f32.mrf.mxu0
    %v2632 = vadd.f32 %v445, %v2631
    %2633 = vdwg.mxu0
    %v2634 = vmax.f32 %v2632, 0.0
    %v2636 = vsel %vm331, %v2634, 0
    %2638 = vmatpush.msra.mxu0 0.0
    %2639 = vmatpush.msra.mxu0 0.0
    %2640 = vmatpush.msra.mxu0 0.0
    %2641 = vmatpush.msra.mxu0 0.0
    %2642 = vmatpush.msra.mxu0 0.0
    %2643 = vmatpush.msra.mxu0 0.0
    %2644 = vmatpush.msra.mxu0 0.0
    %2645 = vmatpush.msra.mxu0 0.0
    %2646 = vmatpush.msra.mxu0 0.0
    %2647 = vmatpush.msra.mxu0 0.0
    %2648 = vmatpush.msra.mxu0 0.0
    %2649 = vmatpush.msra.mxu0 0.0
    %2650 = vmatpush.msra.mxu0 %v474
    %2651 = vmatpush.msra.mxu0 %v473
    %2652 = vmatpush.msra.mxu0 %v472
    %2653 = vmatpush.msra.mxu0 %v471
    %2654 = vmatmul.f32.gmra.mxu0 %v2636
    %v2655 = vpop.f32.mrf.mxu0
    %v2656 = vadd.f32 %v477, %v2655
    %2657 = vdwg.mxu0
    %v2658 = vtanh.pop %v2656
    %2660 = vrot.lane.b32.xlu0 %v2433, 96
    %v2661 = vpop.permute.xlu0 %2660
    %v2663 = vsel %vm363, %v2610, %v2661
    %2664 = vmatpush.msra.mxu0 %v519
    %2665 = vmatpush.msra.mxu0 %v518
    %2666 = vmatpush.msra.mxu0 %v517
    %2667 = vmatpush.msra.mxu0 %v516
    %2668 = vmatpush.msra.mxu0 %v515
    %2669 = vmatpush.msra.mxu0 %v514
    %2670 = vmatpush.msra.mxu0 %v513
    %2671 = vmatpush.msra.mxu0 %v512
    %2672 = vmatpush.msra.mxu0 %v511
    %2673 = vmatpush.msra.mxu0 %v510
    %2674 = vmatpush.msra.mxu0 %v509
    %2675 = vmatpush.msra.mxu0 %v508
    %2676 = vmatpush.msra.mxu0 %v507
    %2677 = vmatpush.msra.mxu0 %v506
    %2678 = vmatpush.msra.mxu0 %v505
    %2679 = vmatpush.msra.mxu0 %v504
    %2680 = vmatmul.f32.gmra.mxu0 %v2663
    %v2681 = vpop.f32.mrf.mxu0
    %v2682 = vadd.f32 %v522, %v2681
    %2683 = vdwg.mxu0
    %v2684 = vmax.f32 %v2682, 0.0
    %v2686 = vsel %vm205, %v2684, 0
    %2688 = vmatpush.msra.mxu0 0.0
    %2689 = vmatpush.msra.mxu0 0.0
    %2690 = vmatpush.msra.mxu0 0.0
    %2691 = vmatpush.msra.mxu0 0.0
    %2692 = vmatpush.msra.mxu0 0.0
    %2693 = vmatpush.msra.mxu0 0.0
    %2694 = vmatpush.msra.mxu0 0.0
    %2695 = vmatpush.msra.mxu0 0.0
    %2696 = vmatpush.msra.mxu0 %v552
    %2697 = vmatpush.msra.mxu0 %v551
    %2698 = vmatpush.msra.mxu0 %v550
    %2699 = vmatpush.msra.mxu0 %v549
    %2700 = vmatpush.msra.mxu0 %v548
    %2701 = vmatpush.msra.mxu0 %v547
    %2702 = vmatpush.msra.mxu0 %v546
    %2703 = vmatpush.msra.mxu0 %v545
    %2704 = vmatmul.f32.gmra.mxu0 %v2686
    %v2705 = vpop.f32.mrf.mxu0
    %v2706 = vadd.f32 %v555, %v2705
    %2707 = vdwg.mxu0
    %v2708 = vxor.u32 %v2706, 2147483648
    %v2709 = vmul.f32 %v2708, 1.442695
    %v2710 = vpow.pop %v2709
    %v2711 = vadd.f32 %v2710, 1.0
    %v2712 = vrcp.pop %v2711
    %v2713 = vmul.f32 %v2711, %v2712
    %v2714 = vsub.f32 1.0, %v2713
    %v2715 = vmul.f32 %v2712, %v2714
    %v2716 = vadd.f32 %v2712, %v2715
    %vm2717 = vweird.f32 %v2711
    %vm2718 = vweird.f32 %v2712
    %vm2719 = vmor %vm2717, %vm2718
    %v2720 = vsel %vm2719, %v2712, %v2716
    %v2721 = vand.u32 2147483647, %v2711
    %vm2722 = vcmp.eq.f32.partialorder %v2721, 8.507059e+37
    %v2723 = vand.u32 %v2711, 2147483648
    %v2724 = vor.u32 1.1754944e-38, %v2723
    %v2725 = vsel %vm2722, %v2724, %v2720
    %v2726 = vmul.f32 1.0, %v2725
    %v2727 = vmul.f32 %v2726, %v2433
    %2729 = vrot.lane.b32.xlu0 %v2658, 32
    %v2730 = vpop.permute.xlu0 %2729
    %v2732 = vmul.f32 %v2726, %v2730
    %2734 = vrot.lane.b32.xlu0 %v2732, 96
    %v2735 = vpop.permute.xlu0 %2734
    %v2737 = vadd.f32 %v2727, %v2735
    %2739 = vrot.lane.b32.xlu0 %v2546, 112
    %v2740 = vpop.permute.xlu0 %2739
    %2743 = vrot.lane.b32.xlu0 %v2737, 48
    %v2744 = vpop.permute.xlu0 %2743
    %v2746 = vsel %vm238, %v2740, %v2744
    %v2747 = vld [vmem:[%s16] sm:$0xff]
    %v2748 = vld [vmem:[%s16 + $0x8] sm:$0xff]
    %v2749 = vld [vmem:[%s16 + $0x10] sm:$0xff]
    %v2750 = vld [vmem:[%s16 + $0x18] sm:$0xff]
    %v2751 = vld [vmem:[%s16 + $0x20] sm:$0xff]
    %v2752 = vld [vmem:[%s16 + $0x28] sm:$0xff]
    %v2753 = vld [vmem:[%s16 + $0x30] sm:$0xff]
    %v2754 = vld [vmem:[%s16 + $0x38] sm:$0xff]
    %v2755 = vld [vmem:[%s16 + $0x40] sm:$0xff]
    %v2756 = vld [vmem:[%s16 + $0x48] sm:$0xff]
    %v2757 = vld [vmem:[%s17] sm:$0x1]
    %v2759 = vperm.slane %v2757, 0
    %vm2761 = vcmask 654336
    %v2763 = vsel %vm2761, %v2746, 0
    %2765 = vmatpush.msra.mxu0 0.0
    %2766 = vmatpush.msra.mxu0 0.0
    %2767 = vmatpush.msra.mxu0 0.0
    %2768 = vmatpush.msra.mxu0 0.0
    %2769 = vmatpush.msra.mxu0 0.0
    %2770 = vmatpush.msra.mxu0 0.0
    %2771 = vmatpush.msra.mxu0 %v2756
    %2772 = vmatpush.msra.mxu0 %v2755
    %2773 = vmatpush.msra.mxu0 %v2754
    %2774 = vmatpush.msra.mxu0 %v2753
    %2775 = vmatpush.msra.mxu0 %v2752
    %2776 = vmatpush.msra.mxu0 %v2751
    %2777 = vmatpush.msra.mxu0 %v2750
    %2778 = vmatpush.msra.mxu0 %v2749
    %2779 = vmatpush.msra.mxu0 %v2748
    %2780 = vmatpush.msra.mxu0 %v2747
    %2781 = vmatmul.f32.gmra.mxu0 %v2763
    %v2782 = vpop.f32.mrf.mxu0
    %v2783 = vadd.f32 %v2759, %v2782
    %2784 = vdwg.mxu0
    %v2785 = vmax.f32 %v2783, 0.0
    %v2786 = vld [vmem:[%s18] sm:$0xff]
    %v2787 = vld [vmem:[%s18 + $0x8] sm:$0xff]
    %v2788 = vld [vmem:[%s18 + $0x10] sm:$0xff]
    %v2789 = vld [vmem:[%s18 + $0x18] sm:$0xff]
    %v2790 = vld [vmem:[%s19] sm:$0x1]
    %v2792 = vperm.slane %v2790, 0
    %v2795 = vsel %vm331, %v2785, 0
    %2797 = vmatpush.msra.mxu0 0.0
    %2798 = vmatpush.msra.mxu0 0.0
    %2799 = vmatpush.msra.mxu0 0.0
    %2800 = vmatpush.msra.mxu0 0.0
    %2801 = vmatpush.msra.mxu0 0.0
    %2802 = vmatpush.msra.mxu0 0.0
    %2803 = vmatpush.msra.mxu0 0.0
    %2804 = vmatpush.msra.mxu0 0.0
    %2805 = vmatpush.msra.mxu0 0.0
    %2806 = vmatpush.msra.mxu0 0.0
    %2807 = vmatpush.msra.mxu0 0.0
    %2808 = vmatpush.msra.mxu0 0.0
    %2809 = vmatpush.msra.mxu0 %v2789
    %2810 = vmatpush.msra.mxu0 %v2788
    %2811 = vmatpush.msra.mxu0 %v2787
    %2812 = vmatpush.msra.mxu0 %v2786
    %2813 = vmatmul.f32.gmra.mxu0 %v2795
    %v2814 = vpop.f32.mrf.mxu0
    %v2815 = vadd.f32 %v2792, %v2814
    %2816 = vdwg.mxu0
    %2817 = vst [vmem:[#allocation3] sm:$0xff] %v2815
    // Predicated region
    $region82: #{tpu_custom_call.1} parent=1 // pred_check
      _
    $region83: #{tpu_custom_call.1} parent=1 // pred_check_branch
      %2819 = sbr.rel (0) target = $region85
    $region84: #{tpu_custom_call.1} parent=1 // pred_region
      %2821 = vsyncadd [#allocation4], 0
      %s2823 = sshll.u32 [#allocation3], 4
      %s2824 = int_to_ptr.vmem [resolvable:$true] %s2823
      %s2825 = sshll.u32 %s20, 4
      %s2826 = int_to_ptr.hbm [resolvable:$true] %s2825
      %2828 = dma.vmem_to_hbm [thread:$0]  %s2824, 128, %s2826, [#allocation4]
    $region85: #{tpu_custom_call.1} parent=1 // pred_fallthru
      _
    // Predicated region
    $region86: #{tpu_custom_call.1} parent=1 // pred_check
      _
    $region87: #{tpu_custom_call.1} parent=1 // pred_check_branch
      %2830 = sbr.rel (0) target = $region89
    $region88: #{tpu_custom_call.1} parent=1 // pred_region
      %2832 = dma.done [#allocation4], 128
    $region89: #{tpu_custom_call.1} parent=1 // pred_fallthru
      _
    %2833 = vsyncpa [#allocation4], 1

</llo_original>
